<compile_context>
chip_gen: v7x
topology: tpu7x:2x2x1
jax: 0.10.0
libtpu: 0.0.40
codegen_flags: <defaults>
</compile_context>

<pallas_src>
import jax
import jax.numpy as jnp
from jax.experimental import pallas as pl
from jax.experimental.pallas import tpu as pltpu

LATENT = 20          # mu / logvar width from the PyTorch module
LANE = 128           # TPU lane width; latent is padded to this
D_IN = 28 * 28       # 784
HID = 400


# ----------------------------------------------------------------------------
# Kernel: one batch tile, all weights resident in VMEM.
# ----------------------------------------------------------------------------
def vae_kernel(x_ref, w1_ref, b1_ref,
               w2m_ref, b2m_ref, w2l_ref, b2l_ref,
               w3_ref, b3_ref, w4_ref, b4_ref, eps_ref,
               xhat_ref, mu_ref, logvar_ref):
    # ---- encoder layer 1: (TB, 784) bf16 @ (784, 400) bf16 -> f32 ----------
    h1 = jnp.dot(x_ref[...], w1_ref[...],
                 preferred_element_type=jnp.float32) + b1_ref[...]
    h1 = jnp.maximum(h1, 0.0)                               # (TB, 400) f32
    h1b = h1.astype(jnp.bfloat16)

    # ---- encoder layer 2, split into lane-padded mu / logvar halves --------
    mu = jnp.maximum(
        jnp.dot(h1b, w2m_ref[...], preferred_element_type=jnp.float32)
        + b2m_ref[...], 0.0)                                # (TB, 128) f32
    logvar = jnp.maximum(
        jnp.dot(h1b, w2l_ref[...], preferred_element_type=jnp.float32)
        + b2l_ref[...], 0.0)                                # (TB, 128) f32

    # ---- reparametrize: z = eps * exp(0.5*logvar) + mu ----------------------
    std = jnp.exp(0.5 * logvar)
    z = eps_ref[...] * std + mu                             # (TB, 128) f32
    zb = z.astype(jnp.bfloat16)

    # ---- decoder ------------------------------------------------------------
    d1 = jnp.maximum(
        jnp.dot(zb, w3_ref[...], preferred_element_type=jnp.float32)
        + b3_ref[...], 0.0)                                 # (TB, 400) f32
    logits = jnp.dot(d1.astype(jnp.bfloat16), w4_ref[...],
                     preferred_element_type=jnp.float32) + b4_ref[...]
    xhat_ref[...] = jax.nn.sigmoid(logits)                  # (TB, 784) f32

    mu_ref[...] = mu
    logvar_ref[...] = logvar


# ----------------------------------------------------------------------------
# Wrapper
# ----------------------------------------------------------------------------
def _round_up(n, m):
    return (n + m - 1) // m * m


def _pad_axis(a, axis, target):
    pad = target - a.shape[axis]
    if pad <= 0:
        return a
    widths = [(0, 0)] * a.ndim
    widths[axis] = (0, pad)
    return jnp.pad(a, widths)


def prepare_params(params):
    """Split W2/b2 into lane-padded mu/logvar halves, pad W3 rows to 128 lanes,
    and cast all weights to bf16 (biases stay f32, added after f32 accumulate)."""
    w1, b1, w2, b2, w3, b3, w4, b4 = params
    bf = jnp.bfloat16
    w2_mu = _pad_axis(w2[:, :LATENT], 1, LANE)
    w2_lv = _pad_axis(w2[:, LATENT:], 1, LANE)
    b2_mu = _pad_axis(b2[:, :LATENT], 1, LANE)
    b2_lv = _pad_axis(b2[:, LATENT:], 1, LANE)
    w3_p = _pad_axis(w3, 0, LANE)                  # zero rows 20..127
    return (w1.astype(bf), b1,
            w2_mu.astype(bf), b2_mu,
            w2_lv.astype(bf), b2_lv,
            w3_p.astype(bf), b3,
            w4.astype(bf), b4)


def vae_forward(x, params, eps, *, tile_b=256):
    """x: (B, 784) float32, eps: (B, 20) float32.
    Returns (x_hat (B,784), mu (B,20), logvar (B,20)), all float32."""
    B = x.shape[0]
    (w1, b1, w2m, b2m, w2l, b2l, w3, b3, w4, b4) = prepare_params(params)

    tb = min(tile_b, _round_up(B, 8))      # sublane-aligned batch tile
    Bp = _round_up(B, tb)                  # pad batch to a whole number of tiles
    grid = (Bp // tb,)

    x_p = _pad_axis(x.astype(jnp.bfloat16), 0, Bp)                  # (Bp, 784) bf16
    eps_p = _pad_axis(_pad_axis(eps, 1, LANE), 0, Bp)               # (Bp, 128) f32

    batch_map = lambda i: (i, 0)
    const_map = lambda i: (0, 0)

    in_specs = [
        pl.BlockSpec((tb, D_IN), batch_map),        # x
        pl.BlockSpec((D_IN, HID), const_map),       # w1 (resident)
        pl.BlockSpec((1, HID), const_map),          # b1
        pl.BlockSpec((HID, LANE), const_map),       # w2_mu
        pl.BlockSpec((1, LANE), const_map),         # b2_mu
        pl.BlockSpec((HID, LANE), const_map),       # w2_lv
        pl.BlockSpec((1, LANE), const_map),         # b2_lv
        pl.BlockSpec((LANE, HID), const_map),       # w3 (row-padded)
        pl.BlockSpec((1, HID), const_map),          # b3
        pl.BlockSpec((HID, D_IN), const_map),       # w4
        pl.BlockSpec((1, D_IN), const_map),         # b4
        pl.BlockSpec((tb, LANE), batch_map),        # eps (lane-padded)
    ]
    out_specs = (
        pl.BlockSpec((tb, D_IN), batch_map),        # x_hat
        pl.BlockSpec((tb, LANE), batch_map),        # mu   (lane-dense)
        pl.BlockSpec((tb, LANE), batch_map),        # logvar (lane-dense)
    )

    # Advisory cost hint for XLA's scheduler.
    flops = int(2 * Bp * (D_IN * HID + HID * LANE * 2 + LANE * HID + HID * D_IN))
    transc = int(Bp * (LANE + D_IN))
    weight_bytes = 2 * (w1.size + w2m.size + w2l.size + w3.size + w4.size) \
        + 4 * (b1.size + b2m.size + b2l.size + b3.size + b4.size)
    act_bytes = Bp * (D_IN * 2 + D_IN * 4 + LANE * 4 * 3)
    cost = pl.CostEstimate(flops=flops, transcendentals=transc,
                           bytes_accessed=int(weight_bytes + act_bytes))

    x_hat_p, mu_p, logvar_p = pl.pallas_call(
        vae_kernel,
        out_shape=(
            jax.ShapeDtypeStruct((Bp, D_IN), jnp.float32),
            jax.ShapeDtypeStruct((Bp, LANE), jnp.float32),
            jax.ShapeDtypeStruct((Bp, LANE), jnp.float32),
        ),
        grid_spec=pltpu.PrefetchScalarGridSpec(
            num_scalar_prefetch=0,
            grid=grid,
            in_specs=in_specs,
            out_specs=out_specs,
        ),
        compiler_params=pltpu.CompilerParams(
            dimension_semantics=("parallel",)),     # shards batch tiles across TCs on v7x
        cost_estimate=cost,
    )(x_p, w1, b1, w2m, b2m, w2l, b2l, w3, b3, w4, b4, eps_p)

    return x_hat_p[:B], mu_p[:B, :LATENT], logvar_p[:B, :LATENT]


def init_params(key):
    """Deterministic synthetic parameters with PyTorch Linear shapes
    (stored transposed as [in, out]). Biases kept 2-D (1, out) for TPU layout."""
    ks = jax.random.split(key, 8)

    def lin(kw, kb, fan_in, fan_out):
        bound = 1.0 / jnp.sqrt(fan_in)
        w = jax.random.uniform(kw, (fan_in, fan_out), jnp.float32, -bound, bound)
        b = jax.random.uniform(kb, (1, fan_out), jnp.float32, -bound, bound)
        return w, b

    w1, b1 = lin(ks[0], ks[1], D_IN, HID)      # encoder Linear(784, 400)
    w2, b2 = lin(ks[2], ks[3], HID, 2 * LATENT)  # encoder Linear(400, 40)
    w3, b3 = lin(ks[4], ks[5], LATENT, HID)    # decoder Linear(20, 400)
    w4, b4 = lin(ks[6], ks[7], HID, D_IN)      # decoder Linear(400, 784)
    return (w1, b1, w2, b2, w3, b3, w4, b4)


if __name__ == "__main__":
    key = jax.random.PRNGKey(0)
    k_param, k_x, k_eps = jax.random.split(key, 3)

    B = 16  # small batch; tile_b=8 below exercises a 2-step batch grid
    params = init_params(k_param)
    x = jax.random.uniform(k_x, (B, D_IN), jnp.float32)      # MNIST-like pixels
    eps = jax.random.normal(k_eps, (B, LATENT), jnp.float32)  # reparam noise

    x_hat, mu, logvar = jax.block_until_ready(
        vae_forward(x, params, eps, tile_b=8))

    # Pure-JAX reference mirroring the kernel's dtype pipeline (bf16 MXU inputs,
    # f32 accumulation and f32 elementwise tail).
    w1, b1, w2, b2, w3, b3, w4, b4 = params
    bf = jnp.bfloat16

    def mm(a, w):
        return jnp.dot(a.astype(bf), w.astype(bf),
                       preferred_element_type=jnp.float32)

    h1_r = jnp.maximum(mm(x, w1) + b1, 0.0)
    mu_r = jnp.maximum(mm(h1_r, w2[:, :LATENT]) + b2[:, :LATENT], 0.0)
    lv_r = jnp.maximum(mm(h1_r, w2[:, LATENT:]) + b2[:, LATENT:], 0.0)
    z_r = eps * jnp.exp(0.5 * lv_r) + mu_r
    d1_r = jnp.maximum(mm(z_r, w3) + b3, 0.0)
    xhat_r = jax.nn.sigmoid(mm(d1_r, w4) + b4)

    assert x_hat.shape == (B, D_IN)
    assert mu.shape == (B, LATENT) and logvar.shape == (B, LATENT)
    assert jnp.allclose(x_hat, xhat_r, atol=5e-3, rtol=5e-3)
    assert jnp.allclose(mu, mu_r, atol=5e-3, rtol=5e-3)
    assert jnp.allclose(logvar, lv_r, atol=5e-3, rtol=5e-3)

    print("KERNEL_OK")
</pallas_src>

<mosaic_0001>
module attributes {stable_mosaic.version = 11 : i64} {
  func.func @vae_kernel(%arg0: i32, %arg1: memref<8x784xbf16, #tpu.memory_space<vmem>>, %arg2: memref<784x400xbf16, #tpu.memory_space<vmem>>, %arg3: memref<1x400xf32, #tpu.memory_space<vmem>>, %arg4: memref<400x128xbf16, #tpu.memory_space<vmem>>, %arg5: memref<1x128xf32, #tpu.memory_space<vmem>>, %arg6: memref<400x128xbf16, #tpu.memory_space<vmem>>, %arg7: memref<1x128xf32, #tpu.memory_space<vmem>>, %arg8: memref<128x400xbf16, #tpu.memory_space<vmem>>, %arg9: memref<1x400xf32, #tpu.memory_space<vmem>>, %arg10: memref<400x784xbf16, #tpu.memory_space<vmem>>, %arg11: memref<1x784xf32, #tpu.memory_space<vmem>>, %arg12: memref<8x128xf32, #tpu.memory_space<vmem>>, %arg13: memref<8x784xf32, #tpu.memory_space<vmem>>, %arg14: memref<8x128xf32, #tpu.memory_space<vmem>>, %arg15: memref<8x128xf32, #tpu.memory_space<vmem>>) attributes {dimension_semantics = [#tpu.dimension_semantics<parallel>], iteration_bounds = array<i64: 2>, scalar_prefetch = 0 : i64, scratch_operands = 0 : i64, tpu.core_type = #tpu.core_type<tc>, window_params = [{transform_indices = @transform_0, window_bounds = array<i64: 8, 784>}, {pipeline_mode = #tpu.pipeline_mode<synchronous>, transform_indices = @transform_1, window_bounds = array<i64: 784, 400>}, {pipeline_mode = #tpu.pipeline_mode<synchronous>, transform_indices = @transform_2, window_bounds = array<i64: 1, 400>}, {pipeline_mode = #tpu.pipeline_mode<synchronous>, transform_indices = @transform_3, window_bounds = array<i64: 400, 128>}, {pipeline_mode = #tpu.pipeline_mode<synchronous>, transform_indices = @transform_4, window_bounds = array<i64: 1, 128>}, {pipeline_mode = #tpu.pipeline_mode<synchronous>, transform_indices = @transform_5, window_bounds = array<i64: 400, 128>}, {pipeline_mode = #tpu.pipeline_mode<synchronous>, transform_indices = @transform_6, window_bounds = array<i64: 1, 128>}, {pipeline_mode = #tpu.pipeline_mode<synchronous>, transform_indices = @transform_7, window_bounds = array<i64: 128, 400>}, {pipeline_mode = #tpu.pipeline_mode<synchronous>, transform_indices = @transform_8, window_bounds = array<i64: 1, 400>}, {pipeline_mode = #tpu.pipeline_mode<synchronous>, transform_indices = @transform_9, window_bounds = array<i64: 400, 784>}, {pipeline_mode = #tpu.pipeline_mode<synchronous>, transform_indices = @transform_10, window_bounds = array<i64: 1, 784>}, {transform_indices = @transform_11, window_bounds = array<i64: 8, 128>}, {transform_indices = @transform_12, window_bounds = array<i64: 8, 784>}, {transform_indices = @transform_13, window_bounds = array<i64: 8, 128>}, {transform_indices = @transform_14, window_bounds = array<i64: 8, 128>}]} {
    %c0 = arith.constant 0 : index
    %c0_0 = arith.constant 0 : index
    %0 = vector.load %arg1[%c0, %c0_0] : memref<8x784xbf16, #tpu.memory_space<vmem>>, vector<8x784xbf16>
    %c0_1 = arith.constant 0 : index
    %c0_2 = arith.constant 0 : index
    %1 = vector.load %arg2[%c0_1, %c0_2] : memref<784x400xbf16, #tpu.memory_space<vmem>>, vector<784x400xbf16>
    %cst = arith.constant dense<0.000000e+00> : vector<8x400xf32>
    %2 = tpu.matmul %0, %1, %cst {dimension_numbers = #tpu.dot_dimension_numbers<[1], [0], [0], [1], [0, 0, 1, 1], [], []>} : vector<8x784xbf16>, vector<784x400xbf16>, vector<8x400xf32> -> vector<8x400xf32>
    %c0_3 = arith.constant 0 : index
    %c0_4 = arith.constant 0 : index
    %3 = vector.load %arg3[%c0_3, %c0_4] : memref<1x400xf32, #tpu.memory_space<vmem>>, vector<1x400xf32>
    %4 = vector.broadcast %3 : vector<1x400xf32> to vector<8x400xf32>
    %5 = arith.addf %2, %4 : vector<8x400xf32>
    %cst_5 = arith.constant 0.000000e+00 : f32
    %6 = vector.broadcast %cst_5 : f32 to vector<8x400xf32>
    %7 = arith.maximumf %5, %6 : vector<8x400xf32>
    %8 = arith.truncf %7 : vector<8x400xf32> to vector<8x400xbf16>
    %c0_6 = arith.constant 0 : index
    %c0_7 = arith.constant 0 : index
    %9 = vector.load %arg4[%c0_6, %c0_7] : memref<400x128xbf16, #tpu.memory_space<vmem>>, vector<400x128xbf16>
    %cst_8 = arith.constant dense<0.000000e+00> : vector<8x128xf32>
    %10 = tpu.matmul %8, %9, %cst_8 {dimension_numbers = #tpu.dot_dimension_numbers<[1], [0], [0], [1], [0, 0, 1, 1], [], []>} : vector<8x400xbf16>, vector<400x128xbf16>, vector<8x128xf32> -> vector<8x128xf32>
    %c0_9 = arith.constant 0 : index
    %c0_10 = arith.constant 0 : index
    %11 = vector.load %arg5[%c0_9, %c0_10] : memref<1x128xf32, #tpu.memory_space<vmem>>, vector<1x128xf32>
    %12 = vector.broadcast %11 : vector<1x128xf32> to vector<8x128xf32>
    %13 = arith.addf %10, %12 : vector<8x128xf32>
    %cst_11 = arith.constant 0.000000e+00 : f32
    %14 = vector.broadcast %cst_11 : f32 to vector<8x128xf32>
    %15 = arith.maximumf %13, %14 : vector<8x128xf32>
    %c0_12 = arith.constant 0 : index
    %c0_13 = arith.constant 0 : index
    %16 = vector.load %arg6[%c0_12, %c0_13] : memref<400x128xbf16, #tpu.memory_space<vmem>>, vector<400x128xbf16>
    %cst_14 = arith.constant dense<0.000000e+00> : vector<8x128xf32>
    %17 = tpu.matmul %8, %16, %cst_14 {dimension_numbers = #tpu.dot_dimension_numbers<[1], [0], [0], [1], [0, 0, 1, 1], [], []>} : vector<8x400xbf16>, vector<400x128xbf16>, vector<8x128xf32> -> vector<8x128xf32>
    %c0_15 = arith.constant 0 : index
    %c0_16 = arith.constant 0 : index
    %18 = vector.load %arg7[%c0_15, %c0_16] : memref<1x128xf32, #tpu.memory_space<vmem>>, vector<1x128xf32>
    %19 = vector.broadcast %18 : vector<1x128xf32> to vector<8x128xf32>
    %20 = arith.addf %17, %19 : vector<8x128xf32>
    %cst_17 = arith.constant 0.000000e+00 : f32
    %21 = vector.broadcast %cst_17 : f32 to vector<8x128xf32>
    %22 = arith.maximumf %20, %21 : vector<8x128xf32>
    %cst_18 = arith.constant 5.000000e-01 : f32
    %23 = vector.broadcast %cst_18 : f32 to vector<8x128xf32>
    %24 = arith.mulf %23, %22 : vector<8x128xf32>
    %25 = math.exp %24 : vector<8x128xf32>
    %c0_19 = arith.constant 0 : index
    %c0_20 = arith.constant 0 : index
    %26 = vector.load %arg12[%c0_19, %c0_20] : memref<8x128xf32, #tpu.memory_space<vmem>>, vector<8x128xf32>
    %27 = arith.mulf %26, %25 : vector<8x128xf32>
    %28 = arith.addf %27, %15 : vector<8x128xf32>
    %29 = arith.truncf %28 : vector<8x128xf32> to vector<8x128xbf16>
    %c0_21 = arith.constant 0 : index
    %c0_22 = arith.constant 0 : index
    %30 = vector.load %arg8[%c0_21, %c0_22] : memref<128x400xbf16, #tpu.memory_space<vmem>>, vector<128x400xbf16>
    %cst_23 = arith.constant dense<0.000000e+00> : vector<8x400xf32>
    %31 = tpu.matmul %29, %30, %cst_23 {dimension_numbers = #tpu.dot_dimension_numbers<[1], [0], [0], [1], [0, 0, 1, 1], [], []>} : vector<8x128xbf16>, vector<128x400xbf16>, vector<8x400xf32> -> vector<8x400xf32>
    %c0_24 = arith.constant 0 : index
    %c0_25 = arith.constant 0 : index
    %32 = vector.load %arg9[%c0_24, %c0_25] : memref<1x400xf32, #tpu.memory_space<vmem>>, vector<1x400xf32>
    %33 = vector.broadcast %32 : vector<1x400xf32> to vector<8x400xf32>
    %34 = arith.addf %31, %33 : vector<8x400xf32>
    %cst_26 = arith.constant 0.000000e+00 : f32
    %35 = vector.broadcast %cst_26 : f32 to vector<8x400xf32>
    %36 = arith.maximumf %34, %35 : vector<8x400xf32>
    %37 = arith.truncf %36 : vector<8x400xf32> to vector<8x400xbf16>
    %c0_27 = arith.constant 0 : index
    %c0_28 = arith.constant 0 : index
    %38 = vector.load %arg10[%c0_27, %c0_28] : memref<400x784xbf16, #tpu.memory_space<vmem>>, vector<400x784xbf16>
    %cst_29 = arith.constant dense<0.000000e+00> : vector<8x784xf32>
    %39 = tpu.matmul %37, %38, %cst_29 {dimension_numbers = #tpu.dot_dimension_numbers<[1], [0], [0], [1], [0, 0, 1, 1], [], []>} : vector<8x400xbf16>, vector<400x784xbf16>, vector<8x784xf32> -> vector<8x784xf32>
    %c0_30 = arith.constant 0 : index
    %c0_31 = arith.constant 0 : index
    %40 = vector.load %arg11[%c0_30, %c0_31] : memref<1x784xf32, #tpu.memory_space<vmem>>, vector<1x784xf32>
    %41 = vector.broadcast %40 : vector<1x784xf32> to vector<8x784xf32>
    %42 = arith.addf %39, %41 : vector<8x784xf32>
    %43 = arith.negf %42 : vector<8x784xf32>
    %44 = math.exp %43 : vector<8x784xf32>
    %cst_32 = arith.constant 1.000000e+00 : f32
    %45 = vector.broadcast %cst_32 : f32 to vector<8x784xf32>
    %46 = arith.addf %45, %44 : vector<8x784xf32>
    %47 = arith.divf %45, %46 : vector<8x784xf32>
    %c0_33 = arith.constant 0 : index
    %c0_34 = arith.constant 0 : index
    %48 = vector.load %arg13[%c0_33, %c0_34] : memref<8x784xf32, #tpu.memory_space<vmem>>, vector<8x784xf32>
    tpu.vector_store %arg13[%c0_33, %c0_34], %47 {strides = array<i32>} : memref<8x784xf32, #tpu.memory_space<vmem>>, vector<8x784xf32>,
    %c0_35 = arith.constant 0 : index
    %c0_36 = arith.constant 0 : index
    %49 = vector.load %arg14[%c0_35, %c0_36] : memref<8x128xf32, #tpu.memory_space<vmem>>, vector<8x128xf32>
    tpu.vector_store %arg14[%c0_35, %c0_36], %15 {strides = array<i32>} : memref<8x128xf32, #tpu.memory_space<vmem>>, vector<8x128xf32>,
    %c0_37 = arith.constant 0 : index
    %c0_38 = arith.constant 0 : index
    %50 = vector.load %arg15[%c0_37, %c0_38] : memref<8x128xf32, #tpu.memory_space<vmem>>, vector<8x128xf32>
    tpu.vector_store %arg15[%c0_37, %c0_38], %22 {strides = array<i32>} : memref<8x128xf32, #tpu.memory_space<vmem>>, vector<8x128xf32>,
    return
  }
  func.func @transform_0(%arg0: i32) -> (i32, i32) {
    %c0_i32 = arith.constant 0 : i32
    %c0_i32_0 = arith.constant 0 : i32
    return %arg0, %c0_i32 : i32, i32
  }
  func.func @transform_1(%arg0: i32) -> (i32, i32) {
    %c0_i32 = arith.constant 0 : i32
    %c0_i32_0 = arith.constant 0 : i32
    %c0_i32_1 = arith.constant 0 : i32
    return %c0_i32, %c0_i32_0 : i32, i32
  }
  func.func @transform_2(%arg0: i32) -> (i32, i32) {
    %c0_i32 = arith.constant 0 : i32
    %c0_i32_0 = arith.constant 0 : i32
    %c0_i32_1 = arith.constant 0 : i32
    return %c0_i32, %c0_i32_0 : i32, i32
  }
  func.func @transform_3(%arg0: i32) -> (i32, i32) {
    %c0_i32 = arith.constant 0 : i32
    %c0_i32_0 = arith.constant 0 : i32
    %c0_i32_1 = arith.constant 0 : i32
    return %c0_i32, %c0_i32_0 : i32, i32
  }
  func.func @transform_4(%arg0: i32) -> (i32, i32) {
    %c0_i32 = arith.constant 0 : i32
    %c0_i32_0 = arith.constant 0 : i32
    %c0_i32_1 = arith.constant 0 : i32
    return %c0_i32, %c0_i32_0 : i32, i32
  }
  func.func @transform_5(%arg0: i32) -> (i32, i32) {
    %c0_i32 = arith.constant 0 : i32
    %c0_i32_0 = arith.constant 0 : i32
    %c0_i32_1 = arith.constant 0 : i32
    return %c0_i32, %c0_i32_0 : i32, i32
  }
  func.func @transform_6(%arg0: i32) -> (i32, i32) {
    %c0_i32 = arith.constant 0 : i32
    %c0_i32_0 = arith.constant 0 : i32
    %c0_i32_1 = arith.constant 0 : i32
    return %c0_i32, %c0_i32_0 : i32, i32
  }
  func.func @transform_7(%arg0: i32) -> (i32, i32) {
    %c0_i32 = arith.constant 0 : i32
    %c0_i32_0 = arith.constant 0 : i32
    %c0_i32_1 = arith.constant 0 : i32
    return %c0_i32, %c0_i32_0 : i32, i32
  }
  func.func @transform_8(%arg0: i32) -> (i32, i32) {
    %c0_i32 = arith.constant 0 : i32
    %c0_i32_0 = arith.constant 0 : i32
    %c0_i32_1 = arith.constant 0 : i32
    return %c0_i32, %c0_i32_0 : i32, i32
  }
  func.func @transform_9(%arg0: i32) -> (i32, i32) {
    %c0_i32 = arith.constant 0 : i32
    %c0_i32_0 = arith.constant 0 : i32
    %c0_i32_1 = arith.constant 0 : i32
    return %c0_i32, %c0_i32_0 : i32, i32
  }
  func.func @transform_10(%arg0: i32) -> (i32, i32) {
    %c0_i32 = arith.constant 0 : i32
    %c0_i32_0 = arith.constant 0 : i32
    %c0_i32_1 = arith.constant 0 : i32
    return %c0_i32, %c0_i32_0 : i32, i32
  }
  func.func @transform_11(%arg0: i32) -> (i32, i32) {
    %c0_i32 = arith.constant 0 : i32
    %c0_i32_0 = arith.constant 0 : i32
    return %arg0, %c0_i32 : i32, i32
  }
  func.func @transform_12(%arg0: i32) -> (i32, i32) {
    %c0_i32 = arith.constant 0 : i32
    %c0_i32_0 = arith.constant 0 : i32
    return %arg0, %c0_i32 : i32, i32
  }
  func.func @transform_13(%arg0: i32) -> (i32, i32) {
    %c0_i32 = arith.constant 0 : i32
    %c0_i32_0 = arith.constant 0 : i32
    return %arg0, %c0_i32 : i32, i32
  }
  func.func @transform_14(%arg0: i32) -> (i32, i32) {
    %c0_i32 = arith.constant 0 : i32
    %c0_i32_0 = arith.constant 0 : i32
    return %arg0, %c0_i32 : i32, i32
  }
}

</mosaic_0001>

<llo_original>
// kernel: tpu_custom_call.1
$region0: #{tpu_custom_call.1}
  #allocation0 [shape = 'u32[]', space=smem, size = 0x4, offset = 0x4, fixed_abs, tag = 'smem constant byte address 0x4 - core index']
  #allocation1 [shape = 'u32[144,128]{1,0:T(1,128)}', space=vmem, size = 0x12000, scoped, tag = 'internal scratch']
  %s0 = inlined_call_operand.vmem [shape: bf16[16,784], index: 0, kind: input, shape index: {}]
  %s1 = inlined_call_operand.vmem [shape: bf16[784,400], index: 1, kind: input, shape index: {}]
  %s2 = inlined_call_operand.vmem [shape: f32[1,400], index: 2, kind: input, shape index: {}]
  %s3 = inlined_call_operand.vmem [shape: bf16[400,128], index: 3, kind: input, shape index: {}]
  %s4 = inlined_call_operand.vmem [shape: f32[1,128], index: 4, kind: input, shape index: {}]
  %s5 = inlined_call_operand.vmem [shape: bf16[400,128], index: 5, kind: input, shape index: {}]
  %s6 = inlined_call_operand.vmem [shape: f32[1,128], index: 6, kind: input, shape index: {}]
  %s7 = inlined_call_operand.vmem [shape: bf16[128,400], index: 7, kind: input, shape index: {}]
  %s8 = inlined_call_operand.vmem [shape: f32[1,400], index: 8, kind: input, shape index: {}]
  %s9 = inlined_call_operand.vmem [shape: bf16[400,784], index: 9, kind: input, shape index: {}]
  %s10 = inlined_call_operand.vmem [shape: f32[1,784], index: 10, kind: input, shape index: {}]
  %s11 = inlined_call_operand.vmem [shape: f32[16,128], index: 11, kind: input, shape index: {}]
  %s12 = inlined_call_operand.hbm [shape: f32[16,784], index: 12, kind: output, shape index: {0}]
  %s13 = inlined_call_operand.hbm [shape: f32[16,128], index: 13, kind: output, shape index: {1}]
  %s14 = inlined_call_operand.hbm [shape: f32[16,128], index: 14, kind: output, shape index: {2}]
  %15 = xla_tuple %s12, %s13, %s14
  %s16 = sld [smem:[#allocation0]]
  $region97: #{tpu_custom_call.1} parent=0
    _
  %s18 = ssub.s32 1, %s16
  %s19 = scalar_select 0, %s18, %s16
  $region1: #{tpu_custom_call.1} parent=0
    #allocation2 [shape = 'u8[57344]{0}', space=vmem, size = 0xe000, scoped, tag = 'output window, operand 0']
    #allocation3 [shape = 's32[2]{0}', space=sflag, size = 0x8, scoped, tag = 'scoped memory for tpu_custom_call.1']
    #allocation4 [shape = 'u8[8192]{0}', space=vmem, size = 0x2000, scoped, tag = 'output window, operand 1']
    #allocation5 [shape = 's32[2]{0}', space=sflag, size = 0x8, scoped, tag = 'scoped memory for tpu_custom_call.1']
    #allocation6 [shape = 'u8[8192]{0}', space=vmem, size = 0x2000, scoped, tag = 'output window, operand 2']
    %20 = vsyncpa [#allocation3], 0
    %s21 = scalar_lea.sflag [#allocation3], 1
    %22 = vsyncpa %s21, 0
    %23 = vsyncpa [#allocation5], 0
    %s24 = scalar_lea.sflag [#allocation5], 1
    %25 = vsyncpa %s24, 0
    loop: start=0, step=1, limit=4
    $region2: #{tpu_custom_call.1} parent=1 // loop_pre_header
      _
    $region3: #{tpu_custom_call.1} parent=1 // loop_header
      %s27 = sphi 0, %s31
      %p28 = scmp.ge.s32.totalorder %s27, 4
      %s37 = sphi 0, %s39
      %s40 = sphi 0, %s37
      %s41 = sphi 0, %s40
      %s57 = sphi 0, %s41
      %s61 = sphi 0, %s61
      %s63 = sphi 0, %s61
      %s64 = sphi 0, %s63
      %s78 = sphi 0, %s64
      %s82 = sphi 0, %s82
      %s84 = sphi 0, %s82
      %s85 = sphi 0, %s84
      %s99 = sphi 0, %s85
      %s103 = sphi 0, %s103
      %s105 = sphi 0, %s103
      %s106 = sphi 0, %s105
      %s120 = sphi 0, %s106
      %s124 = sphi 0, %s124
      %s126 = sphi 0, %s124
      %s127 = sphi 0, %s126
      %s141 = sphi 0, %s127
      %s145 = sphi 0, %s145
      %s147 = sphi 0, %s145
      %s148 = sphi 0, %s147
      %s162 = sphi 0, %s148
      %s166 = sphi 0, %s166
      %s168 = sphi 0, %s166
      %s169 = sphi 0, %s168
      %s183 = sphi 0, %s169
      %s187 = sphi 0, %s187
      %s189 = sphi 0, %s187
      %s190 = sphi 0, %s189
      %s204 = sphi 0, %s190
      %s208 = sphi 0, %s208
      %s210 = sphi 0, %s208
      %s211 = sphi 0, %s210
      %s225 = sphi 0, %s211
      %s229 = sphi 0, %s229
      %s231 = sphi 0, %s229
      %s232 = sphi 0, %s231
      %s246 = sphi 0, %s232
      %s250 = sphi 0, %s250
      %s252 = sphi 0, %s250
      %s253 = sphi 0, %s252
      %s267 = sphi 0, %s253
      %s273 = sphi 0, %s275
      %s276 = sphi 0, %s273
      %s277 = sphi 0, %s276
      %s293 = sphi 0, %s277
      %s299 = sphi 0, %s301
      %s302 = sphi 0, %s299
      %s303 = sphi 0, %s302
      %s319 = sphi 0, %s303
      %s325 = sphi 0, %s327
      %s328 = sphi 0, %s325
      %s329 = sphi 0, %s328
      %s345 = sphi 0, %s329
      %s351 = sphi 0, %s353
      %s354 = sphi 0, %s351
      %s355 = sphi 0, %s354
      %s371 = sphi 0, %s355
    $region4: #{tpu_custom_call.1} parent=1 // loop_header_branch
      %30 = sbr.rel (%p28) target = $region8
    $region5: #{tpu_custom_call.1} parent=1 // loop_body
      %s32 = ssub.s32 %s27, 1
      %s33 = ssub.s32 %s27, 2
      %s34 = sadd.s32 %s27, 1
      %s35 = ssub.s32 %s27, %s34
      %p36 = scmp.eq.s32.totalorder %s35, 0
      %s38 = sadd.s32 %s37, 1
      %s39 = scalar_select %p36, %s37, %s38
      %p42 = pneg %p36
      %p43 = scmp.eq.s32.totalorder %s27, 1
      %p44 = por %p42, %p43
      %p45 = scmp.ne.s32.totalorder %s37, %s40
      %p46 = scmp.eq.s32.totalorder %s27, 0
      %p47 = por %p45, %p46
      %p48 = scmp.ne.s32.totalorder %s37, %s40
      %p49 = scmp.eq.s32.totalorder %s32, 1
      %p50 = por %p48, %p49
      %p51 = scmp.ne.s32.totalorder %s40, %s41
      %p52 = scmp.eq.s32.totalorder %s32, 0
      %p53 = por %p51, %p52
      %p54 = scmp.ne.s32.totalorder %s40, %s41
      %p55 = scmp.eq.s32.totalorder %s33, 1
      %p56 = por %p54, %p55
      %p58 = scmp.ne.s32.totalorder %s41, %s57
      %p59 = scmp.eq.s32.totalorder %s33, 0
      %p60 = por %p58, %p59
      %s62 = sadd.s32 %s61, 1
      %p65 = scmp.eq.s32.totalorder %s27, 1
      %p66 = scmp.ne.s32.totalorder %s61, %s63
      %p67 = scmp.eq.s32.totalorder %s27, 0
      %p68 = por %p66, %p67
      %p69 = scmp.ne.s32.totalorder %s61, %s63
      %p70 = scmp.eq.s32.totalorder %s32, 1
      %p71 = por %p69, %p70
      %p72 = scmp.ne.s32.totalorder %s63, %s64
      %p73 = scmp.eq.s32.totalorder %s32, 0
      %p74 = por %p72, %p73
      %p75 = scmp.ne.s32.totalorder %s63, %s64
      %p76 = scmp.eq.s32.totalorder %s33, 1
      %p77 = por %p75, %p76
      %p79 = scmp.ne.s32.totalorder %s64, %s78
      %p80 = scmp.eq.s32.totalorder %s33, 0
      %p81 = por %p79, %p80
      %s83 = sadd.s32 %s82, 1
      %p86 = scmp.eq.s32.totalorder %s27, 1
      %p87 = scmp.ne.s32.totalorder %s82, %s84
      %p88 = scmp.eq.s32.totalorder %s27, 0
      %p89 = por %p87, %p88
      %p90 = scmp.ne.s32.totalorder %s82, %s84
      %p91 = scmp.eq.s32.totalorder %s32, 1
      %p92 = por %p90, %p91
      %p93 = scmp.ne.s32.totalorder %s84, %s85
      %p94 = scmp.eq.s32.totalorder %s32, 0
      %p95 = por %p93, %p94
      %p96 = scmp.ne.s32.totalorder %s84, %s85
      %p97 = scmp.eq.s32.totalorder %s33, 1
      %p98 = por %p96, %p97
      %p100 = scmp.ne.s32.totalorder %s85, %s99
      %p101 = scmp.eq.s32.totalorder %s33, 0
      %p102 = por %p100, %p101
      %s104 = sadd.s32 %s103, 1
      %p107 = scmp.eq.s32.totalorder %s27, 1
      %p108 = scmp.ne.s32.totalorder %s103, %s105
      %p109 = scmp.eq.s32.totalorder %s27, 0
      %p110 = por %p108, %p109
      %p111 = scmp.ne.s32.totalorder %s103, %s105
      %p112 = scmp.eq.s32.totalorder %s32, 1
      %p113 = por %p111, %p112
      %p114 = scmp.ne.s32.totalorder %s105, %s106
      %p115 = scmp.eq.s32.totalorder %s32, 0
      %p116 = por %p114, %p115
      %p117 = scmp.ne.s32.totalorder %s105, %s106
      %p118 = scmp.eq.s32.totalorder %s33, 1
      %p119 = por %p117, %p118
      %p121 = scmp.ne.s32.totalorder %s106, %s120
      %p122 = scmp.eq.s32.totalorder %s33, 0
      %p123 = por %p121, %p122
      %s125 = sadd.s32 %s124, 1
      %p128 = scmp.eq.s32.totalorder %s27, 1
      %p129 = scmp.ne.s32.totalorder %s124, %s126
      %p130 = scmp.eq.s32.totalorder %s27, 0
      %p131 = por %p129, %p130
      %p132 = scmp.ne.s32.totalorder %s124, %s126
      %p133 = scmp.eq.s32.totalorder %s32, 1
      %p134 = por %p132, %p133
      %p135 = scmp.ne.s32.totalorder %s126, %s127
      %p136 = scmp.eq.s32.totalorder %s32, 0
      %p137 = por %p135, %p136
      %p138 = scmp.ne.s32.totalorder %s126, %s127
      %p139 = scmp.eq.s32.totalorder %s33, 1
      %p140 = por %p138, %p139
      %p142 = scmp.ne.s32.totalorder %s127, %s141
      %p143 = scmp.eq.s32.totalorder %s33, 0
      %p144 = por %p142, %p143
      %s146 = sadd.s32 %s145, 1
      %p149 = scmp.eq.s32.totalorder %s27, 1
      %p150 = scmp.ne.s32.totalorder %s145, %s147
      %p151 = scmp.eq.s32.totalorder %s27, 0
      %p152 = por %p150, %p151
      %p153 = scmp.ne.s32.totalorder %s145, %s147
      %p154 = scmp.eq.s32.totalorder %s32, 1
      %p155 = por %p153, %p154
      %p156 = scmp.ne.s32.totalorder %s147, %s148
      %p157 = scmp.eq.s32.totalorder %s32, 0
      %p158 = por %p156, %p157
      %p159 = scmp.ne.s32.totalorder %s147, %s148
      %p160 = scmp.eq.s32.totalorder %s33, 1
      %p161 = por %p159, %p160
      %p163 = scmp.ne.s32.totalorder %s148, %s162
      %p164 = scmp.eq.s32.totalorder %s33, 0
      %p165 = por %p163, %p164
      %s167 = sadd.s32 %s166, 1
      %p170 = scmp.eq.s32.totalorder %s27, 1
      %p171 = scmp.ne.s32.totalorder %s166, %s168
      %p172 = scmp.eq.s32.totalorder %s27, 0
      %p173 = por %p171, %p172
      %p174 = scmp.ne.s32.totalorder %s166, %s168
      %p175 = scmp.eq.s32.totalorder %s32, 1
      %p176 = por %p174, %p175
      %p177 = scmp.ne.s32.totalorder %s168, %s169
      %p178 = scmp.eq.s32.totalorder %s32, 0
      %p179 = por %p177, %p178
      %p180 = scmp.ne.s32.totalorder %s168, %s169
      %p181 = scmp.eq.s32.totalorder %s33, 1
      %p182 = por %p180, %p181
      %p184 = scmp.ne.s32.totalorder %s169, %s183
      %p185 = scmp.eq.s32.totalorder %s33, 0
      %p186 = por %p184, %p185
      %s188 = sadd.s32 %s187, 1
      %p191 = scmp.eq.s32.totalorder %s27, 1
      %p192 = scmp.ne.s32.totalorder %s187, %s189
      %p193 = scmp.eq.s32.totalorder %s27, 0
      %p194 = por %p192, %p193
      %p195 = scmp.ne.s32.totalorder %s187, %s189
      %p196 = scmp.eq.s32.totalorder %s32, 1
      %p197 = por %p195, %p196
      %p198 = scmp.ne.s32.totalorder %s189, %s190
      %p199 = scmp.eq.s32.totalorder %s32, 0
      %p200 = por %p198, %p199
      %p201 = scmp.ne.s32.totalorder %s189, %s190
      %p202 = scmp.eq.s32.totalorder %s33, 1
      %p203 = por %p201, %p202
      %p205 = scmp.ne.s32.totalorder %s190, %s204
      %p206 = scmp.eq.s32.totalorder %s33, 0
      %p207 = por %p205, %p206
      %s209 = sadd.s32 %s208, 1
      %p212 = scmp.eq.s32.totalorder %s27, 1
      %p213 = scmp.ne.s32.totalorder %s208, %s210
      %p214 = scmp.eq.s32.totalorder %s27, 0
      %p215 = por %p213, %p214
      %p216 = scmp.ne.s32.totalorder %s208, %s210
      %p217 = scmp.eq.s32.totalorder %s32, 1
      %p218 = por %p216, %p217
      %p219 = scmp.ne.s32.totalorder %s210, %s211
      %p220 = scmp.eq.s32.totalorder %s32, 0
      %p221 = por %p219, %p220
      %p222 = scmp.ne.s32.totalorder %s210, %s211
      %p223 = scmp.eq.s32.totalorder %s33, 1
      %p224 = por %p222, %p223
      %p226 = scmp.ne.s32.totalorder %s211, %s225
      %p227 = scmp.eq.s32.totalorder %s33, 0
      %p228 = por %p226, %p227
      %s230 = sadd.s32 %s229, 1
      %p233 = scmp.eq.s32.totalorder %s27, 1
      %p234 = scmp.ne.s32.totalorder %s229, %s231
      %p235 = scmp.eq.s32.totalorder %s27, 0
      %p236 = por %p234, %p235
      %p237 = scmp.ne.s32.totalorder %s229, %s231
      %p238 = scmp.eq.s32.totalorder %s32, 1
      %p239 = por %p237, %p238
      %p240 = scmp.ne.s32.totalorder %s231, %s232
      %p241 = scmp.eq.s32.totalorder %s32, 0
      %p242 = por %p240, %p241
      %p243 = scmp.ne.s32.totalorder %s231, %s232
      %p244 = scmp.eq.s32.totalorder %s33, 1
      %p245 = por %p243, %p244
      %p247 = scmp.ne.s32.totalorder %s232, %s246
      %p248 = scmp.eq.s32.totalorder %s33, 0
      %p249 = por %p247, %p248
      %s251 = sadd.s32 %s250, 1
      %p254 = scmp.eq.s32.totalorder %s27, 1
      %p255 = scmp.ne.s32.totalorder %s250, %s252
      %p256 = scmp.eq.s32.totalorder %s27, 0
      %p257 = por %p255, %p256
      %p258 = scmp.ne.s32.totalorder %s250, %s252
      %p259 = scmp.eq.s32.totalorder %s32, 1
      %p260 = por %p258, %p259
      %p261 = scmp.ne.s32.totalorder %s252, %s253
      %p262 = scmp.eq.s32.totalorder %s32, 0
      %p263 = por %p261, %p262
      %p264 = scmp.ne.s32.totalorder %s252, %s253
      %p265 = scmp.eq.s32.totalorder %s33, 1
      %p266 = por %p264, %p265
      %p268 = scmp.ne.s32.totalorder %s253, %s267
      %p269 = scmp.eq.s32.totalorder %s33, 0
      %p270 = por %p268, %p269
      %s271 = ssub.s32 %s27, %s34
      %p272 = scmp.eq.s32.totalorder %s271, 0
      %s274 = sadd.s32 %s273, 1
      %s275 = scalar_select %p272, %s273, %s274
      %p278 = pneg %p272
      %p279 = scmp.eq.s32.totalorder %s27, 1
      %p280 = por %p278, %p279
      %p281 = scmp.ne.s32.totalorder %s273, %s276
      %p282 = scmp.eq.s32.totalorder %s27, 0
      %p283 = por %p281, %p282
      %p284 = scmp.ne.s32.totalorder %s273, %s276
      %p285 = scmp.eq.s32.totalorder %s32, 1
      %p286 = por %p284, %p285
      %p287 = scmp.ne.s32.totalorder %s276, %s277
      %p288 = scmp.eq.s32.totalorder %s32, 0
      %p289 = por %p287, %p288
      %p290 = scmp.ne.s32.totalorder %s276, %s277
      %p291 = scmp.eq.s32.totalorder %s33, 1
      %p292 = por %p290, %p291
      %p294 = scmp.ne.s32.totalorder %s277, %s293
      %p295 = scmp.eq.s32.totalorder %s33, 0
      %p296 = por %p294, %p295
      %s297 = ssub.s32 %s27, %s34
      %p298 = scmp.eq.s32.totalorder %s297, 0
      %s300 = sadd.s32 %s299, 1
      %s301 = scalar_select %p298, %s299, %s300
      %p304 = pneg %p298
      %p305 = scmp.eq.s32.totalorder %s27, 1
      %p306 = por %p304, %p305
      %p307 = scmp.ne.s32.totalorder %s299, %s302
      %p308 = scmp.eq.s32.totalorder %s27, 0
      %p309 = por %p307, %p308
      %p310 = scmp.ne.s32.totalorder %s299, %s302
      %p311 = scmp.eq.s32.totalorder %s32, 1
      %p312 = por %p310, %p311
      %p313 = scmp.ne.s32.totalorder %s302, %s303
      %p314 = scmp.eq.s32.totalorder %s32, 0
      %p315 = por %p313, %p314
      %p316 = scmp.ne.s32.totalorder %s302, %s303
      %p317 = scmp.eq.s32.totalorder %s33, 1
      %p318 = por %p316, %p317
      %p320 = scmp.ne.s32.totalorder %s303, %s319
      %p321 = scmp.eq.s32.totalorder %s33, 0
      %p322 = por %p320, %p321
      %s323 = ssub.s32 %s27, %s34
      %p324 = scmp.eq.s32.totalorder %s323, 0
      %s326 = sadd.s32 %s325, 1
      %s327 = scalar_select %p324, %s325, %s326
      %p330 = pneg %p324
      %p331 = scmp.eq.s32.totalorder %s27, 1
      %p332 = por %p330, %p331
      %p333 = scmp.ne.s32.totalorder %s325, %s328
      %p334 = scmp.eq.s32.totalorder %s27, 0
      %p335 = por %p333, %p334
      %p336 = scmp.ne.s32.totalorder %s325, %s328
      %p337 = scmp.eq.s32.totalorder %s32, 1
      %p338 = por %p336, %p337
      %p339 = scmp.ne.s32.totalorder %s328, %s329
      %p340 = scmp.eq.s32.totalorder %s32, 0
      %p341 = por %p339, %p340
      %p342 = scmp.ne.s32.totalorder %s328, %s329
      %p343 = scmp.eq.s32.totalorder %s33, 1
      %p344 = por %p342, %p343
      %p346 = scmp.ne.s32.totalorder %s329, %s345
      %p347 = scmp.eq.s32.totalorder %s33, 0
      %p348 = por %p346, %p347
      %s349 = ssub.s32 %s27, %s34
      %p350 = scmp.eq.s32.totalorder %s349, 0
      %s352 = sadd.s32 %s351, 1
      %s353 = scalar_select %p350, %s351, %s352
      %p356 = pneg %p350
      %p357 = scmp.eq.s32.totalorder %s27, 1
      %p358 = por %p356, %p357
      %p359 = scmp.ne.s32.totalorder %s351, %s354
      %p360 = scmp.eq.s32.totalorder %s27, 0
      %p361 = por %p359, %p360
      %p362 = scmp.ne.s32.totalorder %s351, %s354
      %p363 = scmp.eq.s32.totalorder %s32, 1
      %p364 = por %p362, %p363
      %p365 = scmp.ne.s32.totalorder %s354, %s355
      %p366 = scmp.eq.s32.totalorder %s32, 0
      %p367 = por %p365, %p366
      %p368 = scmp.ne.s32.totalorder %s354, %s355
      %p369 = scmp.eq.s32.totalorder %s33, 1
      %p370 = por %p368, %p369
      %p372 = scmp.ne.s32.totalorder %s355, %s371
      %p373 = scmp.eq.s32.totalorder %s33, 0
      %p374 = por %p372, %p373
      %p375 = scmp.le.s32.totalorder 1, %s27
      %p376 = scmp.lt.s32.totalorder %s27, 3
      %p377 = pnand %p375, %p376
      %p378 = pneg %p377
      // Predicated region
      $region9: #{tpu_custom_call.1} parent=5 // pred_check
        _
      $region10: #{tpu_custom_call.1} parent=5 // pred_check_branch
        %380 = sbr.rel (%p377) target = $region12
      $region11: #{tpu_custom_call.1} parent=5 // pred_region
        %s381 = ssub.s32 %s27, 1
        // Predicated region
        $region13: #{tpu_custom_call.1} parent=11 // pred_check
          %p382 = pneg %p74
        $region14: #{tpu_custom_call.1} parent=11 // pred_check_branch
          %384 = sbr.rel (%p382) target = $region16
        $region15: #{tpu_custom_call.1} parent=11 // pred_region
          _
        $region16: #{tpu_custom_call.1} parent=11 // pred_fallthru
          _
        // Predicated region
        $region17: #{tpu_custom_call.1} parent=11 // pred_check
          %p385 = pneg %p95
        $region18: #{tpu_custom_call.1} parent=11 // pred_check_branch
          %387 = sbr.rel (%p385) target = $region20
        $region19: #{tpu_custom_call.1} parent=11 // pred_region
          _
        $region20: #{tpu_custom_call.1} parent=11 // pred_fallthru
          _
        // Predicated region
        $region21: #{tpu_custom_call.1} parent=11 // pred_check
          %p388 = pneg %p116
        $region22: #{tpu_custom_call.1} parent=11 // pred_check_branch
          %390 = sbr.rel (%p388) target = $region24
        $region23: #{tpu_custom_call.1} parent=11 // pred_region
          _
        $region24: #{tpu_custom_call.1} parent=11 // pred_fallthru
          _
        // Predicated region
        $region25: #{tpu_custom_call.1} parent=11 // pred_check
          %p391 = pneg %p137
        $region26: #{tpu_custom_call.1} parent=11 // pred_check_branch
          %393 = sbr.rel (%p391) target = $region28
        $region27: #{tpu_custom_call.1} parent=11 // pred_region
          _
        $region28: #{tpu_custom_call.1} parent=11 // pred_fallthru
          _
        // Predicated region
        $region29: #{tpu_custom_call.1} parent=11 // pred_check
          %p394 = pneg %p158
        $region30: #{tpu_custom_call.1} parent=11 // pred_check_branch
          %396 = sbr.rel (%p394) target = $region32
        $region31: #{tpu_custom_call.1} parent=11 // pred_region
          _
        $region32: #{tpu_custom_call.1} parent=11 // pred_fallthru
          _
        // Predicated region
        $region33: #{tpu_custom_call.1} parent=11 // pred_check
          %p397 = pneg %p179
        $region34: #{tpu_custom_call.1} parent=11 // pred_check_branch
          %399 = sbr.rel (%p397) target = $region36
        $region35: #{tpu_custom_call.1} parent=11 // pred_region
          _
        $region36: #{tpu_custom_call.1} parent=11 // pred_fallthru
          _
        // Predicated region
        $region37: #{tpu_custom_call.1} parent=11 // pred_check
          %p400 = pneg %p200
        $region38: #{tpu_custom_call.1} parent=11 // pred_check_branch
          %402 = sbr.rel (%p400) target = $region40
        $region39: #{tpu_custom_call.1} parent=11 // pred_region
          _
        $region40: #{tpu_custom_call.1} parent=11 // pred_fallthru
          _
        // Predicated region
        $region41: #{tpu_custom_call.1} parent=11 // pred_check
          %p403 = pneg %p221
        $region42: #{tpu_custom_call.1} parent=11 // pred_check_branch
          %405 = sbr.rel (%p403) target = $region44
        $region43: #{tpu_custom_call.1} parent=11 // pred_region
          _
        $region44: #{tpu_custom_call.1} parent=11 // pred_fallthru
          _
        // Predicated region
        $region45: #{tpu_custom_call.1} parent=11 // pred_check
          %p406 = pneg %p242
        $region46: #{tpu_custom_call.1} parent=11 // pred_check_branch
          %408 = sbr.rel (%p406) target = $region48
        $region47: #{tpu_custom_call.1} parent=11 // pred_region
          _
        $region48: #{tpu_custom_call.1} parent=11 // pred_fallthru
          _
        // Predicated region
        $region49: #{tpu_custom_call.1} parent=11 // pred_check
          %p409 = pneg %p263
        $region50: #{tpu_custom_call.1} parent=11 // pred_check_branch
          %411 = sbr.rel (%p409) target = $region52
        $region51: #{tpu_custom_call.1} parent=11 // pred_region
          _
        $region52: #{tpu_custom_call.1} parent=11 // pred_fallthru
          _
      $region12: #{tpu_custom_call.1} parent=5 // pred_fallthru
        _
      %p412 = scmp.lt.s32.totalorder %s27, 2
      // Predicated region
      $region53: #{tpu_custom_call.1} parent=5 // pred_check
        %p413 = pneg %p412
      $region54: #{tpu_custom_call.1} parent=5 // pred_check_branch
        %415 = sbr.rel (%p413) target = $region56
      $region55: #{tpu_custom_call.1} parent=5 // pred_region
        // Predicated region
        $region57: #{tpu_custom_call.1} parent=55 // pred_check
          %p416 = pneg %p47
        $region58: #{tpu_custom_call.1} parent=55 // pred_check_branch
          %418 = sbr.rel (%p416) target = $region60
        $region59: #{tpu_custom_call.1} parent=55 // pred_region
          %p419 = scmp.lt.s32.totalorder %s27, 1
          %s420 = scalar_select %p419, %s27, 1
          %s421 = smul.addr %s420, 7
          %s422 = smul.addr %s421, 4
          %s423 = scalar_lea.vmem %s0, %s422
        $region60: #{tpu_custom_call.1} parent=55 // pred_fallthru
          _
        // Predicated region
        $region61: #{tpu_custom_call.1} parent=55 // pred_check
          %p424 = pneg %p283
        $region62: #{tpu_custom_call.1} parent=55 // pred_check_branch
          %426 = sbr.rel (%p424) target = $region64
        $region63: #{tpu_custom_call.1} parent=55 // pred_region
          %p427 = scmp.lt.s32.totalorder %s27, 1
          %s428 = scalar_select %p427, %s27, 1
          %s429 = smul.addr %s428, 8
          %s430 = scalar_lea.vmem %s11, %s429
        $region64: #{tpu_custom_call.1} parent=55 // pred_fallthru
          _
      $region56: #{tpu_custom_call.1} parent=5 // pred_fallthru
        _
      %p431 = scmp.le.s32.totalorder 1, %s27
      %p432 = scmp.lt.s32.totalorder %s27, 3
      %p433 = pnand %p431, %p432
      %p434 = pneg %p433
      // Predicated region
      $region65: #{tpu_custom_call.1} parent=5 // pred_check
        _
      $region66: #{tpu_custom_call.1} parent=5 // pred_check_branch
        %436 = sbr.rel (%p433) target = $region68
      $region67: #{tpu_custom_call.1} parent=5 // pred_region
        %s437 = ssub.s32 %s27, 1
        %p438 = scmp.lt.s32.totalorder %s32, 1
        %s439 = scalar_select %p438, %s32, 1
        %s440 = smul.addr %s439, 7
        %s441 = smul.addr %s440, 4
        %s442 = scalar_lea.vmem %s0, %s441
        %p443 = pneg %p53
        %p444 = pneg %p50
        %p445 = pneg %p74
        %p446 = pneg %p71
        %p447 = pneg %p95
        %p448 = pneg %p92
        %p449 = pneg %p116
        %p450 = pneg %p113
        %p451 = pneg %p137
        %p452 = pneg %p134
        %p453 = pneg %p158
        %p454 = pneg %p155
        %p455 = pneg %p179
        %p456 = pneg %p176
        %p457 = pneg %p200
        %p458 = pneg %p197
        %p459 = pneg %p221
        %p460 = pneg %p218
        %p461 = pneg %p242
        %p462 = pneg %p239
        %p463 = pneg %p263
        %p464 = pneg %p260
        %p465 = scmp.lt.s32.totalorder %s32, 1
        %s466 = scalar_select %p465, %s32, 1
        %s467 = smul.addr %s466, 8
        %s468 = scalar_lea.vmem %s11, %s467
        %p469 = pneg %p289
        %p470 = pneg %p286
        %p471 = pneg %p315
        %p472 = pneg %p312
        %s473 = sand.u32 %s302, 1
        %s474 = scalar_lea.sflag [#allocation3], %s473
        %s475 = sand.u32 %s302, 1
        %s476 = smul.addr %s475, 56
        %s477 = scalar_lea.vmem [#allocation2], %s476
        %p478 = pneg %p341
        %p479 = pneg %p338
        %s480 = sand.u32 %s32, 1
        %s481 = scalar_lea.sflag [#allocation5], %s480
        %s482 = sand.u32 %s328, 1
        %s483 = smul.addr %s482, 8
        %s484 = scalar_lea.vmem [#allocation4], %s483
        %p485 = pneg %p367
        %p486 = pneg %p364
        %s487 = sand.u32 %s32, 1
        %s488 = scalar_lea.sflag [#allocation5], %s487
        %s489 = sand.u32 %s354, 1
        %s490 = smul.addr %s489, 8
        %s491 = scalar_lea.vmem [#allocation6], %s490
        %p492 = scmp.lt.s32.totalorder %s32, 1
        %s493 = scalar_select %p492, %s32, 1
        %s494 = smul.addr %s493, 7
        %s495 = smul.addr %s494, 4
        %s496 = scalar_lea.vmem %s0, %s495
        %p497 = scmp.lt.s32.totalorder %s32, 1
        %s498 = scalar_select %p497, %s32, 1
        %s499 = smul.addr %s498, 8
        %s500 = scalar_lea.vmem %s11, %s499
        %v502 = vld [vmem:[%s496] sm:$0xff]
        %v503 = vld [vmem:[%s496 + $0x8] sm:$0xff]
        %v504 = vld [vmem:[%s496 + $0x10] sm:$0xff]
        %v505 = vld [vmem:[%s496 + $0x18] sm:$0xf]
        %v506 = vld [vmem:[%s1] sm:$0xff]
        %v507 = vld [vmem:[%s1 + $0x8] sm:$0xff]
        %v508 = vld [vmem:[%s1 + $0x10] sm:$0xff]
        %v509 = vld [vmem:[%s1 + $0x18] sm:$0xff]
        %v510 = vld [vmem:[%s1 + $0x20] sm:$0xff]
        %v511 = vld [vmem:[%s1 + $0x28] sm:$0xff]
        %v512 = vld [vmem:[%s1 + $0x30] sm:$0xff]
        %v513 = vld [vmem:[%s1 + $0x38] sm:$0xff]
        %v514 = vld [vmem:[%s1 + $0x40] sm:$0xff]
        %v515 = vld [vmem:[%s1 + $0x48] sm:$0xff]
        %v516 = vld [vmem:[%s1 + $0x50] sm:$0xff]
        %v517 = vld [vmem:[%s1 + $0x58] sm:$0xff]
        %v518 = vld [vmem:[%s1 + $0x60] sm:$0xff]
        %v519 = vld [vmem:[%s1 + $0x68] sm:$0xff]
        %v520 = vld [vmem:[%s1 + $0x70] sm:$0xff]
        %v521 = vld [vmem:[%s1 + $0x78] sm:$0xff]
        %v522 = vld [vmem:[%s1 + $0x80] sm:$0xff]
        %v523 = vld [vmem:[%s1 + $0x88] sm:$0xff]
        %v524 = vld [vmem:[%s1 + $0x90] sm:$0xff]
        %v525 = vld [vmem:[%s1 + $0x98] sm:$0xff]
        %v526 = vld [vmem:[%s1 + $0xa0] sm:$0xff]
        %v527 = vld [vmem:[%s1 + $0xa8] sm:$0xff]
        %v528 = vld [vmem:[%s1 + $0xb0] sm:$0xff]
        %v529 = vld [vmem:[%s1 + $0xb8] sm:$0xff]
        %v530 = vld [vmem:[%s1 + $0xc0] sm:$0xff]
        %v531 = vld [vmem:[%s1 + $0xc8] sm:$0xff]
        %v532 = vld [vmem:[%s1 + $0xd0] sm:$0xff]
        %v533 = vld [vmem:[%s1 + $0xd8] sm:$0xff]
        %v534 = vld [vmem:[%s1 + $0xe0] sm:$0xff]
        %v535 = vld [vmem:[%s1 + $0xe8] sm:$0xff]
        %v536 = vld [vmem:[%s1 + $0xf0] sm:$0xff]
        %v537 = vld [vmem:[%s1 + $0xf8] sm:$0xff]
        %v538 = vld [vmem:[%s1 + $0x100] sm:$0xff]
        %v539 = vld [vmem:[%s1 + $0x108] sm:$0xff]
        %v540 = vld [vmem:[%s1 + $0x110] sm:$0xff]
        %v541 = vld [vmem:[%s1 + $0x118] sm:$0xff]
        %v542 = vld [vmem:[%s1 + $0x120] sm:$0xff]
        %v543 = vld [vmem:[%s1 + $0x128] sm:$0xff]
        %v544 = vld [vmem:[%s1 + $0x130] sm:$0xff]
        %v545 = vld [vmem:[%s1 + $0x138] sm:$0xff]
        %v546 = vld [vmem:[%s1 + $0x140] sm:$0xff]
        %v547 = vld [vmem:[%s1 + $0x148] sm:$0xff]
        %v548 = vld [vmem:[%s1 + $0x150] sm:$0xff]
        %v549 = vld [vmem:[%s1 + $0x158] sm:$0xff]
        %v550 = vld [vmem:[%s1 + $0x160] sm:$0xff]
        %v551 = vld [vmem:[%s1 + $0x168] sm:$0xff]
        %v552 = vld [vmem:[%s1 + $0x170] sm:$0xff]
        %v553 = vld [vmem:[%s1 + $0x178] sm:$0xff]
        %v554 = vld [vmem:[%s1 + $0x180] sm:$0xff]
        %v555 = vld [vmem:[%s1 + $0x188] sm:$0xff]
        %v556 = vld [vmem:[%s1 + $0x190] sm:$0xff]
        %v557 = vld [vmem:[%s1 + $0x198] sm:$0xff]
        %v558 = vld [vmem:[%s1 + $0x1a0] sm:$0xff]
        %v559 = vld [vmem:[%s1 + $0x1a8] sm:$0xff]
        %v560 = vld [vmem:[%s1 + $0x1b0] sm:$0xff]
        %v561 = vld [vmem:[%s1 + $0x1b8] sm:$0xff]
        %v562 = vld [vmem:[%s1 + $0x1c0] sm:$0xff]
        %v563 = vld [vmem:[%s1 + $0x1c8] sm:$0xff]
        %v564 = vld [vmem:[%s1 + $0x1d0] sm:$0xff]
        %v565 = vld [vmem:[%s1 + $0x1d8] sm:$0xff]
        %v566 = vld [vmem:[%s1 + $0x1e0] sm:$0xff]
        %v567 = vld [vmem:[%s1 + $0x1e8] sm:$0xff]
        %v568 = vld [vmem:[%s1 + $0x1f0] sm:$0xff]
        %v569 = vld [vmem:[%s1 + $0x1f8] sm:$0xff]
        %v570 = vld [vmem:[%s1 + $0x200] sm:$0xff]
        %v571 = vld [vmem:[%s1 + $0x208] sm:$0xff]
        %v572 = vld [vmem:[%s1 + $0x210] sm:$0xff]
        %v573 = vld [vmem:[%s1 + $0x218] sm:$0xff]
        %v574 = vld [vmem:[%s1 + $0x220] sm:$0xff]
        %v575 = vld [vmem:[%s1 + $0x228] sm:$0xff]
        %v576 = vld [vmem:[%s1 + $0x230] sm:$0xff]
        %v577 = vld [vmem:[%s1 + $0x238] sm:$0xff]
        %v578 = vld [vmem:[%s1 + $0x240] sm:$0xff]
        %v579 = vld [vmem:[%s1 + $0x248] sm:$0xff]
        %v580 = vld [vmem:[%s1 + $0x250] sm:$0xff]
        %v581 = vld [vmem:[%s1 + $0x258] sm:$0xff]
        %v582 = vld [vmem:[%s1 + $0x260] sm:$0xff]
        %v583 = vld [vmem:[%s1 + $0x268] sm:$0xff]
        %v584 = vld [vmem:[%s1 + $0x270] sm:$0xff]
        %v585 = vld [vmem:[%s1 + $0x278] sm:$0xff]
        %v586 = vld [vmem:[%s1 + $0x280] sm:$0xff]
        %v587 = vld [vmem:[%s1 + $0x288] sm:$0xff]
        %v588 = vld [vmem:[%s1 + $0x290] sm:$0xff]
        %v589 = vld [vmem:[%s1 + $0x298] sm:$0xff]
        %v590 = vld [vmem:[%s1 + $0x2a0] sm:$0xff]
        %v591 = vld [vmem:[%s1 + $0x2a8] sm:$0xff]
        %v592 = vld [vmem:[%s1 + $0x2b0] sm:$0xff]
        %v593 = vld [vmem:[%s1 + $0x2b8] sm:$0xff]
        %v594 = vld [vmem:[%s1 + $0x2c0] sm:$0xff]
        %v595 = vld [vmem:[%s1 + $0x2c8] sm:$0xff]
        %v596 = vld [vmem:[%s1 + $0x2d0] sm:$0xff]
        %v597 = vld [vmem:[%s1 + $0x2d8] sm:$0xff]
        %v598 = vld [vmem:[%s1 + $0x2e0] sm:$0xff]
        %v599 = vld [vmem:[%s1 + $0x2e8] sm:$0xff]
        %v600 = vld [vmem:[%s1 + $0x2f0] sm:$0xff]
        %v601 = vld [vmem:[%s1 + $0x2f8] sm:$0xff]
        %v602 = vld [vmem:[%s1 + $0x300] sm:$0xff]
        %v603 = vld [vmem:[%s1 + $0x308] sm:$0xff]
        %v604 = vld [vmem:[%s1 + $0x310] sm:$0xff]
        %v605 = vld [vmem:[%s1 + $0x318] sm:$0xff]
        %v606 = vld [vmem:[%s1 + $0x320] sm:$0xff]
        %v607 = vld [vmem:[%s1 + $0x328] sm:$0xff]
        %v608 = vld [vmem:[%s1 + $0x330] sm:$0xff]
        %v609 = vld [vmem:[%s1 + $0x338] sm:$0xff]
        %v610 = vld [vmem:[%s1 + $0x340] sm:$0xff]
        %v611 = vld [vmem:[%s1 + $0x348] sm:$0xff]
        %v612 = vld [vmem:[%s1 + $0x350] sm:$0xff]
        %v613 = vld [vmem:[%s1 + $0x358] sm:$0xff]
        %v614 = vld [vmem:[%s1 + $0x360] sm:$0xff]
        %v615 = vld [vmem:[%s1 + $0x368] sm:$0xff]
        %v616 = vld [vmem:[%s1 + $0x370] sm:$0xff]
        %v617 = vld [vmem:[%s1 + $0x378] sm:$0xff]
        %v618 = vld [vmem:[%s1 + $0x380] sm:$0xff]
        %v619 = vld [vmem:[%s1 + $0x388] sm:$0xff]
        %v620 = vld [vmem:[%s1 + $0x390] sm:$0xff]
        %v621 = vld [vmem:[%s1 + $0x398] sm:$0xff]
        %v622 = vld [vmem:[%s1 + $0x3a0] sm:$0xff]
        %v623 = vld [vmem:[%s1 + $0x3a8] sm:$0xff]
        %v624 = vld [vmem:[%s1 + $0x3b0] sm:$0xff]
        %v625 = vld [vmem:[%s1 + $0x3b8] sm:$0xff]
        %v626 = vld [vmem:[%s1 + $0x3c0] sm:$0xff]
        %v627 = vld [vmem:[%s1 + $0x3c8] sm:$0xff]
        %v628 = vld [vmem:[%s1 + $0x3d0] sm:$0xff]
        %v629 = vld [vmem:[%s1 + $0x3d8] sm:$0xff]
        %v630 = vld [vmem:[%s1 + $0x3e0] sm:$0xff]
        %v631 = vld [vmem:[%s1 + $0x3e8] sm:$0xff]
        %v632 = vld [vmem:[%s1 + $0x3f0] sm:$0xff]
        %v633 = vld [vmem:[%s1 + $0x3f8] sm:$0xff]
        %v634 = vld [vmem:[%s1 + $0x400] sm:$0xff]
        %v635 = vld [vmem:[%s1 + $0x408] sm:$0xff]
        %v636 = vld [vmem:[%s1 + $0x410] sm:$0xff]
        %v637 = vld [vmem:[%s1 + $0x418] sm:$0xff]
        %v638 = vld [vmem:[%s1 + $0x420] sm:$0xff]
        %v639 = vld [vmem:[%s1 + $0x428] sm:$0xff]
        %v640 = vld [vmem:[%s1 + $0x430] sm:$0xff]
        %v641 = vld [vmem:[%s1 + $0x438] sm:$0xff]
        %v642 = vld [vmem:[%s1 + $0x440] sm:$0xff]
        %v643 = vld [vmem:[%s1 + $0x448] sm:$0xff]
        %v644 = vld [vmem:[%s1 + $0x450] sm:$0xff]
        %v645 = vld [vmem:[%s1 + $0x458] sm:$0xff]
        %v646 = vld [vmem:[%s1 + $0x460] sm:$0xff]
        %v647 = vld [vmem:[%s1 + $0x468] sm:$0xff]
        %v648 = vld [vmem:[%s1 + $0x470] sm:$0xff]
        %v649 = vld [vmem:[%s1 + $0x478] sm:$0xff]
        %v650 = vld [vmem:[%s1 + $0x480] sm:$0xff]
        %v651 = vld [vmem:[%s1 + $0x488] sm:$0xff]
        %v652 = vld [vmem:[%s1 + $0x490] sm:$0xff]
        %v653 = vld [vmem:[%s1 + $0x498] sm:$0xff]
        %v654 = vld [vmem:[%s1 + $0x4a0] sm:$0xff]
        %v655 = vld [vmem:[%s1 + $0x4a8] sm:$0xff]
        %v656 = vld [vmem:[%s1 + $0x4b0] sm:$0xff]
        %v657 = vld [vmem:[%s1 + $0x4b8] sm:$0xff]
        %v658 = vld [vmem:[%s1 + $0x4c0] sm:$0xff]
        %v659 = vld [vmem:[%s1 + $0x4c8] sm:$0xff]
        %v660 = vld [vmem:[%s1 + $0x4d0] sm:$0xff]
        %v661 = vld [vmem:[%s1 + $0x4d8] sm:$0xff]
        %v662 = vld [vmem:[%s1 + $0x4e0] sm:$0xff]
        %v663 = vld [vmem:[%s1 + $0x4e8] sm:$0xff]
        %v664 = vld [vmem:[%s1 + $0x4f0] sm:$0xff]
        %v665 = vld [vmem:[%s1 + $0x4f8] sm:$0xff]
        %v666 = vld [vmem:[%s1 + $0x500] sm:$0xff]
        %v667 = vld [vmem:[%s1 + $0x508] sm:$0xff]
        %v668 = vld [vmem:[%s1 + $0x510] sm:$0xff]
        %v669 = vld [vmem:[%s1 + $0x518] sm:$0xff]
        %v670 = vld [vmem:[%s1 + $0x520] sm:$0xff]
        %v671 = vld [vmem:[%s1 + $0x528] sm:$0xff]
        %v672 = vld [vmem:[%s1 + $0x530] sm:$0xff]
        %v673 = vld [vmem:[%s1 + $0x538] sm:$0xff]
        %v674 = vld [vmem:[%s1 + $0x540] sm:$0xff]
        %v675 = vld [vmem:[%s1 + $0x548] sm:$0xff]
        %v676 = vld [vmem:[%s1 + $0x550] sm:$0xff]
        %v677 = vld [vmem:[%s1 + $0x558] sm:$0xff]
        %v678 = vld [vmem:[%s1 + $0x560] sm:$0xff]
        %v679 = vld [vmem:[%s1 + $0x568] sm:$0xff]
        %v680 = vld [vmem:[%s1 + $0x570] sm:$0xff]
        %v681 = vld [vmem:[%s1 + $0x578] sm:$0xff]
        %v682 = vld [vmem:[%s1 + $0x580] sm:$0xff]
        %v683 = vld [vmem:[%s1 + $0x588] sm:$0xff]
        %v684 = vld [vmem:[%s1 + $0x590] sm:$0xff]
        %v685 = vld [vmem:[%s1 + $0x598] sm:$0xff]
        %v686 = vld [vmem:[%s1 + $0x5a0] sm:$0xff]
        %v687 = vld [vmem:[%s1 + $0x5a8] sm:$0xff]
        %v688 = vld [vmem:[%s1 + $0x5b0] sm:$0xff]
        %v689 = vld [vmem:[%s1 + $0x5b8] sm:$0xff]
        %v690 = vld [vmem:[%s1 + $0x5c0] sm:$0xff]
        %v691 = vld [vmem:[%s1 + $0x5c8] sm:$0xff]
        %v692 = vld [vmem:[%s1 + $0x5d0] sm:$0xff]
        %v693 = vld [vmem:[%s1 + $0x5d8] sm:$0xff]
        %v694 = vld [vmem:[%s1 + $0x5e0] sm:$0xff]
        %v695 = vld [vmem:[%s1 + $0x5e8] sm:$0xff]
        %v696 = vld [vmem:[%s1 + $0x5f0] sm:$0xff]
        %v697 = vld [vmem:[%s1 + $0x5f8] sm:$0xff]
        %v698 = vld [vmem:[%s1 + $0x600] sm:$0xff]
        %v699 = vld [vmem:[%s1 + $0x608] sm:$0xff]
        %v700 = vld [vmem:[%s1 + $0x610] sm:$0xff]
        %v701 = vld [vmem:[%s1 + $0x618] sm:$0xff]
        %v702 = vld [vmem:[%s2] sm:$0xf]
        %v704 = vlaneseq
        %v705 = vshrl.u32 %v704, 7
        %v706 = vsub.s32 0, %v705
        %v707 = vrot.slane %v702, %v706
        %v708 = vlaneseq
        %v709 = vshrl.u32 %v708, 7
        %v710 = vsub.s32 1, %v709
        %v711 = vrot.slane %v702, %v710
        %v712 = vlaneseq
        %v713 = vshrl.u32 %v712, 7
        %v714 = vsub.s32 2, %v713
        %v715 = vrot.slane %v702, %v714
        %v716 = vlaneseq
        %v717 = vshrl.u32 %v716, 7
        %v718 = vsub.s32 3, %v717
        %v719 = vrot.slane %v702, %v718
        %v728 = vunpack.c.l.b16 %v502
        %v729 = vunpack.c.h.b16 %v502
        %v730 = vunpack.c.l.b16 %v503
        %v731 = vunpack.c.h.b16 %v503
        %v732 = vunpack.c.l.b16 %v504
        %v733 = vunpack.c.h.b16 %v504
        %v734 = vunpack.c.l.b16 %v505
        %v735 = vpack.c.b16 %v728, %v728
        %v736 = vpack.c.b16 %v729, %v729
        %v737 = vpack.c.b16 %v730, %v730
        %v738 = vpack.c.b16 %v731, %v731
        %v739 = vpack.c.b16 %v732, %v732
        %v740 = vpack.c.b16 %v733, %v733
        %v741 = vpack.c.b16 %v734, %v734
        %v944 = vunpack.c.l.b16 %v506
        %v945 = vunpack.c.h.b16 %v506
        %v946 = vunpack.c.l.b16 %v507
        %v947 = vunpack.c.h.b16 %v507
        %v948 = vunpack.c.l.b16 %v508
        %v949 = vunpack.c.h.b16 %v508
        %v950 = vunpack.c.l.b16 %v509
        %v951 = vunpack.c.h.b16 %v509
        %v952 = vunpack.c.l.b16 %v510
        %v953 = vunpack.c.h.b16 %v510
        %v954 = vunpack.c.l.b16 %v511
        %v955 = vunpack.c.h.b16 %v511
        %v956 = vunpack.c.l.b16 %v512
        %v957 = vunpack.c.h.b16 %v512
        %v958 = vunpack.c.l.b16 %v513
        %v959 = vunpack.c.h.b16 %v513
        %v960 = vunpack.c.l.b16 %v514
        %v961 = vunpack.c.h.b16 %v514
        %v962 = vunpack.c.l.b16 %v515
        %v963 = vunpack.c.h.b16 %v515
        %v964 = vunpack.c.l.b16 %v516
        %v965 = vunpack.c.h.b16 %v516
        %v966 = vunpack.c.l.b16 %v517
        %v967 = vunpack.c.h.b16 %v517
        %v968 = vunpack.c.l.b16 %v518
        %v969 = vunpack.c.h.b16 %v518
        %v970 = vunpack.c.l.b16 %v519
        %v971 = vunpack.c.h.b16 %v519
        %v972 = vunpack.c.l.b16 %v520
        %v973 = vunpack.c.h.b16 %v520
        %v974 = vunpack.c.l.b16 %v521
        %v975 = vunpack.c.h.b16 %v521
        %v976 = vunpack.c.l.b16 %v522
        %v977 = vunpack.c.h.b16 %v522
        %v978 = vunpack.c.l.b16 %v523
        %v979 = vunpack.c.h.b16 %v523
        %v980 = vunpack.c.l.b16 %v524
        %v981 = vunpack.c.h.b16 %v524
        %v982 = vunpack.c.l.b16 %v525
        %v983 = vunpack.c.h.b16 %v525
        %v984 = vunpack.c.l.b16 %v526
        %v985 = vunpack.c.h.b16 %v526
        %v986 = vunpack.c.l.b16 %v527
        %v987 = vunpack.c.h.b16 %v527
        %v988 = vunpack.c.l.b16 %v528
        %v989 = vunpack.c.h.b16 %v528
        %v990 = vunpack.c.l.b16 %v529
        %v991 = vunpack.c.h.b16 %v529
        %v992 = vunpack.c.l.b16 %v530
        %v993 = vunpack.c.h.b16 %v530
        %v994 = vunpack.c.l.b16 %v531
        %v995 = vunpack.c.h.b16 %v531
        %v996 = vunpack.c.l.b16 %v532
        %v997 = vunpack.c.h.b16 %v532
        %v998 = vunpack.c.l.b16 %v533
        %v999 = vunpack.c.h.b16 %v533
        %v1000 = vunpack.c.l.b16 %v534
        %v1001 = vunpack.c.h.b16 %v534
        %v1002 = vunpack.c.l.b16 %v535
        %v1003 = vunpack.c.h.b16 %v535
        %v1004 = vunpack.c.l.b16 %v536
        %v1005 = vunpack.c.h.b16 %v536
        %v1006 = vunpack.c.l.b16 %v537
        %v1007 = vunpack.c.h.b16 %v537
        %v1008 = vunpack.c.l.b16 %v538
        %v1009 = vunpack.c.h.b16 %v538
        %v1010 = vunpack.c.l.b16 %v539
        %v1011 = vunpack.c.h.b16 %v539
        %v1012 = vunpack.c.l.b16 %v540
        %v1013 = vunpack.c.h.b16 %v540
        %v1014 = vunpack.c.l.b16 %v541
        %v1015 = vunpack.c.h.b16 %v541
        %v1016 = vunpack.c.l.b16 %v542
        %v1017 = vunpack.c.h.b16 %v542
        %v1018 = vunpack.c.l.b16 %v543
        %v1019 = vunpack.c.h.b16 %v543
        %v1020 = vunpack.c.l.b16 %v544
        %v1021 = vunpack.c.h.b16 %v544
        %v1022 = vunpack.c.l.b16 %v545
        %v1023 = vunpack.c.h.b16 %v545
        %v1024 = vunpack.c.l.b16 %v546
        %v1025 = vunpack.c.h.b16 %v546
        %v1026 = vunpack.c.l.b16 %v547
        %v1027 = vunpack.c.h.b16 %v547
        %v1028 = vunpack.c.l.b16 %v548
        %v1029 = vunpack.c.h.b16 %v548
        %v1030 = vunpack.c.l.b16 %v549
        %v1031 = vunpack.c.h.b16 %v549
        %v1032 = vunpack.c.l.b16 %v550
        %v1033 = vunpack.c.h.b16 %v550
        %v1034 = vunpack.c.l.b16 %v551
        %v1035 = vunpack.c.h.b16 %v551
        %v1036 = vunpack.c.l.b16 %v552
        %v1037 = vunpack.c.h.b16 %v552
        %v1038 = vunpack.c.l.b16 %v553
        %v1039 = vunpack.c.h.b16 %v553
        %v1040 = vunpack.c.l.b16 %v554
        %v1041 = vunpack.c.h.b16 %v554
        %v1042 = vunpack.c.l.b16 %v555
        %v1043 = vunpack.c.h.b16 %v555
        %v1044 = vunpack.c.l.b16 %v556
        %v1045 = vunpack.c.h.b16 %v556
        %v1046 = vunpack.c.l.b16 %v557
        %v1047 = vunpack.c.h.b16 %v557
        %v1048 = vunpack.c.l.b16 %v558
        %v1049 = vunpack.c.h.b16 %v558
        %v1050 = vunpack.c.l.b16 %v559
        %v1051 = vunpack.c.h.b16 %v559
        %v1052 = vunpack.c.l.b16 %v560
        %v1053 = vunpack.c.h.b16 %v560
        %v1054 = vunpack.c.l.b16 %v561
        %v1055 = vunpack.c.h.b16 %v561
        %v1056 = vunpack.c.l.b16 %v562
        %v1057 = vunpack.c.h.b16 %v562
        %v1058 = vunpack.c.l.b16 %v563
        %v1059 = vunpack.c.h.b16 %v563
        %v1060 = vunpack.c.l.b16 %v564
        %v1061 = vunpack.c.h.b16 %v564
        %v1062 = vunpack.c.l.b16 %v565
        %v1063 = vunpack.c.h.b16 %v565
        %v1064 = vunpack.c.l.b16 %v566
        %v1065 = vunpack.c.h.b16 %v566
        %v1066 = vunpack.c.l.b16 %v567
        %v1067 = vunpack.c.h.b16 %v567
        %v1068 = vunpack.c.l.b16 %v568
        %v1069 = vunpack.c.h.b16 %v568
        %v1070 = vunpack.c.l.b16 %v569
        %v1071 = vunpack.c.h.b16 %v569
        %v1072 = vunpack.c.l.b16 %v570
        %v1073 = vunpack.c.h.b16 %v570
        %v1074 = vunpack.c.l.b16 %v571
        %v1075 = vunpack.c.h.b16 %v571
        %v1076 = vunpack.c.l.b16 %v572
        %v1077 = vunpack.c.h.b16 %v572
        %v1078 = vunpack.c.l.b16 %v573
        %v1079 = vunpack.c.h.b16 %v573
        %v1080 = vunpack.c.l.b16 %v574
        %v1081 = vunpack.c.h.b16 %v574
        %v1082 = vunpack.c.l.b16 %v575
        %v1083 = vunpack.c.h.b16 %v575
        %v1084 = vunpack.c.l.b16 %v576
        %v1085 = vunpack.c.h.b16 %v576
        %v1086 = vunpack.c.l.b16 %v577
        %v1087 = vunpack.c.h.b16 %v577
        %v1088 = vunpack.c.l.b16 %v578
        %v1089 = vunpack.c.h.b16 %v578
        %v1090 = vunpack.c.l.b16 %v579
        %v1091 = vunpack.c.h.b16 %v579
        %v1092 = vunpack.c.l.b16 %v580
        %v1093 = vunpack.c.h.b16 %v580
        %v1094 = vunpack.c.l.b16 %v581
        %v1095 = vunpack.c.h.b16 %v581
        %v1096 = vunpack.c.l.b16 %v582
        %v1097 = vunpack.c.h.b16 %v582
        %v1098 = vunpack.c.l.b16 %v583
        %v1099 = vunpack.c.h.b16 %v583
        %v1100 = vunpack.c.l.b16 %v584
        %v1101 = vunpack.c.h.b16 %v584
        %v1102 = vunpack.c.l.b16 %v585
        %v1103 = vunpack.c.h.b16 %v585
        %v1104 = vunpack.c.l.b16 %v586
        %v1105 = vunpack.c.h.b16 %v586
        %v1106 = vunpack.c.l.b16 %v587
        %v1107 = vunpack.c.h.b16 %v587
        %v1108 = vunpack.c.l.b16 %v588
        %v1109 = vunpack.c.h.b16 %v588
        %v1110 = vunpack.c.l.b16 %v589
        %v1111 = vunpack.c.h.b16 %v589
        %v1112 = vunpack.c.l.b16 %v590
        %v1113 = vunpack.c.h.b16 %v590
        %v1114 = vunpack.c.l.b16 %v591
        %v1115 = vunpack.c.h.b16 %v591
        %v1116 = vunpack.c.l.b16 %v592
        %v1117 = vunpack.c.h.b16 %v592
        %v1118 = vunpack.c.l.b16 %v593
        %v1119 = vunpack.c.h.b16 %v593
        %v1120 = vunpack.c.l.b16 %v594
        %v1121 = vunpack.c.h.b16 %v594
        %v1122 = vunpack.c.l.b16 %v595
        %v1123 = vunpack.c.h.b16 %v595
        %v1124 = vunpack.c.l.b16 %v596
        %v1125 = vunpack.c.h.b16 %v596
        %v1126 = vunpack.c.l.b16 %v597
        %v1127 = vunpack.c.h.b16 %v597
        %v1128 = vunpack.c.l.b16 %v598
        %v1129 = vunpack.c.h.b16 %v598
        %v1130 = vunpack.c.l.b16 %v599
        %v1131 = vunpack.c.h.b16 %v599
        %v1132 = vunpack.c.l.b16 %v600
        %v1133 = vunpack.c.h.b16 %v600
        %v1134 = vunpack.c.l.b16 %v601
        %v1135 = vunpack.c.h.b16 %v601
        %v1136 = vunpack.c.l.b16 %v602
        %v1137 = vunpack.c.h.b16 %v602
        %v1138 = vunpack.c.l.b16 %v603
        %v1139 = vunpack.c.h.b16 %v603
        %v1140 = vunpack.c.l.b16 %v604
        %v1141 = vunpack.c.h.b16 %v604
        %v1142 = vunpack.c.l.b16 %v605
        %v1143 = vunpack.c.h.b16 %v605
        %v1144 = vunpack.c.l.b16 %v606
        %v1145 = vunpack.c.h.b16 %v606
        %v1146 = vunpack.c.l.b16 %v607
        %v1147 = vunpack.c.h.b16 %v607
        %v1148 = vunpack.c.l.b16 %v608
        %v1149 = vunpack.c.h.b16 %v608
        %v1150 = vunpack.c.l.b16 %v609
        %v1151 = vunpack.c.h.b16 %v609
        %v1152 = vunpack.c.l.b16 %v610
        %v1153 = vunpack.c.h.b16 %v610
        %v1154 = vunpack.c.l.b16 %v611
        %v1155 = vunpack.c.h.b16 %v611
        %v1156 = vunpack.c.l.b16 %v612
        %v1157 = vunpack.c.h.b16 %v612
        %v1158 = vunpack.c.l.b16 %v613
        %v1159 = vunpack.c.h.b16 %v613
        %v1160 = vunpack.c.l.b16 %v614
        %v1161 = vunpack.c.h.b16 %v614
        %v1162 = vunpack.c.l.b16 %v615
        %v1163 = vunpack.c.h.b16 %v615
        %v1164 = vunpack.c.l.b16 %v616
        %v1165 = vunpack.c.h.b16 %v616
        %v1166 = vunpack.c.l.b16 %v617
        %v1167 = vunpack.c.h.b16 %v617
        %v1168 = vunpack.c.l.b16 %v618
        %v1169 = vunpack.c.h.b16 %v618
        %v1170 = vunpack.c.l.b16 %v619
        %v1171 = vunpack.c.h.b16 %v619
        %v1172 = vunpack.c.l.b16 %v620
        %v1173 = vunpack.c.h.b16 %v620
        %v1174 = vunpack.c.l.b16 %v621
        %v1175 = vunpack.c.h.b16 %v621
        %v1176 = vunpack.c.l.b16 %v622
        %v1177 = vunpack.c.h.b16 %v622
        %v1178 = vunpack.c.l.b16 %v623
        %v1179 = vunpack.c.h.b16 %v623
        %v1180 = vunpack.c.l.b16 %v624
        %v1181 = vunpack.c.h.b16 %v624
        %v1182 = vunpack.c.l.b16 %v625
        %v1183 = vunpack.c.h.b16 %v625
        %v1184 = vunpack.c.l.b16 %v626
        %v1185 = vunpack.c.h.b16 %v626
        %v1186 = vunpack.c.l.b16 %v627
        %v1187 = vunpack.c.h.b16 %v627
        %v1188 = vunpack.c.l.b16 %v628
        %v1189 = vunpack.c.h.b16 %v628
        %v1190 = vunpack.c.l.b16 %v629
        %v1191 = vunpack.c.h.b16 %v629
        %v1192 = vunpack.c.l.b16 %v630
        %v1193 = vunpack.c.h.b16 %v630
        %v1194 = vunpack.c.l.b16 %v631
        %v1195 = vunpack.c.h.b16 %v631
        %v1196 = vunpack.c.l.b16 %v632
        %v1197 = vunpack.c.h.b16 %v632
        %v1198 = vunpack.c.l.b16 %v633
        %v1199 = vunpack.c.h.b16 %v633
        %v1200 = vunpack.c.l.b16 %v634
        %v1201 = vunpack.c.h.b16 %v634
        %v1202 = vunpack.c.l.b16 %v635
        %v1203 = vunpack.c.h.b16 %v635
        %v1204 = vunpack.c.l.b16 %v636
        %v1205 = vunpack.c.h.b16 %v636
        %v1206 = vunpack.c.l.b16 %v637
        %v1207 = vunpack.c.h.b16 %v637
        %v1208 = vunpack.c.l.b16 %v638
        %v1209 = vunpack.c.h.b16 %v638
        %v1210 = vunpack.c.l.b16 %v639
        %v1211 = vunpack.c.h.b16 %v639
        %v1212 = vunpack.c.l.b16 %v640
        %v1213 = vunpack.c.h.b16 %v640
        %v1214 = vunpack.c.l.b16 %v641
        %v1215 = vunpack.c.h.b16 %v641
        %v1216 = vunpack.c.l.b16 %v642
        %v1217 = vunpack.c.h.b16 %v642
        %v1218 = vunpack.c.l.b16 %v643
        %v1219 = vunpack.c.h.b16 %v643
        %v1220 = vunpack.c.l.b16 %v644
        %v1221 = vunpack.c.h.b16 %v644
        %v1222 = vunpack.c.l.b16 %v645
        %v1223 = vunpack.c.h.b16 %v645
        %v1224 = vunpack.c.l.b16 %v646
        %v1225 = vunpack.c.h.b16 %v646
        %v1226 = vunpack.c.l.b16 %v647
        %v1227 = vunpack.c.h.b16 %v647
        %v1228 = vunpack.c.l.b16 %v648
        %v1229 = vunpack.c.h.b16 %v648
        %v1230 = vunpack.c.l.b16 %v649
        %v1231 = vunpack.c.h.b16 %v649
        %v1232 = vunpack.c.l.b16 %v650
        %v1233 = vunpack.c.h.b16 %v650
        %v1234 = vunpack.c.l.b16 %v651
        %v1235 = vunpack.c.h.b16 %v651
        %v1236 = vunpack.c.l.b16 %v652
        %v1237 = vunpack.c.h.b16 %v652
        %v1238 = vunpack.c.l.b16 %v653
        %v1239 = vunpack.c.h.b16 %v653
        %v1240 = vunpack.c.l.b16 %v654
        %v1241 = vunpack.c.h.b16 %v654
        %v1242 = vunpack.c.l.b16 %v655
        %v1243 = vunpack.c.h.b16 %v655
        %v1244 = vunpack.c.l.b16 %v656
        %v1245 = vunpack.c.h.b16 %v656
        %v1246 = vunpack.c.l.b16 %v657
        %v1247 = vunpack.c.h.b16 %v657
        %v1248 = vunpack.c.l.b16 %v658
        %v1249 = vunpack.c.h.b16 %v658
        %v1250 = vunpack.c.l.b16 %v659
        %v1251 = vunpack.c.h.b16 %v659
        %v1252 = vunpack.c.l.b16 %v660
        %v1253 = vunpack.c.h.b16 %v660
        %v1254 = vunpack.c.l.b16 %v661
        %v1255 = vunpack.c.h.b16 %v661
        %v1256 = vunpack.c.l.b16 %v662
        %v1257 = vunpack.c.h.b16 %v662
        %v1258 = vunpack.c.l.b16 %v663
        %v1259 = vunpack.c.h.b16 %v663
        %v1260 = vunpack.c.l.b16 %v664
        %v1261 = vunpack.c.h.b16 %v664
        %v1262 = vunpack.c.l.b16 %v665
        %v1263 = vunpack.c.h.b16 %v665
        %v1264 = vunpack.c.l.b16 %v666
        %v1265 = vunpack.c.h.b16 %v666
        %v1266 = vunpack.c.l.b16 %v667
        %v1267 = vunpack.c.h.b16 %v667
        %v1268 = vunpack.c.l.b16 %v668
        %v1269 = vunpack.c.h.b16 %v668
        %v1270 = vunpack.c.l.b16 %v669
        %v1271 = vunpack.c.h.b16 %v669
        %v1272 = vunpack.c.l.b16 %v670
        %v1273 = vunpack.c.h.b16 %v670
        %v1274 = vunpack.c.l.b16 %v671
        %v1275 = vunpack.c.h.b16 %v671
        %v1276 = vunpack.c.l.b16 %v672
        %v1277 = vunpack.c.h.b16 %v672
        %v1278 = vunpack.c.l.b16 %v673
        %v1279 = vunpack.c.h.b16 %v673
        %v1280 = vunpack.c.l.b16 %v674
        %v1281 = vunpack.c.h.b16 %v674
        %v1282 = vunpack.c.l.b16 %v675
        %v1283 = vunpack.c.h.b16 %v675
        %v1284 = vunpack.c.l.b16 %v676
        %v1285 = vunpack.c.h.b16 %v676
        %v1286 = vunpack.c.l.b16 %v677
        %v1287 = vunpack.c.h.b16 %v677
        %v1288 = vunpack.c.l.b16 %v678
        %v1289 = vunpack.c.h.b16 %v678
        %v1290 = vunpack.c.l.b16 %v679
        %v1291 = vunpack.c.h.b16 %v679
        %v1292 = vunpack.c.l.b16 %v680
        %v1293 = vunpack.c.h.b16 %v680
        %v1294 = vunpack.c.l.b16 %v681
        %v1295 = vunpack.c.h.b16 %v681
        %v1296 = vunpack.c.l.b16 %v682
        %v1297 = vunpack.c.h.b16 %v682
        %v1298 = vunpack.c.l.b16 %v683
        %v1299 = vunpack.c.h.b16 %v683
        %v1300 = vunpack.c.l.b16 %v684
        %v1301 = vunpack.c.h.b16 %v684
        %v1302 = vunpack.c.l.b16 %v685
        %v1303 = vunpack.c.h.b16 %v685
        %v1304 = vunpack.c.l.b16 %v686
        %v1305 = vunpack.c.h.b16 %v686
        %v1306 = vunpack.c.l.b16 %v687
        %v1307 = vunpack.c.h.b16 %v687
        %v1308 = vunpack.c.l.b16 %v688
        %v1309 = vunpack.c.h.b16 %v688
        %v1310 = vunpack.c.l.b16 %v689
        %v1311 = vunpack.c.h.b16 %v689
        %v1312 = vunpack.c.l.b16 %v690
        %v1313 = vunpack.c.h.b16 %v690
        %v1314 = vunpack.c.l.b16 %v691
        %v1315 = vunpack.c.h.b16 %v691
        %v1316 = vunpack.c.l.b16 %v692
        %v1317 = vunpack.c.h.b16 %v692
        %v1318 = vunpack.c.l.b16 %v693
        %v1319 = vunpack.c.h.b16 %v693
        %v1320 = vunpack.c.l.b16 %v694
        %v1321 = vunpack.c.h.b16 %v694
        %v1322 = vunpack.c.l.b16 %v695
        %v1323 = vunpack.c.h.b16 %v695
        %v1324 = vunpack.c.l.b16 %v696
        %v1325 = vunpack.c.h.b16 %v696
        %v1326 = vunpack.c.l.b16 %v697
        %v1327 = vunpack.c.h.b16 %v697
        %v1328 = vunpack.c.l.b16 %v698
        %v1329 = vunpack.c.h.b16 %v698
        %v1330 = vunpack.c.l.b16 %v699
        %v1331 = vunpack.c.h.b16 %v699
        %v1332 = vunpack.c.l.b16 %v700
        %v1333 = vunpack.c.h.b16 %v700
        %v1334 = vunpack.c.l.b16 %v701
        %v1335 = vunpack.c.h.b16 %v701
        %v1336 = vpack.c.b16 %v948, %v944
        %v1337 = vpack.c.b16 %v949, %v945
        %v1338 = vpack.c.b16 %v950, %v946
        %v1339 = vpack.c.b16 %v951, %v947
        %v1340 = vpack.c.b16 %v956, %v952
        %v1341 = vpack.c.b16 %v957, %v953
        %v1342 = vpack.c.b16 %v958, %v954
        %v1343 = vpack.c.b16 %v959, %v955
        %v1344 = vpack.c.b16 %v964, %v960
        %v1345 = vpack.c.b16 %v965, %v961
        %v1346 = vpack.c.b16 %v966, %v962
        %v1347 = vpack.c.b16 %v967, %v963
        %v1348 = vpack.c.b16 %v972, %v968
        %v1349 = vpack.c.b16 %v973, %v969
        %v1350 = vpack.c.b16 %v974, %v970
        %v1351 = vpack.c.b16 %v975, %v971
        %v1352 = vpack.c.b16 %v980, %v976
        %v1353 = vpack.c.b16 %v981, %v977
        %v1354 = vpack.c.b16 %v982, %v978
        %v1355 = vpack.c.b16 %v983, %v979
        %v1356 = vpack.c.b16 %v988, %v984
        %v1357 = vpack.c.b16 %v989, %v985
        %v1358 = vpack.c.b16 %v990, %v986
        %v1359 = vpack.c.b16 %v991, %v987
        %v1360 = vpack.c.b16 %v996, %v992
        %v1361 = vpack.c.b16 %v997, %v993
        %v1362 = vpack.c.b16 %v998, %v994
        %v1363 = vpack.c.b16 %v999, %v995
        %v1364 = vpack.c.b16 %v1004, %v1000
        %v1365 = vpack.c.b16 %v1005, %v1001
        %v1366 = vpack.c.b16 %v1006, %v1002
        %v1367 = vpack.c.b16 %v1007, %v1003
        %v1368 = vpack.c.b16 %v1012, %v1008
        %v1369 = vpack.c.b16 %v1013, %v1009
        %v1370 = vpack.c.b16 %v1014, %v1010
        %v1371 = vpack.c.b16 %v1015, %v1011
        %v1372 = vpack.c.b16 %v1020, %v1016
        %v1373 = vpack.c.b16 %v1021, %v1017
        %v1374 = vpack.c.b16 %v1022, %v1018
        %v1375 = vpack.c.b16 %v1023, %v1019
        %v1376 = vpack.c.b16 %v1028, %v1024
        %v1377 = vpack.c.b16 %v1029, %v1025
        %v1378 = vpack.c.b16 %v1030, %v1026
        %v1379 = vpack.c.b16 %v1031, %v1027
        %v1380 = vpack.c.b16 %v1036, %v1032
        %v1381 = vpack.c.b16 %v1037, %v1033
        %v1382 = vpack.c.b16 %v1038, %v1034
        %v1383 = vpack.c.b16 %v1039, %v1035
        %v1384 = vpack.c.b16 %v1044, %v1040
        %v1385 = vpack.c.b16 %v1045, %v1041
        %v1386 = vpack.c.b16 %v1046, %v1042
        %v1387 = vpack.c.b16 %v1047, %v1043
        %v1388 = vpack.c.b16 %v1052, %v1048
        %v1389 = vpack.c.b16 %v1053, %v1049
        %v1390 = vpack.c.b16 %v1054, %v1050
        %v1391 = vpack.c.b16 %v1055, %v1051
        %v1392 = vpack.c.b16 %v1060, %v1056
        %v1393 = vpack.c.b16 %v1061, %v1057
        %v1394 = vpack.c.b16 %v1062, %v1058
        %v1395 = vpack.c.b16 %v1063, %v1059
        %v1396 = vpack.c.b16 %v1068, %v1064
        %v1397 = vpack.c.b16 %v1069, %v1065
        %v1398 = vpack.c.b16 %v1070, %v1066
        %v1399 = vpack.c.b16 %v1071, %v1067
        %v1400 = vpack.c.b16 %v1076, %v1072
        %v1401 = vpack.c.b16 %v1077, %v1073
        %v1402 = vpack.c.b16 %v1078, %v1074
        %v1403 = vpack.c.b16 %v1079, %v1075
        %v1404 = vpack.c.b16 %v1084, %v1080
        %v1405 = vpack.c.b16 %v1085, %v1081
        %v1406 = vpack.c.b16 %v1086, %v1082
        %v1407 = vpack.c.b16 %v1087, %v1083
        %v1408 = vpack.c.b16 %v1092, %v1088
        %v1409 = vpack.c.b16 %v1093, %v1089
        %v1410 = vpack.c.b16 %v1094, %v1090
        %v1411 = vpack.c.b16 %v1095, %v1091
        %v1412 = vpack.c.b16 %v1100, %v1096
        %v1413 = vpack.c.b16 %v1101, %v1097
        %v1414 = vpack.c.b16 %v1102, %v1098
        %v1415 = vpack.c.b16 %v1103, %v1099
        %v1416 = vpack.c.b16 %v1108, %v1104
        %v1417 = vpack.c.b16 %v1109, %v1105
        %v1418 = vpack.c.b16 %v1110, %v1106
        %v1419 = vpack.c.b16 %v1111, %v1107
        %v1420 = vpack.c.b16 %v1116, %v1112
        %v1421 = vpack.c.b16 %v1117, %v1113
        %v1422 = vpack.c.b16 %v1118, %v1114
        %v1423 = vpack.c.b16 %v1119, %v1115
        %v1424 = vpack.c.b16 %v1124, %v1120
        %v1425 = vpack.c.b16 %v1125, %v1121
        %v1426 = vpack.c.b16 %v1126, %v1122
        %v1427 = vpack.c.b16 %v1127, %v1123
        %v1428 = vpack.c.b16 %v1132, %v1128
        %v1429 = vpack.c.b16 %v1133, %v1129
        %v1430 = vpack.c.b16 %v1134, %v1130
        %v1431 = vpack.c.b16 %v1135, %v1131
        %v1432 = vpack.c.b16 %v1140, %v1136
        %v1433 = vpack.c.b16 %v1141, %v1137
        %v1434 = vpack.c.b16 %v1142, %v1138
        %v1435 = vpack.c.b16 %v1143, %v1139
        %v1436 = vpack.c.b16 %v1148, %v1144
        %v1437 = vpack.c.b16 %v1149, %v1145
        %v1438 = vpack.c.b16 %v1150, %v1146
        %v1439 = vpack.c.b16 %v1151, %v1147
        %v1440 = vpack.c.b16 %v1156, %v1152
        %v1441 = vpack.c.b16 %v1157, %v1153
        %v1442 = vpack.c.b16 %v1158, %v1154
        %v1443 = vpack.c.b16 %v1159, %v1155
        %v1444 = vpack.c.b16 %v1164, %v1160
        %v1445 = vpack.c.b16 %v1165, %v1161
        %v1446 = vpack.c.b16 %v1166, %v1162
        %v1447 = vpack.c.b16 %v1167, %v1163
        %v1448 = vpack.c.b16 %v1172, %v1168
        %v1449 = vpack.c.b16 %v1173, %v1169
        %v1450 = vpack.c.b16 %v1174, %v1170
        %v1451 = vpack.c.b16 %v1175, %v1171
        %v1452 = vpack.c.b16 %v1180, %v1176
        %v1453 = vpack.c.b16 %v1181, %v1177
        %v1454 = vpack.c.b16 %v1182, %v1178
        %v1455 = vpack.c.b16 %v1183, %v1179
        %v1456 = vpack.c.b16 %v1188, %v1184
        %v1457 = vpack.c.b16 %v1189, %v1185
        %v1458 = vpack.c.b16 %v1190, %v1186
        %v1459 = vpack.c.b16 %v1191, %v1187
        %v1460 = vpack.c.b16 %v1196, %v1192
        %v1461 = vpack.c.b16 %v1197, %v1193
        %v1462 = vpack.c.b16 %v1198, %v1194
        %v1463 = vpack.c.b16 %v1199, %v1195
        %v1464 = vpack.c.b16 %v1204, %v1200
        %v1465 = vpack.c.b16 %v1205, %v1201
        %v1466 = vpack.c.b16 %v1206, %v1202
        %v1467 = vpack.c.b16 %v1207, %v1203
        %v1468 = vpack.c.b16 %v1212, %v1208
        %v1469 = vpack.c.b16 %v1213, %v1209
        %v1470 = vpack.c.b16 %v1214, %v1210
        %v1471 = vpack.c.b16 %v1215, %v1211
        %v1472 = vpack.c.b16 %v1220, %v1216
        %v1473 = vpack.c.b16 %v1221, %v1217
        %v1474 = vpack.c.b16 %v1222, %v1218
        %v1475 = vpack.c.b16 %v1223, %v1219
        %v1476 = vpack.c.b16 %v1228, %v1224
        %v1477 = vpack.c.b16 %v1229, %v1225
        %v1478 = vpack.c.b16 %v1230, %v1226
        %v1479 = vpack.c.b16 %v1231, %v1227
        %v1480 = vpack.c.b16 %v1236, %v1232
        %v1481 = vpack.c.b16 %v1237, %v1233
        %v1482 = vpack.c.b16 %v1238, %v1234
        %v1483 = vpack.c.b16 %v1239, %v1235
        %v1484 = vpack.c.b16 %v1244, %v1240
        %v1485 = vpack.c.b16 %v1245, %v1241
        %v1486 = vpack.c.b16 %v1246, %v1242
        %v1487 = vpack.c.b16 %v1247, %v1243
        %v1488 = vpack.c.b16 %v1252, %v1248
        %v1489 = vpack.c.b16 %v1253, %v1249
        %v1490 = vpack.c.b16 %v1254, %v1250
        %v1491 = vpack.c.b16 %v1255, %v1251
        %v1492 = vpack.c.b16 %v1260, %v1256
        %v1493 = vpack.c.b16 %v1261, %v1257
        %v1494 = vpack.c.b16 %v1262, %v1258
        %v1495 = vpack.c.b16 %v1263, %v1259
        %v1496 = vpack.c.b16 %v1268, %v1264
        %v1497 = vpack.c.b16 %v1269, %v1265
        %v1498 = vpack.c.b16 %v1270, %v1266
        %v1499 = vpack.c.b16 %v1271, %v1267
        %v1500 = vpack.c.b16 %v1276, %v1272
        %v1501 = vpack.c.b16 %v1277, %v1273
        %v1502 = vpack.c.b16 %v1278, %v1274
        %v1503 = vpack.c.b16 %v1279, %v1275
        %v1504 = vpack.c.b16 %v1284, %v1280
        %v1505 = vpack.c.b16 %v1285, %v1281
        %v1506 = vpack.c.b16 %v1286, %v1282
        %v1507 = vpack.c.b16 %v1287, %v1283
        %v1508 = vpack.c.b16 %v1292, %v1288
        %v1509 = vpack.c.b16 %v1293, %v1289
        %v1510 = vpack.c.b16 %v1294, %v1290
        %v1511 = vpack.c.b16 %v1295, %v1291
        %v1512 = vpack.c.b16 %v1300, %v1296
        %v1513 = vpack.c.b16 %v1301, %v1297
        %v1514 = vpack.c.b16 %v1302, %v1298
        %v1515 = vpack.c.b16 %v1303, %v1299
        %v1516 = vpack.c.b16 %v1308, %v1304
        %v1517 = vpack.c.b16 %v1309, %v1305
        %v1518 = vpack.c.b16 %v1310, %v1306
        %v1519 = vpack.c.b16 %v1311, %v1307
        %v1520 = vpack.c.b16 %v1316, %v1312
        %v1521 = vpack.c.b16 %v1317, %v1313
        %v1522 = vpack.c.b16 %v1318, %v1314
        %v1523 = vpack.c.b16 %v1319, %v1315
        %v1524 = vpack.c.b16 %v1324, %v1320
        %v1525 = vpack.c.b16 %v1325, %v1321
        %v1526 = vpack.c.b16 %v1326, %v1322
        %v1527 = vpack.c.b16 %v1327, %v1323
        %v1528 = vpack.c.b16 %v1332, %v1328
        %v1529 = vpack.c.b16 %v1333, %v1329
        %v1530 = vpack.c.b16 %v1334, %v1330
        %v1531 = vpack.c.b16 %v1335, %v1331
        %vm1728 = vcmask 130048
        %v1730 = vsel %vm1728, %v741, 0
        %1732 = vmatprep.subr.bf16.mxu0 %v1337
        %1733 = vmatpush1.bf16.msra.mxu0 %v1336
        %1734 = vmatprep.subr.bf16.mxu0 %v1341
        %1735 = vmatpush1.bf16.msra.mxu0 %v1340
        %1736 = vmatprep.subr.bf16.mxu0 %v1345
        %1737 = vmatpush1.bf16.msra.mxu0 %v1344
        %1738 = vmatprep.subr.bf16.mxu0 %v1349
        %1739 = vmatpush1.bf16.msra.mxu0 %v1348
        %1740 = vmatprep.subr.bf16.mxu0 %v1353
        %1741 = vmatpush1.bf16.msra.mxu0 %v1352
        %1742 = vmatprep.subr.bf16.mxu0 %v1357
        %1743 = vmatpush1.bf16.msra.mxu0 %v1356
        %1744 = vmatprep.subr.bf16.mxu0 %v1361
        %1745 = vmatpush1.bf16.msra.mxu0 %v1360
        %1746 = vmatprep.subr.bf16.mxu0 %v1365
        %1747 = vmatpush1.bf16.msra.mxu0 %v1364
        %1748 = vmatprep.subr.bf16.mxu0 %v1369
        %1749 = vmatpush1.bf16.msra.mxu0 %v1368
        %1750 = vmatprep.subr.bf16.mxu0 %v1373
        %1751 = vmatpush1.bf16.msra.mxu0 %v1372
        %1752 = vmatprep.subr.bf16.mxu0 %v1377
        %1753 = vmatpush1.bf16.msra.mxu0 %v1376
        %1754 = vmatprep.subr.bf16.mxu0 %v1381
        %1755 = vmatpush1.bf16.msra.mxu0 %v1380
        %1756 = vmatprep.subr.bf16.mxu0 %v1385
        %1757 = vmatpush1.bf16.msra.mxu0 %v1384
        %1758 = vmatprep.subr.bf16.mxu0 %v1389
        %1759 = vmatpush1.bf16.msra.mxu0 %v1388
        %1760 = vmatprep.subr.bf16.mxu0 %v1393
        %1761 = vmatpush1.bf16.msra.mxu0 %v1392
        %1762 = vmatprep.subr.bf16.mxu0 %v1397
        %1763 = vmatpush1.bf16.msra.mxu0 %v1396
        %1764 = vmatprep.mubr.bf16.mxu0 %v736
        %1765 = vmatmul.mubr.bf16.gmra.mrb[0].mxu0 %v735
        %v1766 = vpop.f32.mrb[0].mxu0
        %v1767 = vadd.f32 %v707, %v1766
        %v1768 = vpop.f32.mrb[0].mxu0
        %v1769 = vadd.f32 %v711, %v1768
        %v1770 = vpop.f32.mrb[0].mxu0
        %v1771 = vpop.f32.mrb[0].mxu0
        %1772 = vdwg.mxu0
        %1773 = vmatprep.subr.bf16.mxu0 %v1401
        %1774 = vmatpush1.bf16.msra.mxu0 %v1400
        %1775 = vmatprep.subr.bf16.mxu0 %v1405
        %1776 = vmatpush1.bf16.msra.mxu0 %v1404
        %1777 = vmatprep.subr.bf16.mxu0 %v1409
        %1778 = vmatpush1.bf16.msra.mxu0 %v1408
        %1779 = vmatprep.subr.bf16.mxu0 %v1413
        %1780 = vmatpush1.bf16.msra.mxu0 %v1412
        %1781 = vmatprep.subr.bf16.mxu0 %v1417
        %1782 = vmatpush1.bf16.msra.mxu0 %v1416
        %1783 = vmatprep.subr.bf16.mxu0 %v1421
        %1784 = vmatpush1.bf16.msra.mxu0 %v1420
        %1785 = vmatprep.subr.bf16.mxu0 %v1425
        %1786 = vmatpush1.bf16.msra.mxu0 %v1424
        %1787 = vmatprep.subr.bf16.mxu0 %v1429
        %1788 = vmatpush1.bf16.msra.mxu0 %v1428
        %1789 = vmatprep.subr.bf16.mxu0 %v1433
        %1790 = vmatpush1.bf16.msra.mxu0 %v1432
        %1791 = vmatprep.subr.bf16.mxu0 %v1437
        %1792 = vmatpush1.bf16.msra.mxu0 %v1436
        %1793 = vmatprep.subr.bf16.mxu0 %v1441
        %1794 = vmatpush1.bf16.msra.mxu0 %v1440
        %1795 = vmatprep.subr.bf16.mxu0 %v1445
        %1796 = vmatpush1.bf16.msra.mxu0 %v1444
        %1797 = vmatprep.subr.bf16.mxu0 %v1449
        %1798 = vmatpush1.bf16.msra.mxu0 %v1448
        %1799 = vmatprep.subr.bf16.mxu0 %v1453
        %1800 = vmatpush1.bf16.msra.mxu0 %v1452
        %1801 = vmatprep.subr.bf16.mxu0 %v1457
        %1802 = vmatpush1.bf16.msra.mxu0 %v1456
        %1803 = vmatprep.subr.bf16.mxu0 %v1461
        %1804 = vmatpush1.bf16.msra.mxu0 %v1460
        %1805 = vmatprep.mubr.bf16.mxu0 %v738
        %1806 = vmatmul.mubr.bf16.gmra.mrb[0].mxu0 %v737
        %v1807 = vpop.f32.mrb[0].mxu0
        %v1808 = vadd.f32 %v1767, %v1807
        %v1809 = vpop.f32.mrb[0].mxu0
        %v1810 = vadd.f32 %v1769, %v1809
        %v1811 = vpop.f32.mrb[0].mxu0
        %v1812 = vpop.f32.mrb[0].mxu0
        %1813 = vdwg.mxu0
        %1814 = vmatprep.subr.bf16.mxu0 %v1465
        %1815 = vmatpush1.bf16.msra.mxu0 %v1464
        %1816 = vmatprep.subr.bf16.mxu0 %v1469
        %1817 = vmatpush1.bf16.msra.mxu0 %v1468
        %1818 = vmatprep.subr.bf16.mxu0 %v1473
        %1819 = vmatpush1.bf16.msra.mxu0 %v1472
        %1820 = vmatprep.subr.bf16.mxu0 %v1477
        %1821 = vmatpush1.bf16.msra.mxu0 %v1476
        %1822 = vmatprep.subr.bf16.mxu0 %v1481
        %1823 = vmatpush1.bf16.msra.mxu0 %v1480
        %1824 = vmatprep.subr.bf16.mxu0 %v1485
        %1825 = vmatpush1.bf16.msra.mxu0 %v1484
        %1826 = vmatprep.subr.bf16.mxu0 %v1489
        %1827 = vmatpush1.bf16.msra.mxu0 %v1488
        %1828 = vmatprep.subr.bf16.mxu0 %v1493
        %1829 = vmatpush1.bf16.msra.mxu0 %v1492
        %1830 = vmatprep.subr.bf16.mxu0 %v1497
        %1831 = vmatpush1.bf16.msra.mxu0 %v1496
        %1832 = vmatprep.subr.bf16.mxu0 %v1501
        %1833 = vmatpush1.bf16.msra.mxu0 %v1500
        %1834 = vmatprep.subr.bf16.mxu0 %v1505
        %1835 = vmatpush1.bf16.msra.mxu0 %v1504
        %1836 = vmatprep.subr.bf16.mxu0 %v1509
        %1837 = vmatpush1.bf16.msra.mxu0 %v1508
        %1838 = vmatprep.subr.bf16.mxu0 %v1513
        %1839 = vmatpush1.bf16.msra.mxu0 %v1512
        %1840 = vmatprep.subr.bf16.mxu0 %v1517
        %1841 = vmatpush1.bf16.msra.mxu0 %v1516
        %1842 = vmatprep.subr.bf16.mxu0 %v1521
        %1843 = vmatpush1.bf16.msra.mxu0 %v1520
        %1844 = vmatprep.subr.bf16.mxu0 %v1525
        %1845 = vmatpush1.bf16.msra.mxu0 %v1524
        %1846 = vmatprep.mubr.bf16.mxu0 %v740
        %1847 = vmatmul.mubr.bf16.gmra.mrb[0].mxu0 %v739
        %v1848 = vpop.f32.mrb[0].mxu0
        %v1849 = vadd.f32 %v1808, %v1848
        %v1850 = vpop.f32.mrb[0].mxu0
        %v1851 = vadd.f32 %v1810, %v1850
        %v1852 = vpop.f32.mrb[0].mxu0
        %v1853 = vpop.f32.mrb[0].mxu0
        %1854 = vdwg.mxu0
        %1855 = vmatprep.subr.bf16.mxu0 %v1529
        %1856 = vmatpush1.bf16.msra.mxu0 %v1528
        %1857 = vmatprep.subr.bf16.mxu0 0
        %1858 = vmatpush1.bf16.msra.mxu0 0
        %1859 = vmatprep.subr.bf16.mxu0 0
        %1860 = vmatpush1.bf16.msra.mxu0 0
        %1861 = vmatprep.subr.bf16.mxu0 0
        %1862 = vmatpush1.bf16.msra.mxu0 0
        %1863 = vmatprep.subr.bf16.mxu0 0
        %1864 = vmatpush1.bf16.msra.mxu0 0
        %1865 = vmatprep.subr.bf16.mxu0 0
        %1866 = vmatpush1.bf16.msra.mxu0 0
        %1867 = vmatprep.subr.bf16.mxu0 0
        %1868 = vmatpush1.bf16.msra.mxu0 0
        %1869 = vmatprep.subr.bf16.mxu0 0
        %1870 = vmatpush1.bf16.msra.mxu0 0
        %1871 = vmatprep.subr.bf16.mxu0 0
        %1872 = vmatpush1.bf16.msra.mxu0 0
        %1873 = vmatprep.subr.bf16.mxu0 0
        %1874 = vmatpush1.bf16.msra.mxu0 0
        %1875 = vmatprep.subr.bf16.mxu0 0
        %1876 = vmatpush1.bf16.msra.mxu0 0
        %1877 = vmatprep.subr.bf16.mxu0 0
        %1878 = vmatpush1.bf16.msra.mxu0 0
        %1879 = vmatprep.subr.bf16.mxu0 0
        %1880 = vmatpush1.bf16.msra.mxu0 0
        %1881 = vmatprep.subr.bf16.mxu0 0
        %1882 = vmatpush1.bf16.msra.mxu0 0
        %1883 = vmatprep.subr.bf16.mxu0 0
        %1884 = vmatpush1.bf16.msra.mxu0 0
        %1885 = vmatprep.subr.bf16.mxu0 0
        %1886 = vmatpush1.bf16.msra.mxu0 0
        %1887 = vmatprep.mubr.bf16.mxu0 0
        %1888 = vmatmul.mubr.bf16.gmra.mrb[0].mxu0 %v1730
        %v1889 = vpop.f32.mrb[0].mxu0
        %v1890 = vadd.f32 %v1849, %v1889
        %v1891 = vpop.f32.mrb[0].mxu0
        %v1892 = vadd.f32 %v1851, %v1891
        %v1893 = vpop.f32.mrb[0].mxu0
        %v1894 = vpop.f32.mrb[0].mxu0
        %1895 = vdwg.mxu0
        %1896 = vmatprep.subr.bf16.mxu0 %v1339
        %1897 = vmatpush1.bf16.msra.mxu0 %v1338
        %1898 = vmatprep.subr.bf16.mxu0 %v1343
        %1899 = vmatpush1.bf16.msra.mxu0 %v1342
        %1900 = vmatprep.subr.bf16.mxu0 %v1347
        %1901 = vmatpush1.bf16.msra.mxu0 %v1346
        %1902 = vmatprep.subr.bf16.mxu0 %v1351
        %1903 = vmatpush1.bf16.msra.mxu0 %v1350
        %1904 = vmatprep.subr.bf16.mxu0 %v1355
        %1905 = vmatpush1.bf16.msra.mxu0 %v1354
        %1906 = vmatprep.subr.bf16.mxu0 %v1359
        %1907 = vmatpush1.bf16.msra.mxu0 %v1358
        %1908 = vmatprep.subr.bf16.mxu0 %v1363
        %1909 = vmatpush1.bf16.msra.mxu0 %v1362
        %1910 = vmatprep.subr.bf16.mxu0 %v1367
        %1911 = vmatpush1.bf16.msra.mxu0 %v1366
        %1912 = vmatprep.subr.bf16.mxu0 %v1371
        %1913 = vmatpush1.bf16.msra.mxu0 %v1370
        %1914 = vmatprep.subr.bf16.mxu0 %v1375
        %1915 = vmatpush1.bf16.msra.mxu0 %v1374
        %1916 = vmatprep.subr.bf16.mxu0 %v1379
        %1917 = vmatpush1.bf16.msra.mxu0 %v1378
        %1918 = vmatprep.subr.bf16.mxu0 %v1383
        %1919 = vmatpush1.bf16.msra.mxu0 %v1382
        %1920 = vmatprep.subr.bf16.mxu0 %v1387
        %1921 = vmatpush1.bf16.msra.mxu0 %v1386
        %1922 = vmatprep.subr.bf16.mxu0 %v1391
        %1923 = vmatpush1.bf16.msra.mxu0 %v1390
        %1924 = vmatprep.subr.bf16.mxu0 %v1395
        %1925 = vmatpush1.bf16.msra.mxu0 %v1394
        %1926 = vmatprep.subr.bf16.mxu0 %v1399
        %1927 = vmatpush1.bf16.msra.mxu0 %v1398
        %1928 = vmatprep.mubr.bf16.mxu0 %v736
        %1929 = vmatmul.mubr.bf16.gmra.mrb[0].mxu0 %v735
        %v1930 = vpop.f32.mrb[0].mxu0
        %v1931 = vadd.f32 %v715, %v1930
        %v1932 = vpop.f32.mrb[0].mxu0
        %v1933 = vadd.f32 %v719, %v1932
        %v1934 = vpop.f32.mrb[0].mxu0
        %v1935 = vpop.f32.mrb[0].mxu0
        %1936 = vdwg.mxu0
        %1937 = vmatprep.subr.bf16.mxu0 %v1403
        %1938 = vmatpush1.bf16.msra.mxu0 %v1402
        %1939 = vmatprep.subr.bf16.mxu0 %v1407
        %1940 = vmatpush1.bf16.msra.mxu0 %v1406
        %1941 = vmatprep.subr.bf16.mxu0 %v1411
        %1942 = vmatpush1.bf16.msra.mxu0 %v1410
        %1943 = vmatprep.subr.bf16.mxu0 %v1415
        %1944 = vmatpush1.bf16.msra.mxu0 %v1414
        %1945 = vmatprep.subr.bf16.mxu0 %v1419
        %1946 = vmatpush1.bf16.msra.mxu0 %v1418
        %1947 = vmatprep.subr.bf16.mxu0 %v1423
        %1948 = vmatpush1.bf16.msra.mxu0 %v1422
        %1949 = vmatprep.subr.bf16.mxu0 %v1427
        %1950 = vmatpush1.bf16.msra.mxu0 %v1426
        %1951 = vmatprep.subr.bf16.mxu0 %v1431
        %1952 = vmatpush1.bf16.msra.mxu0 %v1430
        %1953 = vmatprep.subr.bf16.mxu0 %v1435
        %1954 = vmatpush1.bf16.msra.mxu0 %v1434
        %1955 = vmatprep.subr.bf16.mxu0 %v1439
        %1956 = vmatpush1.bf16.msra.mxu0 %v1438
        %1957 = vmatprep.subr.bf16.mxu0 %v1443
        %1958 = vmatpush1.bf16.msra.mxu0 %v1442
        %1959 = vmatprep.subr.bf16.mxu0 %v1447
        %1960 = vmatpush1.bf16.msra.mxu0 %v1446
        %1961 = vmatprep.subr.bf16.mxu0 %v1451
        %1962 = vmatpush1.bf16.msra.mxu0 %v1450
        %1963 = vmatprep.subr.bf16.mxu0 %v1455
        %1964 = vmatpush1.bf16.msra.mxu0 %v1454
        %1965 = vmatprep.subr.bf16.mxu0 %v1459
        %1966 = vmatpush1.bf16.msra.mxu0 %v1458
        %1967 = vmatprep.subr.bf16.mxu0 %v1463
        %1968 = vmatpush1.bf16.msra.mxu0 %v1462
        %1969 = vmatprep.mubr.bf16.mxu0 %v738
        %1970 = vmatmul.mubr.bf16.gmra.mrb[0].mxu0 %v737
        %v1971 = vpop.f32.mrb[0].mxu0
        %v1972 = vadd.f32 %v1931, %v1971
        %v1973 = vpop.f32.mrb[0].mxu0
        %v1974 = vadd.f32 %v1933, %v1973
        %v1975 = vpop.f32.mrb[0].mxu0
        %v1976 = vpop.f32.mrb[0].mxu0
        %1977 = vdwg.mxu0
        %1978 = vmatprep.subr.bf16.mxu0 %v1467
        %1979 = vmatpush1.bf16.msra.mxu0 %v1466
        %1980 = vmatprep.subr.bf16.mxu0 %v1471
        %1981 = vmatpush1.bf16.msra.mxu0 %v1470
        %1982 = vmatprep.subr.bf16.mxu0 %v1475
        %1983 = vmatpush1.bf16.msra.mxu0 %v1474
        %1984 = vmatprep.subr.bf16.mxu0 %v1479
        %1985 = vmatpush1.bf16.msra.mxu0 %v1478
        %1986 = vmatprep.subr.bf16.mxu0 %v1483
        %1987 = vmatpush1.bf16.msra.mxu0 %v1482
        %1988 = vmatprep.subr.bf16.mxu0 %v1487
        %1989 = vmatpush1.bf16.msra.mxu0 %v1486
        %1990 = vmatprep.subr.bf16.mxu0 %v1491
        %1991 = vmatpush1.bf16.msra.mxu0 %v1490
        %1992 = vmatprep.subr.bf16.mxu0 %v1495
        %1993 = vmatpush1.bf16.msra.mxu0 %v1494
        %1994 = vmatprep.subr.bf16.mxu0 %v1499
        %1995 = vmatpush1.bf16.msra.mxu0 %v1498
        %1996 = vmatprep.subr.bf16.mxu0 %v1503
        %1997 = vmatpush1.bf16.msra.mxu0 %v1502
        %1998 = vmatprep.subr.bf16.mxu0 %v1507
        %1999 = vmatpush1.bf16.msra.mxu0 %v1506
        %2000 = vmatprep.subr.bf16.mxu0 %v1511
        %2001 = vmatpush1.bf16.msra.mxu0 %v1510
        %2002 = vmatprep.subr.bf16.mxu0 %v1515
        %2003 = vmatpush1.bf16.msra.mxu0 %v1514
        %2004 = vmatprep.subr.bf16.mxu0 %v1519
        %2005 = vmatpush1.bf16.msra.mxu0 %v1518
        %2006 = vmatprep.subr.bf16.mxu0 %v1523
        %2007 = vmatpush1.bf16.msra.mxu0 %v1522
        %2008 = vmatprep.subr.bf16.mxu0 %v1527
        %2009 = vmatpush1.bf16.msra.mxu0 %v1526
        %2010 = vmatprep.mubr.bf16.mxu0 %v740
        %2011 = vmatmul.mubr.bf16.gmra.mrb[0].mxu0 %v739
        %v2012 = vpop.f32.mrb[0].mxu0
        %v2013 = vadd.f32 %v1972, %v2012
        %v2014 = vpop.f32.mrb[0].mxu0
        %v2015 = vadd.f32 %v1974, %v2014
        %v2016 = vpop.f32.mrb[0].mxu0
        %v2017 = vpop.f32.mrb[0].mxu0
        %2018 = vdwg.mxu0
        %2019 = vmatprep.subr.bf16.mxu0 %v1531
        %2020 = vmatpush1.bf16.msra.mxu0 %v1530
        %2021 = vmatprep.subr.bf16.mxu0 0
        %2022 = vmatpush1.bf16.msra.mxu0 0
        %2023 = vmatprep.subr.bf16.mxu0 0
        %2024 = vmatpush1.bf16.msra.mxu0 0
        %2025 = vmatprep.subr.bf16.mxu0 0
        %2026 = vmatpush1.bf16.msra.mxu0 0
        %2027 = vmatprep.subr.bf16.mxu0 0
        %2028 = vmatpush1.bf16.msra.mxu0 0
        %2029 = vmatprep.subr.bf16.mxu0 0
        %2030 = vmatpush1.bf16.msra.mxu0 0
        %2031 = vmatprep.subr.bf16.mxu0 0
        %2032 = vmatpush1.bf16.msra.mxu0 0
        %2033 = vmatprep.subr.bf16.mxu0 0
        %2034 = vmatpush1.bf16.msra.mxu0 0
        %2035 = vmatprep.subr.bf16.mxu0 0
        %2036 = vmatpush1.bf16.msra.mxu0 0
        %2037 = vmatprep.subr.bf16.mxu0 0
        %2038 = vmatpush1.bf16.msra.mxu0 0
        %2039 = vmatprep.subr.bf16.mxu0 0
        %2040 = vmatpush1.bf16.msra.mxu0 0
        %2041 = vmatprep.subr.bf16.mxu0 0
        %2042 = vmatpush1.bf16.msra.mxu0 0
        %2043 = vmatprep.subr.bf16.mxu0 0
        %2044 = vmatpush1.bf16.msra.mxu0 0
        %2045 = vmatprep.subr.bf16.mxu0 0
        %2046 = vmatpush1.bf16.msra.mxu0 0
        %2047 = vmatprep.subr.bf16.mxu0 0
        %2048 = vmatpush1.bf16.msra.mxu0 0
        %2049 = vmatprep.subr.bf16.mxu0 0
        %2050 = vmatpush1.bf16.msra.mxu0 0
        %2051 = vmatprep.mubr.bf16.mxu0 0
        %2052 = vmatmul.mubr.bf16.gmra.mrb[0].mxu0 %v1730
        %v2053 = vpop.f32.mrb[0].mxu0
        %v2054 = vadd.f32 %v2013, %v2053
        %v2055 = vpop.f32.mrb[0].mxu0
        %v2056 = vadd.f32 %v2015, %v2055
        %v2057 = vpop.f32.mrb[0].mxu0
        %v2058 = vpop.f32.mrb[0].mxu0
        %2059 = vdwg.mxu0
        %v2060 = vmax.f32 %v1890, 0.0
        %v2061 = vmax.f32 %v1892, 0.0
        %v2062 = vmax.f32 %v2054, 0.0
        %v2063 = vmax.f32 %v2056, 0.0
        %v2064 = vpack.c.bf16 %v2060, %v2060
        %v2065 = vpack.c.bf16 %v2061, %v2061
        %v2066 = vpack.c.bf16 %v2062, %v2062
        %v2067 = vpack.c.bf16 %v2063, %v2063
        %v2068 = vld [vmem:[%s3] sm:$0xf]
        %v2069 = vld [vmem:[%s3 + $0x4] sm:$0xf]
        %v2070 = vld [vmem:[%s3 + $0x8] sm:$0xf]
        %v2071 = vld [vmem:[%s3 + $0xc] sm:$0xf]
        %v2072 = vld [vmem:[%s3 + $0x10] sm:$0xf]
        %v2073 = vld [vmem:[%s3 + $0x14] sm:$0xf]
        %v2074 = vld [vmem:[%s3 + $0x18] sm:$0xf]
        %v2075 = vld [vmem:[%s3 + $0x1c] sm:$0xf]
        %v2076 = vld [vmem:[%s3 + $0x20] sm:$0xf]
        %v2077 = vld [vmem:[%s3 + $0x24] sm:$0xf]
        %v2078 = vld [vmem:[%s3 + $0x28] sm:$0xf]
        %v2079 = vld [vmem:[%s3 + $0x2c] sm:$0xf]
        %v2080 = vld [vmem:[%s3 + $0x30] sm:$0xf]
        %v2081 = vld [vmem:[%s3 + $0x34] sm:$0xf]
        %v2082 = vld [vmem:[%s3 + $0x38] sm:$0xf]
        %v2083 = vld [vmem:[%s3 + $0x3c] sm:$0xf]
        %v2084 = vld [vmem:[%s3 + $0x40] sm:$0xf]
        %v2085 = vld [vmem:[%s3 + $0x44] sm:$0xf]
        %v2086 = vld [vmem:[%s3 + $0x48] sm:$0xf]
        %v2087 = vld [vmem:[%s3 + $0x4c] sm:$0xf]
        %v2088 = vld [vmem:[%s3 + $0x50] sm:$0xf]
        %v2089 = vld [vmem:[%s3 + $0x54] sm:$0xf]
        %v2090 = vld [vmem:[%s3 + $0x58] sm:$0xf]
        %v2091 = vld [vmem:[%s3 + $0x5c] sm:$0xf]
        %v2092 = vld [vmem:[%s3 + $0x60] sm:$0xf]
        %v2093 = vld [vmem:[%s3 + $0x64] sm:$0xf]
        %v2094 = vld [vmem:[%s3 + $0x68] sm:$0xf]
        %v2095 = vld [vmem:[%s3 + $0x6c] sm:$0xf]
        %v2096 = vld [vmem:[%s3 + $0x70] sm:$0xf]
        %v2097 = vld [vmem:[%s3 + $0x74] sm:$0xf]
        %v2098 = vld [vmem:[%s3 + $0x78] sm:$0xf]
        %v2099 = vld [vmem:[%s3 + $0x7c] sm:$0xf]
        %v2100 = vld [vmem:[%s3 + $0x80] sm:$0xf]
        %v2101 = vld [vmem:[%s3 + $0x84] sm:$0xf]
        %v2102 = vld [vmem:[%s3 + $0x88] sm:$0xf]
        %v2103 = vld [vmem:[%s3 + $0x8c] sm:$0xf]
        %v2104 = vld [vmem:[%s3 + $0x90] sm:$0xf]
        %v2105 = vld [vmem:[%s3 + $0x94] sm:$0xf]
        %v2106 = vld [vmem:[%s3 + $0x98] sm:$0xf]
        %v2107 = vld [vmem:[%s3 + $0x9c] sm:$0xf]
        %v2108 = vld [vmem:[%s3 + $0xa0] sm:$0xf]
        %v2109 = vld [vmem:[%s3 + $0xa4] sm:$0xf]
        %v2110 = vld [vmem:[%s3 + $0xa8] sm:$0xf]
        %v2111 = vld [vmem:[%s3 + $0xac] sm:$0xf]
        %v2112 = vld [vmem:[%s3 + $0xb0] sm:$0xf]
        %v2113 = vld [vmem:[%s3 + $0xb4] sm:$0xf]
        %v2114 = vld [vmem:[%s3 + $0xb8] sm:$0xf]
        %v2115 = vld [vmem:[%s3 + $0xbc] sm:$0xf]
        %v2116 = vld [vmem:[%s3 + $0xc0] sm:$0xf]
        %v2117 = vld [vmem:[%s3 + $0xc4] sm:$0xf]
        %v2118 = vld [vmem:[%s4] sm:$0x1]
        %v2120 = vlaneseq
        %v2121 = vshrl.u32 %v2120, 7
        %v2122 = vsub.s32 0, %v2121
        %v2123 = vrot.slane %v2118, %v2122
        %v2175 = vunpack.c.l.b16 %v2068
        %v2176 = vunpack.c.l.b16 %v2069
        %v2177 = vunpack.c.l.b16 %v2070
        %v2178 = vunpack.c.l.b16 %v2071
        %v2179 = vunpack.c.l.b16 %v2072
        %v2180 = vunpack.c.l.b16 %v2073
        %v2181 = vunpack.c.l.b16 %v2074
        %v2182 = vunpack.c.l.b16 %v2075
        %v2183 = vunpack.c.l.b16 %v2076
        %v2184 = vunpack.c.l.b16 %v2077
        %v2185 = vunpack.c.l.b16 %v2078
        %v2186 = vunpack.c.l.b16 %v2079
        %v2187 = vunpack.c.l.b16 %v2080
        %v2188 = vunpack.c.l.b16 %v2081
        %v2189 = vunpack.c.l.b16 %v2082
        %v2190 = vunpack.c.l.b16 %v2083
        %v2191 = vunpack.c.l.b16 %v2084
        %v2192 = vunpack.c.l.b16 %v2085
        %v2193 = vunpack.c.l.b16 %v2086
        %v2194 = vunpack.c.l.b16 %v2087
        %v2195 = vunpack.c.l.b16 %v2088
        %v2196 = vunpack.c.l.b16 %v2089
        %v2197 = vunpack.c.l.b16 %v2090
        %v2198 = vunpack.c.l.b16 %v2091
        %v2199 = vunpack.c.l.b16 %v2092
        %v2200 = vunpack.c.l.b16 %v2093
        %v2201 = vunpack.c.l.b16 %v2094
        %v2202 = vunpack.c.l.b16 %v2095
        %v2203 = vunpack.c.l.b16 %v2096
        %v2204 = vunpack.c.l.b16 %v2097
        %v2205 = vunpack.c.l.b16 %v2098
        %v2206 = vunpack.c.l.b16 %v2099
        %v2207 = vunpack.c.l.b16 %v2100
        %v2208 = vunpack.c.l.b16 %v2101
        %v2209 = vunpack.c.l.b16 %v2102
        %v2210 = vunpack.c.l.b16 %v2103
        %v2211 = vunpack.c.l.b16 %v2104
        %v2212 = vunpack.c.l.b16 %v2105
        %v2213 = vunpack.c.l.b16 %v2106
        %v2214 = vunpack.c.l.b16 %v2107
        %v2215 = vunpack.c.l.b16 %v2108
        %v2216 = vunpack.c.l.b16 %v2109
        %v2217 = vunpack.c.l.b16 %v2110
        %v2218 = vunpack.c.l.b16 %v2111
        %v2219 = vunpack.c.l.b16 %v2112
        %v2220 = vunpack.c.l.b16 %v2113
        %v2221 = vunpack.c.l.b16 %v2114
        %v2222 = vunpack.c.l.b16 %v2115
        %v2223 = vunpack.c.l.b16 %v2116
        %v2224 = vunpack.c.l.b16 %v2117
        %v2225 = vpack.c.b16 %v2176, %v2175
        %v2226 = vpack.c.b16 %v2178, %v2177
        %v2227 = vpack.c.b16 %v2180, %v2179
        %v2228 = vpack.c.b16 %v2182, %v2181
        %v2229 = vpack.c.b16 %v2184, %v2183
        %v2230 = vpack.c.b16 %v2186, %v2185
        %v2231 = vpack.c.b16 %v2188, %v2187
        %v2232 = vpack.c.b16 %v2190, %v2189
        %v2233 = vpack.c.b16 %v2192, %v2191
        %v2234 = vpack.c.b16 %v2194, %v2193
        %v2235 = vpack.c.b16 %v2196, %v2195
        %v2236 = vpack.c.b16 %v2198, %v2197
        %v2237 = vpack.c.b16 %v2200, %v2199
        %v2238 = vpack.c.b16 %v2202, %v2201
        %v2239 = vpack.c.b16 %v2204, %v2203
        %v2240 = vpack.c.b16 %v2206, %v2205
        %v2241 = vpack.c.b16 %v2208, %v2207
        %v2242 = vpack.c.b16 %v2210, %v2209
        %v2243 = vpack.c.b16 %v2212, %v2211
        %v2244 = vpack.c.b16 %v2214, %v2213
        %v2245 = vpack.c.b16 %v2216, %v2215
        %v2246 = vpack.c.b16 %v2218, %v2217
        %v2247 = vpack.c.b16 %v2220, %v2219
        %v2248 = vpack.c.b16 %v2222, %v2221
        %v2249 = vpack.c.b16 %v2224, %v2223
        %v2276 = vsel %vm1728, %v2067, 0
        %2278 = vmatprep.subr.bf16.mxu0 0
        %2279 = vmatpush1.bf16.msra.mxu0 %v2225
        %2280 = vmatprep.subr.bf16.mxu0 0
        %2281 = vmatpush1.bf16.msra.mxu0 %v2226
        %2282 = vmatprep.subr.bf16.mxu0 0
        %2283 = vmatpush1.bf16.msra.mxu0 %v2227
        %2284 = vmatprep.subr.bf16.mxu0 0
        %2285 = vmatpush1.bf16.msra.mxu0 %v2228
        %2286 = vmatprep.subr.bf16.mxu0 0
        %2287 = vmatpush1.bf16.msra.mxu0 %v2229
        %2288 = vmatprep.subr.bf16.mxu0 0
        %2289 = vmatpush1.bf16.msra.mxu0 %v2230
        %2290 = vmatprep.subr.bf16.mxu0 0
        %2291 = vmatpush1.bf16.msra.mxu0 %v2231
        %2292 = vmatprep.subr.bf16.mxu0 0
        %2293 = vmatpush1.bf16.msra.mxu0 %v2232
        %2294 = vmatprep.subr.bf16.mxu0 0
        %2295 = vmatpush1.bf16.msra.mxu0 %v2233
        %2296 = vmatprep.subr.bf16.mxu0 0
        %2297 = vmatpush1.bf16.msra.mxu0 %v2234
        %2298 = vmatprep.subr.bf16.mxu0 0
        %2299 = vmatpush1.bf16.msra.mxu0 %v2235
        %2300 = vmatprep.subr.bf16.mxu0 0
        %2301 = vmatpush1.bf16.msra.mxu0 %v2236
        %2302 = vmatprep.subr.bf16.mxu0 0
        %2303 = vmatpush1.bf16.msra.mxu0 %v2237
        %2304 = vmatprep.subr.bf16.mxu0 0
        %2305 = vmatpush1.bf16.msra.mxu0 %v2238
        %2306 = vmatprep.subr.bf16.mxu0 0
        %2307 = vmatpush1.bf16.msra.mxu0 %v2239
        %2308 = vmatprep.subr.bf16.mxu0 0
        %2309 = vmatpush1.bf16.msra.mxu0 %v2240
        %2310 = vmatprep.mubr.bf16.mxu0 %v2065
        %2311 = vmatmul.mubr.bf16.gmra.mrb[0].mxu0 %v2064
        %v2312 = vpop.f32.mrb[0].mxu0
        %v2313 = vadd.f32 %v2123, %v2312
        %v2314 = vpop.f32.mrb[0].mxu0
        %v2315 = vpop.f32.mrb[0].mxu0
        %v2316 = vpop.f32.mrb[0].mxu0
        %2317 = vdwg.mxu0
        %2318 = vmatprep.subr.bf16.mxu0 0
        %2319 = vmatpush1.bf16.msra.mxu0 %v2241
        %2320 = vmatprep.subr.bf16.mxu0 0
        %2321 = vmatpush1.bf16.msra.mxu0 %v2242
        %2322 = vmatprep.subr.bf16.mxu0 0
        %2323 = vmatpush1.bf16.msra.mxu0 %v2243
        %2324 = vmatprep.subr.bf16.mxu0 0
        %2325 = vmatpush1.bf16.msra.mxu0 %v2244
        %2326 = vmatprep.subr.bf16.mxu0 0
        %2327 = vmatpush1.bf16.msra.mxu0 %v2245
        %2328 = vmatprep.subr.bf16.mxu0 0
        %2329 = vmatpush1.bf16.msra.mxu0 %v2246
        %2330 = vmatprep.subr.bf16.mxu0 0
        %2331 = vmatpush1.bf16.msra.mxu0 %v2247
        %2332 = vmatprep.subr.bf16.mxu0 0
        %2333 = vmatpush1.bf16.msra.mxu0 %v2248
        %2334 = vmatprep.subr.bf16.mxu0 0
        %2335 = vmatpush1.bf16.msra.mxu0 %v2249
        %2336 = vmatprep.subr.bf16.mxu0 0
        %2337 = vmatpush1.bf16.msra.mxu0 0
        %2338 = vmatprep.subr.bf16.mxu0 0
        %2339 = vmatpush1.bf16.msra.mxu0 0
        %2340 = vmatprep.subr.bf16.mxu0 0
        %2341 = vmatpush1.bf16.msra.mxu0 0
        %2342 = vmatprep.subr.bf16.mxu0 0
        %2343 = vmatpush1.bf16.msra.mxu0 0
        %2344 = vmatprep.subr.bf16.mxu0 0
        %2345 = vmatpush1.bf16.msra.mxu0 0
        %2346 = vmatprep.subr.bf16.mxu0 0
        %2347 = vmatpush1.bf16.msra.mxu0 0
        %2348 = vmatprep.subr.bf16.mxu0 0
        %2349 = vmatpush1.bf16.msra.mxu0 0
        %2350 = vmatprep.mubr.bf16.mxu0 %v2276
        %2351 = vmatmul.mubr.bf16.gmra.mrb[0].mxu0 %v2066
        %v2352 = vpop.f32.mrb[0].mxu0
        %v2353 = vadd.f32 %v2313, %v2352
        %v2354 = vpop.f32.mrb[0].mxu0
        %v2355 = vpop.f32.mrb[0].mxu0
        %v2356 = vpop.f32.mrb[0].mxu0
        %2357 = vdwg.mxu0
        %v2358 = vmax.f32 %v2353, 0.0
        %v2359 = vld [vmem:[%s5] sm:$0xf]
        %v2360 = vld [vmem:[%s5 + $0x4] sm:$0xf]
        %v2361 = vld [vmem:[%s5 + $0x8] sm:$0xf]
        %v2362 = vld [vmem:[%s5 + $0xc] sm:$0xf]
        %v2363 = vld [vmem:[%s5 + $0x10] sm:$0xf]
        %v2364 = vld [vmem:[%s5 + $0x14] sm:$0xf]
        %v2365 = vld [vmem:[%s5 + $0x18] sm:$0xf]
        %v2366 = vld [vmem:[%s5 + $0x1c] sm:$0xf]
        %v2367 = vld [vmem:[%s5 + $0x20] sm:$0xf]
        %v2368 = vld [vmem:[%s5 + $0x24] sm:$0xf]
        %v2369 = vld [vmem:[%s5 + $0x28] sm:$0xf]
        %v2370 = vld [vmem:[%s5 + $0x2c] sm:$0xf]
        %v2371 = vld [vmem:[%s5 + $0x30] sm:$0xf]
        %v2372 = vld [vmem:[%s5 + $0x34] sm:$0xf]
        %v2373 = vld [vmem:[%s5 + $0x38] sm:$0xf]
        %v2374 = vld [vmem:[%s5 + $0x3c] sm:$0xf]
        %v2375 = vld [vmem:[%s5 + $0x40] sm:$0xf]
        %v2376 = vld [vmem:[%s5 + $0x44] sm:$0xf]
        %v2377 = vld [vmem:[%s5 + $0x48] sm:$0xf]
        %v2378 = vld [vmem:[%s5 + $0x4c] sm:$0xf]
        %v2379 = vld [vmem:[%s5 + $0x50] sm:$0xf]
        %v2380 = vld [vmem:[%s5 + $0x54] sm:$0xf]
        %v2381 = vld [vmem:[%s5 + $0x58] sm:$0xf]
        %v2382 = vld [vmem:[%s5 + $0x5c] sm:$0xf]
        %v2383 = vld [vmem:[%s5 + $0x60] sm:$0xf]
        %v2384 = vld [vmem:[%s5 + $0x64] sm:$0xf]
        %v2385 = vld [vmem:[%s5 + $0x68] sm:$0xf]
        %v2386 = vld [vmem:[%s5 + $0x6c] sm:$0xf]
        %v2387 = vld [vmem:[%s5 + $0x70] sm:$0xf]
        %v2388 = vld [vmem:[%s5 + $0x74] sm:$0xf]
        %v2389 = vld [vmem:[%s5 + $0x78] sm:$0xf]
        %v2390 = vld [vmem:[%s5 + $0x7c] sm:$0xf]
        %v2391 = vld [vmem:[%s5 + $0x80] sm:$0xf]
        %v2392 = vld [vmem:[%s5 + $0x84] sm:$0xf]
        %v2393 = vld [vmem:[%s5 + $0x88] sm:$0xf]
        %v2394 = vld [vmem:[%s5 + $0x8c] sm:$0xf]
        %v2395 = vld [vmem:[%s5 + $0x90] sm:$0xf]
        %v2396 = vld [vmem:[%s5 + $0x94] sm:$0xf]
        %v2397 = vld [vmem:[%s5 + $0x98] sm:$0xf]
        %v2398 = vld [vmem:[%s5 + $0x9c] sm:$0xf]
        %v2399 = vld [vmem:[%s5 + $0xa0] sm:$0xf]
        %v2400 = vld [vmem:[%s5 + $0xa4] sm:$0xf]
        %v2401 = vld [vmem:[%s5 + $0xa8] sm:$0xf]
        %v2402 = vld [vmem:[%s5 + $0xac] sm:$0xf]
        %v2403 = vld [vmem:[%s5 + $0xb0] sm:$0xf]
        %v2404 = vld [vmem:[%s5 + $0xb4] sm:$0xf]
        %v2405 = vld [vmem:[%s5 + $0xb8] sm:$0xf]
        %v2406 = vld [vmem:[%s5 + $0xbc] sm:$0xf]
        %v2407 = vld [vmem:[%s5 + $0xc0] sm:$0xf]
        %v2408 = vld [vmem:[%s5 + $0xc4] sm:$0xf]
        %v2409 = vld [vmem:[%s6] sm:$0x1]
        %v2411 = vlaneseq
        %v2412 = vshrl.u32 %v2411, 7
        %v2413 = vsub.s32 0, %v2412
        %v2414 = vrot.slane %v2409, %v2413
        %v2466 = vunpack.c.l.b16 %v2359
        %v2467 = vunpack.c.l.b16 %v2360
        %v2468 = vunpack.c.l.b16 %v2361
        %v2469 = vunpack.c.l.b16 %v2362
        %v2470 = vunpack.c.l.b16 %v2363
        %v2471 = vunpack.c.l.b16 %v2364
        %v2472 = vunpack.c.l.b16 %v2365
        %v2473 = vunpack.c.l.b16 %v2366
        %v2474 = vunpack.c.l.b16 %v2367
        %v2475 = vunpack.c.l.b16 %v2368
        %v2476 = vunpack.c.l.b16 %v2369
        %v2477 = vunpack.c.l.b16 %v2370
        %v2478 = vunpack.c.l.b16 %v2371
        %v2479 = vunpack.c.l.b16 %v2372
        %v2480 = vunpack.c.l.b16 %v2373
        %v2481 = vunpack.c.l.b16 %v2374
        %v2482 = vunpack.c.l.b16 %v2375
        %v2483 = vunpack.c.l.b16 %v2376
        %v2484 = vunpack.c.l.b16 %v2377
        %v2485 = vunpack.c.l.b16 %v2378
        %v2486 = vunpack.c.l.b16 %v2379
        %v2487 = vunpack.c.l.b16 %v2380
        %v2488 = vunpack.c.l.b16 %v2381
        %v2489 = vunpack.c.l.b16 %v2382
        %v2490 = vunpack.c.l.b16 %v2383
        %v2491 = vunpack.c.l.b16 %v2384
        %v2492 = vunpack.c.l.b16 %v2385
        %v2493 = vunpack.c.l.b16 %v2386
        %v2494 = vunpack.c.l.b16 %v2387
        %v2495 = vunpack.c.l.b16 %v2388
        %v2496 = vunpack.c.l.b16 %v2389
        %v2497 = vunpack.c.l.b16 %v2390
        %v2498 = vunpack.c.l.b16 %v2391
        %v2499 = vunpack.c.l.b16 %v2392
        %v2500 = vunpack.c.l.b16 %v2393
        %v2501 = vunpack.c.l.b16 %v2394
        %v2502 = vunpack.c.l.b16 %v2395
        %v2503 = vunpack.c.l.b16 %v2396
        %v2504 = vunpack.c.l.b16 %v2397
        %v2505 = vunpack.c.l.b16 %v2398
        %v2506 = vunpack.c.l.b16 %v2399
        %v2507 = vunpack.c.l.b16 %v2400
        %v2508 = vunpack.c.l.b16 %v2401
        %v2509 = vunpack.c.l.b16 %v2402
        %v2510 = vunpack.c.l.b16 %v2403
        %v2511 = vunpack.c.l.b16 %v2404
        %v2512 = vunpack.c.l.b16 %v2405
        %v2513 = vunpack.c.l.b16 %v2406
        %v2514 = vunpack.c.l.b16 %v2407
        %v2515 = vunpack.c.l.b16 %v2408
        %v2516 = vpack.c.b16 %v2467, %v2466
        %v2517 = vpack.c.b16 %v2469, %v2468
        %v2518 = vpack.c.b16 %v2471, %v2470
        %v2519 = vpack.c.b16 %v2473, %v2472
        %v2520 = vpack.c.b16 %v2475, %v2474
        %v2521 = vpack.c.b16 %v2477, %v2476
        %v2522 = vpack.c.b16 %v2479, %v2478
        %v2523 = vpack.c.b16 %v2481, %v2480
        %v2524 = vpack.c.b16 %v2483, %v2482
        %v2525 = vpack.c.b16 %v2485, %v2484
        %v2526 = vpack.c.b16 %v2487, %v2486
        %v2527 = vpack.c.b16 %v2489, %v2488
        %v2528 = vpack.c.b16 %v2491, %v2490
        %v2529 = vpack.c.b16 %v2493, %v2492
        %v2530 = vpack.c.b16 %v2495, %v2494
        %v2531 = vpack.c.b16 %v2497, %v2496
        %v2532 = vpack.c.b16 %v2499, %v2498
        %v2533 = vpack.c.b16 %v2501, %v2500
        %v2534 = vpack.c.b16 %v2503, %v2502
        %v2535 = vpack.c.b16 %v2505, %v2504
        %v2536 = vpack.c.b16 %v2507, %v2506
        %v2537 = vpack.c.b16 %v2509, %v2508
        %v2538 = vpack.c.b16 %v2511, %v2510
        %v2539 = vpack.c.b16 %v2513, %v2512
        %v2540 = vpack.c.b16 %v2515, %v2514
        %2566 = vmatprep.subr.bf16.mxu0 0
        %2567 = vmatpush1.bf16.msra.mxu0 %v2516
        %2568 = vmatprep.subr.bf16.mxu0 0
        %2569 = vmatpush1.bf16.msra.mxu0 %v2517
        %2570 = vmatprep.subr.bf16.mxu0 0
        %2571 = vmatpush1.bf16.msra.mxu0 %v2518
        %2572 = vmatprep.subr.bf16.mxu0 0
        %2573 = vmatpush1.bf16.msra.mxu0 %v2519
        %2574 = vmatprep.subr.bf16.mxu0 0
        %2575 = vmatpush1.bf16.msra.mxu0 %v2520
        %2576 = vmatprep.subr.bf16.mxu0 0
        %2577 = vmatpush1.bf16.msra.mxu0 %v2521
        %2578 = vmatprep.subr.bf16.mxu0 0
        %2579 = vmatpush1.bf16.msra.mxu0 %v2522
        %2580 = vmatprep.subr.bf16.mxu0 0
        %2581 = vmatpush1.bf16.msra.mxu0 %v2523
        %2582 = vmatprep.subr.bf16.mxu0 0
        %2583 = vmatpush1.bf16.msra.mxu0 %v2524
        %2584 = vmatprep.subr.bf16.mxu0 0
        %2585 = vmatpush1.bf16.msra.mxu0 %v2525
        %2586 = vmatprep.subr.bf16.mxu0 0
        %2587 = vmatpush1.bf16.msra.mxu0 %v2526
        %2588 = vmatprep.subr.bf16.mxu0 0
        %2589 = vmatpush1.bf16.msra.mxu0 %v2527
        %2590 = vmatprep.subr.bf16.mxu0 0
        %2591 = vmatpush1.bf16.msra.mxu0 %v2528
        %2592 = vmatprep.subr.bf16.mxu0 0
        %2593 = vmatpush1.bf16.msra.mxu0 %v2529
        %2594 = vmatprep.subr.bf16.mxu0 0
        %2595 = vmatpush1.bf16.msra.mxu0 %v2530
        %2596 = vmatprep.subr.bf16.mxu0 0
        %2597 = vmatpush1.bf16.msra.mxu0 %v2531
        %2598 = vmatprep.mubr.bf16.mxu0 %v2065
        %2599 = vmatmul.mubr.bf16.gmra.mrb[0].mxu0 %v2064
        %v2600 = vpop.f32.mrb[0].mxu0
        %v2601 = vadd.f32 %v2414, %v2600
        %v2602 = vpop.f32.mrb[0].mxu0
        %v2603 = vpop.f32.mrb[0].mxu0
        %v2604 = vpop.f32.mrb[0].mxu0
        %2605 = vdwg.mxu0
        %2606 = vmatprep.subr.bf16.mxu0 0
        %2607 = vmatpush1.bf16.msra.mxu0 %v2532
        %2608 = vmatprep.subr.bf16.mxu0 0
        %2609 = vmatpush1.bf16.msra.mxu0 %v2533
        %2610 = vmatprep.subr.bf16.mxu0 0
        %2611 = vmatpush1.bf16.msra.mxu0 %v2534
        %2612 = vmatprep.subr.bf16.mxu0 0
        %2613 = vmatpush1.bf16.msra.mxu0 %v2535
        %2614 = vmatprep.subr.bf16.mxu0 0
        %2615 = vmatpush1.bf16.msra.mxu0 %v2536
        %2616 = vmatprep.subr.bf16.mxu0 0
        %2617 = vmatpush1.bf16.msra.mxu0 %v2537
        %2618 = vmatprep.subr.bf16.mxu0 0
        %2619 = vmatpush1.bf16.msra.mxu0 %v2538
        %2620 = vmatprep.subr.bf16.mxu0 0
        %2621 = vmatpush1.bf16.msra.mxu0 %v2539
        %2622 = vmatprep.subr.bf16.mxu0 0
        %2623 = vmatpush1.bf16.msra.mxu0 %v2540
        %2624 = vmatprep.subr.bf16.mxu0 0
        %2625 = vmatpush1.bf16.msra.mxu0 0
        %2626 = vmatprep.subr.bf16.mxu0 0
        %2627 = vmatpush1.bf16.msra.mxu0 0
        %2628 = vmatprep.subr.bf16.mxu0 0
        %2629 = vmatpush1.bf16.msra.mxu0 0
        %2630 = vmatprep.subr.bf16.mxu0 0
        %2631 = vmatpush1.bf16.msra.mxu0 0
        %2632 = vmatprep.subr.bf16.mxu0 0
        %2633 = vmatpush1.bf16.msra.mxu0 0
        %2634 = vmatprep.subr.bf16.mxu0 0
        %2635 = vmatpush1.bf16.msra.mxu0 0
        %2636 = vmatprep.subr.bf16.mxu0 0
        %2637 = vmatpush1.bf16.msra.mxu0 0
        %2638 = vmatprep.mubr.bf16.mxu0 %v2276
        %2639 = vmatmul.mubr.bf16.gmra.mrb[0].mxu0 %v2066
        %v2640 = vpop.f32.mrb[0].mxu0
        %v2641 = vadd.f32 %v2601, %v2640
        %v2642 = vpop.f32.mrb[0].mxu0
        %v2643 = vpop.f32.mrb[0].mxu0
        %v2644 = vpop.f32.mrb[0].mxu0
        %2645 = vdwg.mxu0
        %v2646 = vmax.f32 %v2641, 0.0
        %v2647 = vmul.f32 %v2646, 0.5
        %v2648 = vmul.f32 %v2647, 1.442695
        %v2649 = vpow.pop %v2648
        %v2650 = vld [vmem:[%s500] sm:$0xff]
        %v2651 = vmul.f32 %v2650, %v2649
        %v2652 = vadd.f32 %v2651, %v2358
        %v2653 = vpack.c.bf16 %v2652, %v2652
        %v2654 = vld [vmem:[%s7] sm:$0xff]
        %v2655 = vld [vmem:[%s7 + $0x8] sm:$0xff]
        %v2656 = vld [vmem:[%s7 + $0x10] sm:$0xff]
        %v2657 = vld [vmem:[%s7 + $0x18] sm:$0xff]
        %v2658 = vld [vmem:[%s7 + $0x20] sm:$0xff]
        %v2659 = vld [vmem:[%s7 + $0x28] sm:$0xff]
        %v2660 = vld [vmem:[%s7 + $0x30] sm:$0xff]
        %v2661 = vld [vmem:[%s7 + $0x38] sm:$0xff]
        %v2662 = vld [vmem:[%s7 + $0x40] sm:$0xff]
        %v2663 = vld [vmem:[%s7 + $0x48] sm:$0xff]
        %v2664 = vld [vmem:[%s7 + $0x50] sm:$0xff]
        %v2665 = vld [vmem:[%s7 + $0x58] sm:$0xff]
        %v2666 = vld [vmem:[%s7 + $0x60] sm:$0xff]
        %v2667 = vld [vmem:[%s7 + $0x68] sm:$0xff]
        %v2668 = vld [vmem:[%s7 + $0x70] sm:$0xff]
        %v2669 = vld [vmem:[%s7 + $0x78] sm:$0xff]
        %v2670 = vld [vmem:[%s7 + $0x80] sm:$0xff]
        %v2671 = vld [vmem:[%s7 + $0x88] sm:$0xff]
        %v2672 = vld [vmem:[%s7 + $0x90] sm:$0xff]
        %v2673 = vld [vmem:[%s7 + $0x98] sm:$0xff]
        %v2674 = vld [vmem:[%s7 + $0xa0] sm:$0xff]
        %v2675 = vld [vmem:[%s7 + $0xa8] sm:$0xff]
        %v2676 = vld [vmem:[%s7 + $0xb0] sm:$0xff]
        %v2677 = vld [vmem:[%s7 + $0xb8] sm:$0xff]
        %v2678 = vld [vmem:[%s7 + $0xc0] sm:$0xff]
        %v2679 = vld [vmem:[%s7 + $0xc8] sm:$0xff]
        %v2680 = vld [vmem:[%s7 + $0xd0] sm:$0xff]
        %v2681 = vld [vmem:[%s7 + $0xd8] sm:$0xff]
        %v2682 = vld [vmem:[%s7 + $0xe0] sm:$0xff]
        %v2683 = vld [vmem:[%s7 + $0xe8] sm:$0xff]
        %v2684 = vld [vmem:[%s7 + $0xf0] sm:$0xff]
        %v2685 = vld [vmem:[%s7 + $0xf8] sm:$0xff]
        %v2686 = vld [vmem:[%s8] sm:$0xf]
        %v2688 = vlaneseq
        %v2689 = vshrl.u32 %v2688, 7
        %v2690 = vsub.s32 0, %v2689
        %v2691 = vrot.slane %v2686, %v2690
        %v2692 = vlaneseq
        %v2693 = vshrl.u32 %v2692, 7
        %v2694 = vsub.s32 1, %v2693
        %v2695 = vrot.slane %v2686, %v2694
        %v2696 = vlaneseq
        %v2697 = vshrl.u32 %v2696, 7
        %v2698 = vsub.s32 2, %v2697
        %v2699 = vrot.slane %v2686, %v2698
        %v2700 = vlaneseq
        %v2701 = vshrl.u32 %v2700, 7
        %v2702 = vsub.s32 3, %v2701
        %v2703 = vrot.slane %v2686, %v2702
        %v2740 = vunpack.c.l.b16 %v2654
        %v2741 = vunpack.c.h.b16 %v2654
        %v2742 = vunpack.c.l.b16 %v2655
        %v2743 = vunpack.c.h.b16 %v2655
        %v2744 = vunpack.c.l.b16 %v2656
        %v2745 = vunpack.c.h.b16 %v2656
        %v2746 = vunpack.c.l.b16 %v2657
        %v2747 = vunpack.c.h.b16 %v2657
        %v2748 = vunpack.c.l.b16 %v2658
        %v2749 = vunpack.c.h.b16 %v2658
        %v2750 = vunpack.c.l.b16 %v2659
        %v2751 = vunpack.c.h.b16 %v2659
        %v2752 = vunpack.c.l.b16 %v2660
        %v2753 = vunpack.c.h.b16 %v2660
        %v2754 = vunpack.c.l.b16 %v2661
        %v2755 = vunpack.c.h.b16 %v2661
        %v2756 = vunpack.c.l.b16 %v2662
        %v2757 = vunpack.c.h.b16 %v2662
        %v2758 = vunpack.c.l.b16 %v2663
        %v2759 = vunpack.c.h.b16 %v2663
        %v2760 = vunpack.c.l.b16 %v2664
        %v2761 = vunpack.c.h.b16 %v2664
        %v2762 = vunpack.c.l.b16 %v2665
        %v2763 = vunpack.c.h.b16 %v2665
        %v2764 = vunpack.c.l.b16 %v2666
        %v2765 = vunpack.c.h.b16 %v2666
        %v2766 = vunpack.c.l.b16 %v2667
        %v2767 = vunpack.c.h.b16 %v2667
        %v2768 = vunpack.c.l.b16 %v2668
        %v2769 = vunpack.c.h.b16 %v2668
        %v2770 = vunpack.c.l.b16 %v2669
        %v2771 = vunpack.c.h.b16 %v2669
        %v2772 = vunpack.c.l.b16 %v2670
        %v2773 = vunpack.c.h.b16 %v2670
        %v2774 = vunpack.c.l.b16 %v2671
        %v2775 = vunpack.c.h.b16 %v2671
        %v2776 = vunpack.c.l.b16 %v2672
        %v2777 = vunpack.c.h.b16 %v2672
        %v2778 = vunpack.c.l.b16 %v2673
        %v2779 = vunpack.c.h.b16 %v2673
        %v2780 = vunpack.c.l.b16 %v2674
        %v2781 = vunpack.c.h.b16 %v2674
        %v2782 = vunpack.c.l.b16 %v2675
        %v2783 = vunpack.c.h.b16 %v2675
        %v2784 = vunpack.c.l.b16 %v2676
        %v2785 = vunpack.c.h.b16 %v2676
        %v2786 = vunpack.c.l.b16 %v2677
        %v2787 = vunpack.c.h.b16 %v2677
        %v2788 = vunpack.c.l.b16 %v2678
        %v2789 = vunpack.c.h.b16 %v2678
        %v2790 = vunpack.c.l.b16 %v2679
        %v2791 = vunpack.c.h.b16 %v2679
        %v2792 = vunpack.c.l.b16 %v2680
        %v2793 = vunpack.c.h.b16 %v2680
        %v2794 = vunpack.c.l.b16 %v2681
        %v2795 = vunpack.c.h.b16 %v2681
        %v2796 = vunpack.c.l.b16 %v2682
        %v2797 = vunpack.c.h.b16 %v2682
        %v2798 = vunpack.c.l.b16 %v2683
        %v2799 = vunpack.c.h.b16 %v2683
        %v2800 = vunpack.c.l.b16 %v2684
        %v2801 = vunpack.c.h.b16 %v2684
        %v2802 = vunpack.c.l.b16 %v2685
        %v2803 = vunpack.c.h.b16 %v2685
        %v2804 = vpack.c.b16 %v2744, %v2740
        %v2805 = vpack.c.b16 %v2745, %v2741
        %v2806 = vpack.c.b16 %v2746, %v2742
        %v2807 = vpack.c.b16 %v2747, %v2743
        %v2808 = vpack.c.b16 %v2752, %v2748
        %v2809 = vpack.c.b16 %v2753, %v2749
        %v2810 = vpack.c.b16 %v2754, %v2750
        %v2811 = vpack.c.b16 %v2755, %v2751
        %v2812 = vpack.c.b16 %v2760, %v2756
        %v2813 = vpack.c.b16 %v2761, %v2757
        %v2814 = vpack.c.b16 %v2762, %v2758
        %v2815 = vpack.c.b16 %v2763, %v2759
        %v2816 = vpack.c.b16 %v2768, %v2764
        %v2817 = vpack.c.b16 %v2769, %v2765
        %v2818 = vpack.c.b16 %v2770, %v2766
        %v2819 = vpack.c.b16 %v2771, %v2767
        %v2820 = vpack.c.b16 %v2776, %v2772
        %v2821 = vpack.c.b16 %v2777, %v2773
        %v2822 = vpack.c.b16 %v2778, %v2774
        %v2823 = vpack.c.b16 %v2779, %v2775
        %v2824 = vpack.c.b16 %v2784, %v2780
        %v2825 = vpack.c.b16 %v2785, %v2781
        %v2826 = vpack.c.b16 %v2786, %v2782
        %v2827 = vpack.c.b16 %v2787, %v2783
        %v2828 = vpack.c.b16 %v2792, %v2788
        %v2829 = vpack.c.b16 %v2793, %v2789
        %v2830 = vpack.c.b16 %v2794, %v2790
        %v2831 = vpack.c.b16 %v2795, %v2791
        %v2832 = vpack.c.b16 %v2800, %v2796
        %v2833 = vpack.c.b16 %v2801, %v2797
        %v2834 = vpack.c.b16 %v2802, %v2798
        %v2835 = vpack.c.b16 %v2803, %v2799
        %2868 = vmatprep.subr.bf16.mxu0 %v2805
        %2869 = vmatpush1.bf16.msra.mxu0 %v2804
        %2870 = vmatprep.subr.bf16.mxu0 %v2809
        %2871 = vmatpush1.bf16.msra.mxu0 %v2808
        %2872 = vmatprep.subr.bf16.mxu0 %v2813
        %2873 = vmatpush1.bf16.msra.mxu0 %v2812
        %2874 = vmatprep.subr.bf16.mxu0 %v2817
        %2875 = vmatpush1.bf16.msra.mxu0 %v2816
        %2876 = vmatprep.subr.bf16.mxu0 %v2821
        %2877 = vmatpush1.bf16.msra.mxu0 %v2820
        %2878 = vmatprep.subr.bf16.mxu0 %v2825
        %2879 = vmatpush1.bf16.msra.mxu0 %v2824
        %2880 = vmatprep.subr.bf16.mxu0 %v2829
        %2881 = vmatpush1.bf16.msra.mxu0 %v2828
        %2882 = vmatprep.subr.bf16.mxu0 %v2833
        %2883 = vmatpush1.bf16.msra.mxu0 %v2832
        %2884 = vmatprep.subr.bf16.mxu0 0
        %2885 = vmatpush1.bf16.msra.mxu0 0
        %2886 = vmatprep.subr.bf16.mxu0 0
        %2887 = vmatpush1.bf16.msra.mxu0 0
        %2888 = vmatprep.subr.bf16.mxu0 0
        %2889 = vmatpush1.bf16.msra.mxu0 0
        %2890 = vmatprep.subr.bf16.mxu0 0
        %2891 = vmatpush1.bf16.msra.mxu0 0
        %2892 = vmatprep.subr.bf16.mxu0 0
        %2893 = vmatpush1.bf16.msra.mxu0 0
        %2894 = vmatprep.subr.bf16.mxu0 0
        %2895 = vmatpush1.bf16.msra.mxu0 0
        %2896 = vmatprep.subr.bf16.mxu0 0
        %2897 = vmatpush1.bf16.msra.mxu0 0
        %2898 = vmatprep.subr.bf16.mxu0 0
        %2899 = vmatpush1.bf16.msra.mxu0 0
        %2900 = vmatprep.mubr.bf16.mxu0 0
        %2901 = vmatmul.mubr.bf16.gmra.mrb[0].mxu0 %v2653
        %v2902 = vpop.f32.mrb[0].mxu0
        %v2903 = vadd.f32 %v2691, %v2902
        %v2904 = vpop.f32.mrb[0].mxu0
        %v2905 = vadd.f32 %v2695, %v2904
        %v2906 = vpop.f32.mrb[0].mxu0
        %v2907 = vpop.f32.mrb[0].mxu0
        %2908 = vdwg.mxu0
        %2909 = vmatprep.subr.bf16.mxu0 %v2807
        %2910 = vmatpush1.bf16.msra.mxu0 %v2806
        %2911 = vmatprep.subr.bf16.mxu0 %v2811
        %2912 = vmatpush1.bf16.msra.mxu0 %v2810
        %2913 = vmatprep.subr.bf16.mxu0 %v2815
        %2914 = vmatpush1.bf16.msra.mxu0 %v2814
        %2915 = vmatprep.subr.bf16.mxu0 %v2819
        %2916 = vmatpush1.bf16.msra.mxu0 %v2818
        %2917 = vmatprep.subr.bf16.mxu0 %v2823
        %2918 = vmatpush1.bf16.msra.mxu0 %v2822
        %2919 = vmatprep.subr.bf16.mxu0 %v2827
        %2920 = vmatpush1.bf16.msra.mxu0 %v2826
        %2921 = vmatprep.subr.bf16.mxu0 %v2831
        %2922 = vmatpush1.bf16.msra.mxu0 %v2830
        %2923 = vmatprep.subr.bf16.mxu0 %v2835
        %2924 = vmatpush1.bf16.msra.mxu0 %v2834
        %2925 = vmatprep.subr.bf16.mxu0 0
        %2926 = vmatpush1.bf16.msra.mxu0 0
        %2927 = vmatprep.subr.bf16.mxu0 0
        %2928 = vmatpush1.bf16.msra.mxu0 0
        %2929 = vmatprep.subr.bf16.mxu0 0
        %2930 = vmatpush1.bf16.msra.mxu0 0
        %2931 = vmatprep.subr.bf16.mxu0 0
        %2932 = vmatpush1.bf16.msra.mxu0 0
        %2933 = vmatprep.subr.bf16.mxu0 0
        %2934 = vmatpush1.bf16.msra.mxu0 0
        %2935 = vmatprep.subr.bf16.mxu0 0
        %2936 = vmatpush1.bf16.msra.mxu0 0
        %2937 = vmatprep.subr.bf16.mxu0 0
        %2938 = vmatpush1.bf16.msra.mxu0 0
        %2939 = vmatprep.subr.bf16.mxu0 0
        %2940 = vmatpush1.bf16.msra.mxu0 0
        %2941 = vmatprep.mubr.bf16.mxu0 0
        %2942 = vmatmul.mubr.bf16.gmra.mrb[0].mxu0 %v2653
        %v2943 = vpop.f32.mrb[0].mxu0
        %v2944 = vadd.f32 %v2699, %v2943
        %v2945 = vpop.f32.mrb[0].mxu0
        %v2946 = vadd.f32 %v2703, %v2945
        %v2947 = vpop.f32.mrb[0].mxu0
        %v2948 = vpop.f32.mrb[0].mxu0
        %2949 = vdwg.mxu0
        %v2950 = vmax.f32 %v2903, 0.0
        %v2951 = vmax.f32 %v2905, 0.0
        %v2952 = vmax.f32 %v2944, 0.0
        %v2953 = vmax.f32 %v2946, 0.0
        %v2954 = vpack.c.bf16 %v2950, %v2950
        %v2955 = vpack.c.bf16 %v2951, %v2951
        %v2956 = vpack.c.bf16 %v2952, %v2952
        %v2957 = vpack.c.bf16 %v2953, %v2953
        %v2958 = vld [vmem:[%s9] sm:$0xff]
        %v2959 = vld [vmem:[%s9 + $0x8] sm:$0xff]
        %v2960 = vld [vmem:[%s9 + $0x10] sm:$0xff]
        %v2961 = vld [vmem:[%s9 + $0x18] sm:$0xf]
        %v2962 = vld [vmem:[%s9 + $0x1c] sm:$0xff]
        %v2963 = vld [vmem:[%s9 + $0x24] sm:$0xff]
        %v2964 = vld [vmem:[%s9 + $0x2c] sm:$0xff]
        %v2965 = vld [vmem:[%s9 + $0x34] sm:$0xf]
        %v2966 = vld [vmem:[%s9 + $0x38] sm:$0xff]
        %v2967 = vld [vmem:[%s9 + $0x40] sm:$0xff]
        %v2968 = vld [vmem:[%s9 + $0x48] sm:$0xff]
        %v2969 = vld [vmem:[%s9 + $0x50] sm:$0xf]
        %v2970 = vld [vmem:[%s9 + $0x54] sm:$0xff]
        %v2971 = vld [vmem:[%s9 + $0x5c] sm:$0xff]
        %v2972 = vld [vmem:[%s9 + $0x64] sm:$0xff]
        %v2973 = vld [vmem:[%s9 + $0x6c] sm:$0xf]
        %v2974 = vld [vmem:[%s9 + $0x70] sm:$0xff]
        %v2975 = vld [vmem:[%s9 + $0x78] sm:$0xff]
        %v2976 = vld [vmem:[%s9 + $0x80] sm:$0xff]
        %v2977 = vld [vmem:[%s9 + $0x88] sm:$0xf]
        %v2978 = vld [vmem:[%s9 + $0x8c] sm:$0xff]
        %v2979 = vld [vmem:[%s9 + $0x94] sm:$0xff]
        %v2980 = vld [vmem:[%s9 + $0x9c] sm:$0xff]
        %v2981 = vld [vmem:[%s9 + $0xa4] sm:$0xf]
        %v2982 = vld [vmem:[%s9 + $0xa8] sm:$0xff]
        %v2983 = vld [vmem:[%s9 + $0xb0] sm:$0xff]
        %v2984 = vld [vmem:[%s9 + $0xb8] sm:$0xff]
        %v2985 = vld [vmem:[%s9 + $0xc0] sm:$0xf]
        %v2986 = vld [vmem:[%s9 + $0xc4] sm:$0xff]
        %v2987 = vld [vmem:[%s9 + $0xcc] sm:$0xff]
        %v2988 = vld [vmem:[%s9 + $0xd4] sm:$0xff]
        %v2989 = vld [vmem:[%s9 + $0xdc] sm:$0xf]
        %v2990 = vld [vmem:[%s9 + $0xe0] sm:$0xff]
        %v2991 = vld [vmem:[%s9 + $0xe8] sm:$0xff]
        %v2992 = vld [vmem:[%s9 + $0xf0] sm:$0xff]
        %v2993 = vld [vmem:[%s9 + $0xf8] sm:$0xf]
        %v2994 = vld [vmem:[%s9 + $0xfc] sm:$0xff]
        %v2995 = vld [vmem:[%s9 + $0x104] sm:$0xff]
        %v2996 = vld [vmem:[%s9 + $0x10c] sm:$0xff]
        %v2997 = vld [vmem:[%s9 + $0x114] sm:$0xf]
        %v2998 = vld [vmem:[%s9 + $0x118] sm:$0xff]
        %v2999 = vld [vmem:[%s9 + $0x120] sm:$0xff]
        %v3000 = vld [vmem:[%s9 + $0x128] sm:$0xff]
        %v3001 = vld [vmem:[%s9 + $0x130] sm:$0xf]
        %v3002 = vld [vmem:[%s9 + $0x134] sm:$0xff]
        %v3003 = vld [vmem:[%s9 + $0x13c] sm:$0xff]
        %v3004 = vld [vmem:[%s9 + $0x144] sm:$0xff]
        %v3005 = vld [vmem:[%s9 + $0x14c] sm:$0xf]
        %v3006 = vld [vmem:[%s9 + $0x150] sm:$0xff]
        %v3007 = vld [vmem:[%s9 + $0x158] sm:$0xff]
        %v3008 = vld [vmem:[%s9 + $0x160] sm:$0xff]
        %v3009 = vld [vmem:[%s9 + $0x168] sm:$0xf]
        %v3010 = vld [vmem:[%s9 + $0x16c] sm:$0xff]
        %v3011 = vld [vmem:[%s9 + $0x174] sm:$0xff]
        %v3012 = vld [vmem:[%s9 + $0x17c] sm:$0xff]
        %v3013 = vld [vmem:[%s9 + $0x184] sm:$0xf]
        %v3014 = vld [vmem:[%s9 + $0x188] sm:$0xff]
        %v3015 = vld [vmem:[%s9 + $0x190] sm:$0xff]
        %v3016 = vld [vmem:[%s9 + $0x198] sm:$0xff]
        %v3017 = vld [vmem:[%s9 + $0x1a0] sm:$0xf]
        %v3018 = vld [vmem:[%s9 + $0x1a4] sm:$0xff]
        %v3019 = vld [vmem:[%s9 + $0x1ac] sm:$0xff]
        %v3020 = vld [vmem:[%s9 + $0x1b4] sm:$0xff]
        %v3021 = vld [vmem:[%s9 + $0x1bc] sm:$0xf]
        %v3022 = vld [vmem:[%s9 + $0x1c0] sm:$0xff]
        %v3023 = vld [vmem:[%s9 + $0x1c8] sm:$0xff]
        %v3024 = vld [vmem:[%s9 + $0x1d0] sm:$0xff]
        %v3025 = vld [vmem:[%s9 + $0x1d8] sm:$0xf]
        %v3026 = vld [vmem:[%s9 + $0x1dc] sm:$0xff]
        %v3027 = vld [vmem:[%s9 + $0x1e4] sm:$0xff]
        %v3028 = vld [vmem:[%s9 + $0x1ec] sm:$0xff]
        %v3029 = vld [vmem:[%s9 + $0x1f4] sm:$0xf]
        %v3030 = vld [vmem:[%s9 + $0x1f8] sm:$0xff]
        %v3031 = vld [vmem:[%s9 + $0x200] sm:$0xff]
        %v3032 = vld [vmem:[%s9 + $0x208] sm:$0xff]
        %v3033 = vld [vmem:[%s9 + $0x210] sm:$0xf]
        %v3034 = vld [vmem:[%s9 + $0x214] sm:$0xff]
        %v3035 = vld [vmem:[%s9 + $0x21c] sm:$0xff]
        %v3036 = vld [vmem:[%s9 + $0x224] sm:$0xff]
        %v3037 = vld [vmem:[%s9 + $0x22c] sm:$0xf]
        %v3038 = vld [vmem:[%s9 + $0x230] sm:$0xff]
        %v3039 = vld [vmem:[%s9 + $0x238] sm:$0xff]
        %v3040 = vld [vmem:[%s9 + $0x240] sm:$0xff]
        %v3041 = vld [vmem:[%s9 + $0x248] sm:$0xf]
        %v3042 = vld [vmem:[%s9 + $0x24c] sm:$0xff]
        %v3043 = vld [vmem:[%s9 + $0x254] sm:$0xff]
        %v3044 = vld [vmem:[%s9 + $0x25c] sm:$0xff]
        %v3045 = vld [vmem:[%s9 + $0x264] sm:$0xf]
        %v3046 = vld [vmem:[%s9 + $0x268] sm:$0xff]
        %v3047 = vld [vmem:[%s9 + $0x270] sm:$0xff]
        %v3048 = vld [vmem:[%s9 + $0x278] sm:$0xff]
        %v3049 = vld [vmem:[%s9 + $0x280] sm:$0xf]
        %v3050 = vld [vmem:[%s9 + $0x284] sm:$0xff]
        %v3051 = vld [vmem:[%s9 + $0x28c] sm:$0xff]
        %v3052 = vld [vmem:[%s9 + $0x294] sm:$0xff]
        %v3053 = vld [vmem:[%s9 + $0x29c] sm:$0xf]
        %v3054 = vld [vmem:[%s9 + $0x2a0] sm:$0xff]
        %v3055 = vld [vmem:[%s9 + $0x2a8] sm:$0xff]
        %v3056 = vld [vmem:[%s9 + $0x2b0] sm:$0xff]
        %v3057 = vld [vmem:[%s9 + $0x2b8] sm:$0xf]
        %v3058 = vld [vmem:[%s9 + $0x2bc] sm:$0xff]
        %v3059 = vld [vmem:[%s9 + $0x2c4] sm:$0xff]
        %v3060 = vld [vmem:[%s9 + $0x2cc] sm:$0xff]
        %v3061 = vld [vmem:[%s9 + $0x2d4] sm:$0xf]
        %v3062 = vld [vmem:[%s9 + $0x2d8] sm:$0xff]
        %v3063 = vld [vmem:[%s9 + $0x2e0] sm:$0xff]
        %v3064 = vld [vmem:[%s9 + $0x2e8] sm:$0xff]
        %v3065 = vld [vmem:[%s9 + $0x2f0] sm:$0xf]
        %v3066 = vld [vmem:[%s9 + $0x2f4] sm:$0xff]
        %v3067 = vld [vmem:[%s9 + $0x2fc] sm:$0xff]
        %v3068 = vld [vmem:[%s9 + $0x304] sm:$0xff]
        %v3069 = vld [vmem:[%s9 + $0x30c] sm:$0xf]
        %v3070 = vld [vmem:[%s9 + $0x310] sm:$0xff]
        %v3071 = vld [vmem:[%s9 + $0x318] sm:$0xff]
        %v3072 = vld [vmem:[%s9 + $0x320] sm:$0xff]
        %v3073 = vld [vmem:[%s9 + $0x328] sm:$0xf]
        %v3074 = vld [vmem:[%s9 + $0x32c] sm:$0xff]
        %v3075 = vld [vmem:[%s9 + $0x334] sm:$0xff]
        %v3076 = vld [vmem:[%s9 + $0x33c] sm:$0xff]
        %v3077 = vld [vmem:[%s9 + $0x344] sm:$0xf]
        %v3078 = vld [vmem:[%s9 + $0x348] sm:$0xff]
        %v3079 = vld [vmem:[%s9 + $0x350] sm:$0xff]
        %v3080 = vld [vmem:[%s9 + $0x358] sm:$0xff]
        %v3081 = vld [vmem:[%s9 + $0x360] sm:$0xf]
        %v3082 = vld [vmem:[%s9 + $0x364] sm:$0xff]
        %v3083 = vld [vmem:[%s9 + $0x36c] sm:$0xff]
        %v3084 = vld [vmem:[%s9 + $0x374] sm:$0xff]
        %v3085 = vld [vmem:[%s9 + $0x37c] sm:$0xf]
        %v3086 = vld [vmem:[%s9 + $0x380] sm:$0xff]
        %v3087 = vld [vmem:[%s9 + $0x388] sm:$0xff]
        %v3088 = vld [vmem:[%s9 + $0x390] sm:$0xff]
        %v3089 = vld [vmem:[%s9 + $0x398] sm:$0xf]
        %v3090 = vld [vmem:[%s9 + $0x39c] sm:$0xff]
        %v3091 = vld [vmem:[%s9 + $0x3a4] sm:$0xff]
        %v3092 = vld [vmem:[%s9 + $0x3ac] sm:$0xff]
        %v3093 = vld [vmem:[%s9 + $0x3b4] sm:$0xf]
        %v3094 = vld [vmem:[%s9 + $0x3b8] sm:$0xff]
        %v3095 = vld [vmem:[%s9 + $0x3c0] sm:$0xff]
        %v3096 = vld [vmem:[%s9 + $0x3c8] sm:$0xff]
        %v3097 = vld [vmem:[%s9 + $0x3d0] sm:$0xf]
        %v3098 = vld [vmem:[%s9 + $0x3d4] sm:$0xff]
        %v3099 = vld [vmem:[%s9 + $0x3dc] sm:$0xff]
        %v3100 = vld [vmem:[%s9 + $0x3e4] sm:$0xff]
        %v3101 = vld [vmem:[%s9 + $0x3ec] sm:$0xf]
        %v3102 = vld [vmem:[%s9 + $0x3f0] sm:$0xff]
        %v3103 = vld [vmem:[%s9 + $0x3f8] sm:$0xff]
        %v3104 = vld [vmem:[%s9 + $0x400] sm:$0xff]
        %v3105 = vld [vmem:[%s9 + $0x408] sm:$0xf]
        %v3106 = vld [vmem:[%s9 + $0x40c] sm:$0xff]
        %v3107 = vld [vmem:[%s9 + $0x414] sm:$0xff]
        %v3108 = vld [vmem:[%s9 + $0x41c] sm:$0xff]
        %v3109 = vld [vmem:[%s9 + $0x424] sm:$0xf]
        %v3110 = vld [vmem:[%s9 + $0x428] sm:$0xff]
        %v3111 = vld [vmem:[%s9 + $0x430] sm:$0xff]
        %v3112 = vld [vmem:[%s9 + $0x438] sm:$0xff]
        %v3113 = vld [vmem:[%s9 + $0x440] sm:$0xf]
        %v3114 = vld [vmem:[%s9 + $0x444] sm:$0xff]
        %v3115 = vld [vmem:[%s9 + $0x44c] sm:$0xff]
        %v3116 = vld [vmem:[%s9 + $0x454] sm:$0xff]
        %v3117 = vld [vmem:[%s9 + $0x45c] sm:$0xf]
        %v3118 = vld [vmem:[%s9 + $0x460] sm:$0xff]
        %v3119 = vld [vmem:[%s9 + $0x468] sm:$0xff]
        %v3120 = vld [vmem:[%s9 + $0x470] sm:$0xff]
        %v3121 = vld [vmem:[%s9 + $0x478] sm:$0xf]
        %v3122 = vld [vmem:[%s9 + $0x47c] sm:$0xff]
        %v3123 = vld [vmem:[%s9 + $0x484] sm:$0xff]
        %v3124 = vld [vmem:[%s9 + $0x48c] sm:$0xff]
        %v3125 = vld [vmem:[%s9 + $0x494] sm:$0xf]
        %v3126 = vld [vmem:[%s9 + $0x498] sm:$0xff]
        %v3127 = vld [vmem:[%s9 + $0x4a0] sm:$0xff]
        %v3128 = vld [vmem:[%s9 + $0x4a8] sm:$0xff]
        %v3129 = vld [vmem:[%s9 + $0x4b0] sm:$0xf]
        %v3130 = vld [vmem:[%s9 + $0x4b4] sm:$0xff]
        %v3131 = vld [vmem:[%s9 + $0x4bc] sm:$0xff]
        %v3132 = vld [vmem:[%s9 + $0x4c4] sm:$0xff]
        %v3133 = vld [vmem:[%s9 + $0x4cc] sm:$0xf]
        %v3134 = vld [vmem:[%s9 + $0x4d0] sm:$0xff]
        %v3135 = vld [vmem:[%s9 + $0x4d8] sm:$0xff]
        %v3136 = vld [vmem:[%s9 + $0x4e0] sm:$0xff]
        %v3137 = vld [vmem:[%s9 + $0x4e8] sm:$0xf]
        %v3138 = vld [vmem:[%s9 + $0x4ec] sm:$0xff]
        %v3139 = vld [vmem:[%s9 + $0x4f4] sm:$0xff]
        %v3140 = vld [vmem:[%s9 + $0x4fc] sm:$0xff]
        %v3141 = vld [vmem:[%s9 + $0x504] sm:$0xf]
        %v3142 = vld [vmem:[%s9 + $0x508] sm:$0xff]
        %v3143 = vld [vmem:[%s9 + $0x510] sm:$0xff]
        %v3144 = vld [vmem:[%s9 + $0x518] sm:$0xff]
        %v3145 = vld [vmem:[%s9 + $0x520] sm:$0xf]
        %v3146 = vld [vmem:[%s9 + $0x524] sm:$0xff]
        %v3147 = vld [vmem:[%s9 + $0x52c] sm:$0xff]
        %v3148 = vld [vmem:[%s9 + $0x534] sm:$0xff]
        %v3149 = vld [vmem:[%s9 + $0x53c] sm:$0xf]
        %v3150 = vld [vmem:[%s9 + $0x540] sm:$0xff]
        %v3151 = vld [vmem:[%s9 + $0x548] sm:$0xff]
        %v3152 = vld [vmem:[%s9 + $0x550] sm:$0xff]
        %v3153 = vld [vmem:[%s9 + $0x558] sm:$0xf]
        %v3154 = vld [vmem:[%s9 + $0x55c] sm:$0xff]
        %v3155 = vld [vmem:[%s9 + $0x564] sm:$0xff]
        %v3156 = vld [vmem:[%s9 + $0x56c] sm:$0xff]
        %v3157 = vld [vmem:[%s9 + $0x574] sm:$0xf]
        %v3158 = vld [vmem:[%s10] sm:$0x7f]
        %v3160 = vlaneseq
        %v3161 = vshrl.u32 %v3160, 7
        %v3162 = vsub.s32 0, %v3161
        %v3163 = vrot.slane %v3158, %v3162
        %v3164 = vlaneseq
        %v3165 = vshrl.u32 %v3164, 7
        %v3166 = vsub.s32 1, %v3165
        %v3167 = vrot.slane %v3158, %v3166
        %v3168 = vlaneseq
        %v3169 = vshrl.u32 %v3168, 7
        %v3170 = vsub.s32 2, %v3169
        %v3171 = vrot.slane %v3158, %v3170
        %v3172 = vlaneseq
        %v3173 = vshrl.u32 %v3172, 7
        %v3174 = vsub.s32 3, %v3173
        %v3175 = vrot.slane %v3158, %v3174
        %v3176 = vlaneseq
        %v3177 = vshrl.u32 %v3176, 7
        %v3178 = vsub.s32 4, %v3177
        %v3179 = vrot.slane %v3158, %v3178
        %v3180 = vlaneseq
        %v3181 = vshrl.u32 %v3180, 7
        %v3182 = vsub.s32 5, %v3181
        %v3183 = vrot.slane %v3158, %v3182
        %v3184 = vlaneseq
        %v3185 = vshrl.u32 %v3184, 7
        %v3186 = vsub.s32 6, %v3185
        %v3187 = vrot.slane %v3158, %v3186
        %v3395 = vunpack.c.l.b16 %v2958
        %v3396 = vunpack.c.h.b16 %v2958
        %v3397 = vunpack.c.l.b16 %v2959
        %v3398 = vunpack.c.h.b16 %v2959
        %v3399 = vunpack.c.l.b16 %v2960
        %v3400 = vunpack.c.h.b16 %v2960
        %v3401 = vunpack.c.l.b16 %v2961
        %v3402 = vunpack.c.l.b16 %v2962
        %v3403 = vunpack.c.h.b16 %v2962
        %v3404 = vunpack.c.l.b16 %v2963
        %v3405 = vunpack.c.h.b16 %v2963
        %v3406 = vunpack.c.l.b16 %v2964
        %v3407 = vunpack.c.h.b16 %v2964
        %v3408 = vunpack.c.l.b16 %v2965
        %v3409 = vunpack.c.l.b16 %v2966
        %v3410 = vunpack.c.h.b16 %v2966
        %v3411 = vunpack.c.l.b16 %v2967
        %v3412 = vunpack.c.h.b16 %v2967
        %v3413 = vunpack.c.l.b16 %v2968
        %v3414 = vunpack.c.h.b16 %v2968
        %v3415 = vunpack.c.l.b16 %v2969
        %v3416 = vunpack.c.l.b16 %v2970
        %v3417 = vunpack.c.h.b16 %v2970
        %v3418 = vunpack.c.l.b16 %v2971
        %v3419 = vunpack.c.h.b16 %v2971
        %v3420 = vunpack.c.l.b16 %v2972
        %v3421 = vunpack.c.h.b16 %v2972
        %v3422 = vunpack.c.l.b16 %v2973
        %v3423 = vunpack.c.l.b16 %v2974
        %v3424 = vunpack.c.h.b16 %v2974
        %v3425 = vunpack.c.l.b16 %v2975
        %v3426 = vunpack.c.h.b16 %v2975
        %v3427 = vunpack.c.l.b16 %v2976
        %v3428 = vunpack.c.h.b16 %v2976
        %v3429 = vunpack.c.l.b16 %v2977
        %v3430 = vunpack.c.l.b16 %v2978
        %v3431 = vunpack.c.h.b16 %v2978
        %v3432 = vunpack.c.l.b16 %v2979
        %v3433 = vunpack.c.h.b16 %v2979
        %v3434 = vunpack.c.l.b16 %v2980
        %v3435 = vunpack.c.h.b16 %v2980
        %v3436 = vunpack.c.l.b16 %v2981
        %v3437 = vunpack.c.l.b16 %v2982
        %v3438 = vunpack.c.h.b16 %v2982
        %v3439 = vunpack.c.l.b16 %v2983
        %v3440 = vunpack.c.h.b16 %v2983
        %v3441 = vunpack.c.l.b16 %v2984
        %v3442 = vunpack.c.h.b16 %v2984
        %v3443 = vunpack.c.l.b16 %v2985
        %v3444 = vunpack.c.l.b16 %v2986
        %v3445 = vunpack.c.h.b16 %v2986
        %v3446 = vunpack.c.l.b16 %v2987
        %v3447 = vunpack.c.h.b16 %v2987
        %v3448 = vunpack.c.l.b16 %v2988
        %v3449 = vunpack.c.h.b16 %v2988
        %v3450 = vunpack.c.l.b16 %v2989
        %v3451 = vunpack.c.l.b16 %v2990
        %v3452 = vunpack.c.h.b16 %v2990
        %v3453 = vunpack.c.l.b16 %v2991
        %v3454 = vunpack.c.h.b16 %v2991
        %v3455 = vunpack.c.l.b16 %v2992
        %v3456 = vunpack.c.h.b16 %v2992
        %v3457 = vunpack.c.l.b16 %v2993
        %v3458 = vunpack.c.l.b16 %v2994
        %v3459 = vunpack.c.h.b16 %v2994
        %v3460 = vunpack.c.l.b16 %v2995
        %v3461 = vunpack.c.h.b16 %v2995
        %v3462 = vunpack.c.l.b16 %v2996
        %v3463 = vunpack.c.h.b16 %v2996
        %v3464 = vunpack.c.l.b16 %v2997
        %v3465 = vunpack.c.l.b16 %v2998
        %v3466 = vunpack.c.h.b16 %v2998
        %v3467 = vunpack.c.l.b16 %v2999
        %v3468 = vunpack.c.h.b16 %v2999
        %v3469 = vunpack.c.l.b16 %v3000
        %v3470 = vunpack.c.h.b16 %v3000
        %v3471 = vunpack.c.l.b16 %v3001
        %v3472 = vunpack.c.l.b16 %v3002
        %v3473 = vunpack.c.h.b16 %v3002
        %v3474 = vunpack.c.l.b16 %v3003
        %v3475 = vunpack.c.h.b16 %v3003
        %v3476 = vunpack.c.l.b16 %v3004
        %v3477 = vunpack.c.h.b16 %v3004
        %v3478 = vunpack.c.l.b16 %v3005
        %v3479 = vunpack.c.l.b16 %v3006
        %v3480 = vunpack.c.h.b16 %v3006
        %v3481 = vunpack.c.l.b16 %v3007
        %v3482 = vunpack.c.h.b16 %v3007
        %v3483 = vunpack.c.l.b16 %v3008
        %v3484 = vunpack.c.h.b16 %v3008
        %v3485 = vunpack.c.l.b16 %v3009
        %v3486 = vunpack.c.l.b16 %v3010
        %v3487 = vunpack.c.h.b16 %v3010
        %v3488 = vunpack.c.l.b16 %v3011
        %v3489 = vunpack.c.h.b16 %v3011
        %v3490 = vunpack.c.l.b16 %v3012
        %v3491 = vunpack.c.h.b16 %v3012
        %v3492 = vunpack.c.l.b16 %v3013
        %v3493 = vunpack.c.l.b16 %v3014
        %v3494 = vunpack.c.h.b16 %v3014
        %v3495 = vunpack.c.l.b16 %v3015
        %v3496 = vunpack.c.h.b16 %v3015
        %v3497 = vunpack.c.l.b16 %v3016
        %v3498 = vunpack.c.h.b16 %v3016
        %v3499 = vunpack.c.l.b16 %v3017
        %v3500 = vunpack.c.l.b16 %v3018
        %v3501 = vunpack.c.h.b16 %v3018
        %v3502 = vunpack.c.l.b16 %v3019
        %v3503 = vunpack.c.h.b16 %v3019
        %v3504 = vunpack.c.l.b16 %v3020
        %v3505 = vunpack.c.h.b16 %v3020
        %v3506 = vunpack.c.l.b16 %v3021
        %v3507 = vunpack.c.l.b16 %v3022
        %v3508 = vunpack.c.h.b16 %v3022
        %v3509 = vunpack.c.l.b16 %v3023
        %v3510 = vunpack.c.h.b16 %v3023
        %v3511 = vunpack.c.l.b16 %v3024
        %v3512 = vunpack.c.h.b16 %v3024
        %v3513 = vunpack.c.l.b16 %v3025
        %v3514 = vunpack.c.l.b16 %v3026
        %v3515 = vunpack.c.h.b16 %v3026
        %v3516 = vunpack.c.l.b16 %v3027
        %v3517 = vunpack.c.h.b16 %v3027
        %v3518 = vunpack.c.l.b16 %v3028
        %v3519 = vunpack.c.h.b16 %v3028
        %v3520 = vunpack.c.l.b16 %v3029
        %v3521 = vunpack.c.l.b16 %v3030
        %v3522 = vunpack.c.h.b16 %v3030
        %v3523 = vunpack.c.l.b16 %v3031
        %v3524 = vunpack.c.h.b16 %v3031
        %v3525 = vunpack.c.l.b16 %v3032
        %v3526 = vunpack.c.h.b16 %v3032
        %v3527 = vunpack.c.l.b16 %v3033
        %v3528 = vunpack.c.l.b16 %v3034
        %v3529 = vunpack.c.h.b16 %v3034
        %v3530 = vunpack.c.l.b16 %v3035
        %v3531 = vunpack.c.h.b16 %v3035
        %v3532 = vunpack.c.l.b16 %v3036
        %v3533 = vunpack.c.h.b16 %v3036
        %v3534 = vunpack.c.l.b16 %v3037
        %v3535 = vunpack.c.l.b16 %v3038
        %v3536 = vunpack.c.h.b16 %v3038
        %v3537 = vunpack.c.l.b16 %v3039
        %v3538 = vunpack.c.h.b16 %v3039
        %v3539 = vunpack.c.l.b16 %v3040
        %v3540 = vunpack.c.h.b16 %v3040
        %v3541 = vunpack.c.l.b16 %v3041
        %v3542 = vunpack.c.l.b16 %v3042
        %v3543 = vunpack.c.h.b16 %v3042
        %v3544 = vunpack.c.l.b16 %v3043
        %v3545 = vunpack.c.h.b16 %v3043
        %v3546 = vunpack.c.l.b16 %v3044
        %v3547 = vunpack.c.h.b16 %v3044
        %v3548 = vunpack.c.l.b16 %v3045
        %v3549 = vunpack.c.l.b16 %v3046
        %v3550 = vunpack.c.h.b16 %v3046
        %v3551 = vunpack.c.l.b16 %v3047
        %v3552 = vunpack.c.h.b16 %v3047
        %v3553 = vunpack.c.l.b16 %v3048
        %v3554 = vunpack.c.h.b16 %v3048
        %v3555 = vunpack.c.l.b16 %v3049
        %v3556 = vunpack.c.l.b16 %v3050
        %v3557 = vunpack.c.h.b16 %v3050
        %v3558 = vunpack.c.l.b16 %v3051
        %v3559 = vunpack.c.h.b16 %v3051
        %v3560 = vunpack.c.l.b16 %v3052
        %v3561 = vunpack.c.h.b16 %v3052
        %v3562 = vunpack.c.l.b16 %v3053
        %v3563 = vunpack.c.l.b16 %v3054
        %v3564 = vunpack.c.h.b16 %v3054
        %v3565 = vunpack.c.l.b16 %v3055
        %v3566 = vunpack.c.h.b16 %v3055
        %v3567 = vunpack.c.l.b16 %v3056
        %v3568 = vunpack.c.h.b16 %v3056
        %v3569 = vunpack.c.l.b16 %v3057
        %v3570 = vunpack.c.l.b16 %v3058
        %v3571 = vunpack.c.h.b16 %v3058
        %v3572 = vunpack.c.l.b16 %v3059
        %v3573 = vunpack.c.h.b16 %v3059
        %v3574 = vunpack.c.l.b16 %v3060
        %v3575 = vunpack.c.h.b16 %v3060
        %v3576 = vunpack.c.l.b16 %v3061
        %v3577 = vunpack.c.l.b16 %v3062
        %v3578 = vunpack.c.h.b16 %v3062
        %v3579 = vunpack.c.l.b16 %v3063
        %v3580 = vunpack.c.h.b16 %v3063
        %v3581 = vunpack.c.l.b16 %v3064
        %v3582 = vunpack.c.h.b16 %v3064
        %v3583 = vunpack.c.l.b16 %v3065
        %v3584 = vunpack.c.l.b16 %v3066
        %v3585 = vunpack.c.h.b16 %v3066
        %v3586 = vunpack.c.l.b16 %v3067
        %v3587 = vunpack.c.h.b16 %v3067
        %v3588 = vunpack.c.l.b16 %v3068
        %v3589 = vunpack.c.h.b16 %v3068
        %v3590 = vunpack.c.l.b16 %v3069
        %v3591 = vunpack.c.l.b16 %v3070
        %v3592 = vunpack.c.h.b16 %v3070
        %v3593 = vunpack.c.l.b16 %v3071
        %v3594 = vunpack.c.h.b16 %v3071
        %v3595 = vunpack.c.l.b16 %v3072
        %v3596 = vunpack.c.h.b16 %v3072
        %v3597 = vunpack.c.l.b16 %v3073
        %v3598 = vunpack.c.l.b16 %v3074
        %v3599 = vunpack.c.h.b16 %v3074
        %v3600 = vunpack.c.l.b16 %v3075
        %v3601 = vunpack.c.h.b16 %v3075
        %v3602 = vunpack.c.l.b16 %v3076
        %v3603 = vunpack.c.h.b16 %v3076
        %v3604 = vunpack.c.l.b16 %v3077
        %v3605 = vunpack.c.l.b16 %v3078
        %v3606 = vunpack.c.h.b16 %v3078
        %v3607 = vunpack.c.l.b16 %v3079
        %v3608 = vunpack.c.h.b16 %v3079
        %v3609 = vunpack.c.l.b16 %v3080
        %v3610 = vunpack.c.h.b16 %v3080
        %v3611 = vunpack.c.l.b16 %v3081
        %v3612 = vunpack.c.l.b16 %v3082
        %v3613 = vunpack.c.h.b16 %v3082
        %v3614 = vunpack.c.l.b16 %v3083
        %v3615 = vunpack.c.h.b16 %v3083
        %v3616 = vunpack.c.l.b16 %v3084
        %v3617 = vunpack.c.h.b16 %v3084
        %v3618 = vunpack.c.l.b16 %v3085
        %v3619 = vunpack.c.l.b16 %v3086
        %v3620 = vunpack.c.h.b16 %v3086
        %v3621 = vunpack.c.l.b16 %v3087
        %v3622 = vunpack.c.h.b16 %v3087
        %v3623 = vunpack.c.l.b16 %v3088
        %v3624 = vunpack.c.h.b16 %v3088
        %v3625 = vunpack.c.l.b16 %v3089
        %v3626 = vunpack.c.l.b16 %v3090
        %v3627 = vunpack.c.h.b16 %v3090
        %v3628 = vunpack.c.l.b16 %v3091
        %v3629 = vunpack.c.h.b16 %v3091
        %v3630 = vunpack.c.l.b16 %v3092
        %v3631 = vunpack.c.h.b16 %v3092
        %v3632 = vunpack.c.l.b16 %v3093
        %v3633 = vunpack.c.l.b16 %v3094
        %v3634 = vunpack.c.h.b16 %v3094
        %v3635 = vunpack.c.l.b16 %v3095
        %v3636 = vunpack.c.h.b16 %v3095
        %v3637 = vunpack.c.l.b16 %v3096
        %v3638 = vunpack.c.h.b16 %v3096
        %v3639 = vunpack.c.l.b16 %v3097
        %v3640 = vunpack.c.l.b16 %v3098
        %v3641 = vunpack.c.h.b16 %v3098
        %v3642 = vunpack.c.l.b16 %v3099
        %v3643 = vunpack.c.h.b16 %v3099
        %v3644 = vunpack.c.l.b16 %v3100
        %v3645 = vunpack.c.h.b16 %v3100
        %v3646 = vunpack.c.l.b16 %v3101
        %v3647 = vunpack.c.l.b16 %v3102
        %v3648 = vunpack.c.h.b16 %v3102
        %v3649 = vunpack.c.l.b16 %v3103
        %v3650 = vunpack.c.h.b16 %v3103
        %v3651 = vunpack.c.l.b16 %v3104
        %v3652 = vunpack.c.h.b16 %v3104
        %v3653 = vunpack.c.l.b16 %v3105
        %v3654 = vunpack.c.l.b16 %v3106
        %v3655 = vunpack.c.h.b16 %v3106
        %v3656 = vunpack.c.l.b16 %v3107
        %v3657 = vunpack.c.h.b16 %v3107
        %v3658 = vunpack.c.l.b16 %v3108
        %v3659 = vunpack.c.h.b16 %v3108
        %v3660 = vunpack.c.l.b16 %v3109
        %v3661 = vunpack.c.l.b16 %v3110
        %v3662 = vunpack.c.h.b16 %v3110
        %v3663 = vunpack.c.l.b16 %v3111
        %v3664 = vunpack.c.h.b16 %v3111
        %v3665 = vunpack.c.l.b16 %v3112
        %v3666 = vunpack.c.h.b16 %v3112
        %v3667 = vunpack.c.l.b16 %v3113
        %v3668 = vunpack.c.l.b16 %v3114
        %v3669 = vunpack.c.h.b16 %v3114
        %v3670 = vunpack.c.l.b16 %v3115
        %v3671 = vunpack.c.h.b16 %v3115
        %v3672 = vunpack.c.l.b16 %v3116
        %v3673 = vunpack.c.h.b16 %v3116
        %v3674 = vunpack.c.l.b16 %v3117
        %v3675 = vunpack.c.l.b16 %v3118
        %v3676 = vunpack.c.h.b16 %v3118
        %v3677 = vunpack.c.l.b16 %v3119
        %v3678 = vunpack.c.h.b16 %v3119
        %v3679 = vunpack.c.l.b16 %v3120
        %v3680 = vunpack.c.h.b16 %v3120
        %v3681 = vunpack.c.l.b16 %v3121
        %v3682 = vunpack.c.l.b16 %v3122
        %v3683 = vunpack.c.h.b16 %v3122
        %v3684 = vunpack.c.l.b16 %v3123
        %v3685 = vunpack.c.h.b16 %v3123
        %v3686 = vunpack.c.l.b16 %v3124
        %v3687 = vunpack.c.h.b16 %v3124
        %v3688 = vunpack.c.l.b16 %v3125
        %v3689 = vunpack.c.l.b16 %v3126
        %v3690 = vunpack.c.h.b16 %v3126
        %v3691 = vunpack.c.l.b16 %v3127
        %v3692 = vunpack.c.h.b16 %v3127
        %v3693 = vunpack.c.l.b16 %v3128
        %v3694 = vunpack.c.h.b16 %v3128
        %v3695 = vunpack.c.l.b16 %v3129
        %v3696 = vunpack.c.l.b16 %v3130
        %v3697 = vunpack.c.h.b16 %v3130
        %v3698 = vunpack.c.l.b16 %v3131
        %v3699 = vunpack.c.h.b16 %v3131
        %v3700 = vunpack.c.l.b16 %v3132
        %v3701 = vunpack.c.h.b16 %v3132
        %v3702 = vunpack.c.l.b16 %v3133
        %v3703 = vunpack.c.l.b16 %v3134
        %v3704 = vunpack.c.h.b16 %v3134
        %v3705 = vunpack.c.l.b16 %v3135
        %v3706 = vunpack.c.h.b16 %v3135
        %v3707 = vunpack.c.l.b16 %v3136
        %v3708 = vunpack.c.h.b16 %v3136
        %v3709 = vunpack.c.l.b16 %v3137
        %v3710 = vunpack.c.l.b16 %v3138
        %v3711 = vunpack.c.h.b16 %v3138
        %v3712 = vunpack.c.l.b16 %v3139
        %v3713 = vunpack.c.h.b16 %v3139
        %v3714 = vunpack.c.l.b16 %v3140
        %v3715 = vunpack.c.h.b16 %v3140
        %v3716 = vunpack.c.l.b16 %v3141
        %v3717 = vunpack.c.l.b16 %v3142
        %v3718 = vunpack.c.h.b16 %v3142
        %v3719 = vunpack.c.l.b16 %v3143
        %v3720 = vunpack.c.h.b16 %v3143
        %v3721 = vunpack.c.l.b16 %v3144
        %v3722 = vunpack.c.h.b16 %v3144
        %v3723 = vunpack.c.l.b16 %v3145
        %v3724 = vunpack.c.l.b16 %v3146
        %v3725 = vunpack.c.h.b16 %v3146
        %v3726 = vunpack.c.l.b16 %v3147
        %v3727 = vunpack.c.h.b16 %v3147
        %v3728 = vunpack.c.l.b16 %v3148
        %v3729 = vunpack.c.h.b16 %v3148
        %v3730 = vunpack.c.l.b16 %v3149
        %v3731 = vunpack.c.l.b16 %v3150
        %v3732 = vunpack.c.h.b16 %v3150
        %v3733 = vunpack.c.l.b16 %v3151
        %v3734 = vunpack.c.h.b16 %v3151
        %v3735 = vunpack.c.l.b16 %v3152
        %v3736 = vunpack.c.h.b16 %v3152
        %v3737 = vunpack.c.l.b16 %v3153
        %v3738 = vunpack.c.l.b16 %v3154
        %v3739 = vunpack.c.h.b16 %v3154
        %v3740 = vunpack.c.l.b16 %v3155
        %v3741 = vunpack.c.h.b16 %v3155
        %v3742 = vunpack.c.l.b16 %v3156
        %v3743 = vunpack.c.h.b16 %v3156
        %v3744 = vunpack.c.l.b16 %v3157
        %v3745 = vpack.c.b16 %v3402, %v3395
        %v3746 = vpack.c.b16 %v3403, %v3396
        %v3747 = vpack.c.b16 %v3404, %v3397
        %v3748 = vpack.c.b16 %v3405, %v3398
        %v3749 = vpack.c.b16 %v3406, %v3399
        %v3750 = vpack.c.b16 %v3407, %v3400
        %v3751 = vpack.c.b16 %v3408, %v3401
        %v3752 = vpack.c.b16 %v3416, %v3409
        %v3753 = vpack.c.b16 %v3417, %v3410
        %v3754 = vpack.c.b16 %v3418, %v3411
        %v3755 = vpack.c.b16 %v3419, %v3412
        %v3756 = vpack.c.b16 %v3420, %v3413
        %v3757 = vpack.c.b16 %v3421, %v3414
        %v3758 = vpack.c.b16 %v3422, %v3415
        %v3759 = vpack.c.b16 %v3430, %v3423
        %v3760 = vpack.c.b16 %v3431, %v3424
        %v3761 = vpack.c.b16 %v3432, %v3425
        %v3762 = vpack.c.b16 %v3433, %v3426
        %v3763 = vpack.c.b16 %v3434, %v3427
        %v3764 = vpack.c.b16 %v3435, %v3428
        %v3765 = vpack.c.b16 %v3436, %v3429
        %v3766 = vpack.c.b16 %v3444, %v3437
        %v3767 = vpack.c.b16 %v3445, %v3438
        %v3768 = vpack.c.b16 %v3446, %v3439
        %v3769 = vpack.c.b16 %v3447, %v3440
        %v3770 = vpack.c.b16 %v3448, %v3441
        %v3771 = vpack.c.b16 %v3449, %v3442
        %v3772 = vpack.c.b16 %v3450, %v3443
        %v3773 = vpack.c.b16 %v3458, %v3451
        %v3774 = vpack.c.b16 %v3459, %v3452
        %v3775 = vpack.c.b16 %v3460, %v3453
        %v3776 = vpack.c.b16 %v3461, %v3454
        %v3777 = vpack.c.b16 %v3462, %v3455
        %v3778 = vpack.c.b16 %v3463, %v3456
        %v3779 = vpack.c.b16 %v3464, %v3457
        %v3780 = vpack.c.b16 %v3472, %v3465
        %v3781 = vpack.c.b16 %v3473, %v3466
        %v3782 = vpack.c.b16 %v3474, %v3467
        %v3783 = vpack.c.b16 %v3475, %v3468
        %v3784 = vpack.c.b16 %v3476, %v3469
        %v3785 = vpack.c.b16 %v3477, %v3470
        %v3786 = vpack.c.b16 %v3478, %v3471
        %v3787 = vpack.c.b16 %v3486, %v3479
        %v3788 = vpack.c.b16 %v3487, %v3480
        %v3789 = vpack.c.b16 %v3488, %v3481
        %v3790 = vpack.c.b16 %v3489, %v3482
        %v3791 = vpack.c.b16 %v3490, %v3483
        %v3792 = vpack.c.b16 %v3491, %v3484
        %v3793 = vpack.c.b16 %v3492, %v3485
        %v3794 = vpack.c.b16 %v3500, %v3493
        %v3795 = vpack.c.b16 %v3501, %v3494
        %v3796 = vpack.c.b16 %v3502, %v3495
        %v3797 = vpack.c.b16 %v3503, %v3496
        %v3798 = vpack.c.b16 %v3504, %v3497
        %v3799 = vpack.c.b16 %v3505, %v3498
        %v3800 = vpack.c.b16 %v3506, %v3499
        %v3801 = vpack.c.b16 %v3514, %v3507
        %v3802 = vpack.c.b16 %v3515, %v3508
        %v3803 = vpack.c.b16 %v3516, %v3509
        %v3804 = vpack.c.b16 %v3517, %v3510
        %v3805 = vpack.c.b16 %v3518, %v3511
        %v3806 = vpack.c.b16 %v3519, %v3512
        %v3807 = vpack.c.b16 %v3520, %v3513
        %v3808 = vpack.c.b16 %v3528, %v3521
        %v3809 = vpack.c.b16 %v3529, %v3522
        %v3810 = vpack.c.b16 %v3530, %v3523
        %v3811 = vpack.c.b16 %v3531, %v3524
        %v3812 = vpack.c.b16 %v3532, %v3525
        %v3813 = vpack.c.b16 %v3533, %v3526
        %v3814 = vpack.c.b16 %v3534, %v3527
        %v3815 = vpack.c.b16 %v3542, %v3535
        %v3816 = vpack.c.b16 %v3543, %v3536
        %v3817 = vpack.c.b16 %v3544, %v3537
        %v3818 = vpack.c.b16 %v3545, %v3538
        %v3819 = vpack.c.b16 %v3546, %v3539
        %v3820 = vpack.c.b16 %v3547, %v3540
        %v3821 = vpack.c.b16 %v3548, %v3541
        %v3822 = vpack.c.b16 %v3556, %v3549
        %v3823 = vpack.c.b16 %v3557, %v3550
        %v3824 = vpack.c.b16 %v3558, %v3551
        %v3825 = vpack.c.b16 %v3559, %v3552
        %v3826 = vpack.c.b16 %v3560, %v3553
        %v3827 = vpack.c.b16 %v3561, %v3554
        %v3828 = vpack.c.b16 %v3562, %v3555
        %v3829 = vpack.c.b16 %v3570, %v3563
        %v3830 = vpack.c.b16 %v3571, %v3564
        %v3831 = vpack.c.b16 %v3572, %v3565
        %v3832 = vpack.c.b16 %v3573, %v3566
        %v3833 = vpack.c.b16 %v3574, %v3567
        %v3834 = vpack.c.b16 %v3575, %v3568
        %v3835 = vpack.c.b16 %v3576, %v3569
        %v3836 = vpack.c.b16 %v3584, %v3577
        %v3837 = vpack.c.b16 %v3585, %v3578
        %v3838 = vpack.c.b16 %v3586, %v3579
        %v3839 = vpack.c.b16 %v3587, %v3580
        %v3840 = vpack.c.b16 %v3588, %v3581
        %v3841 = vpack.c.b16 %v3589, %v3582
        %v3842 = vpack.c.b16 %v3590, %v3583
        %v3843 = vpack.c.b16 %v3598, %v3591
        %v3844 = vpack.c.b16 %v3599, %v3592
        %v3845 = vpack.c.b16 %v3600, %v3593
        %v3846 = vpack.c.b16 %v3601, %v3594
        %v3847 = vpack.c.b16 %v3602, %v3595
        %v3848 = vpack.c.b16 %v3603, %v3596
        %v3849 = vpack.c.b16 %v3604, %v3597
        %v3850 = vpack.c.b16 %v3612, %v3605
        %v3851 = vpack.c.b16 %v3613, %v3606
        %v3852 = vpack.c.b16 %v3614, %v3607
        %v3853 = vpack.c.b16 %v3615, %v3608
        %v3854 = vpack.c.b16 %v3616, %v3609
        %v3855 = vpack.c.b16 %v3617, %v3610
        %v3856 = vpack.c.b16 %v3618, %v3611
        %v3857 = vpack.c.b16 %v3626, %v3619
        %v3858 = vpack.c.b16 %v3627, %v3620
        %v3859 = vpack.c.b16 %v3628, %v3621
        %v3860 = vpack.c.b16 %v3629, %v3622
        %v3861 = vpack.c.b16 %v3630, %v3623
        %v3862 = vpack.c.b16 %v3631, %v3624
        %v3863 = vpack.c.b16 %v3632, %v3625
        %v3864 = vpack.c.b16 %v3640, %v3633
        %v3865 = vpack.c.b16 %v3641, %v3634
        %v3866 = vpack.c.b16 %v3642, %v3635
        %v3867 = vpack.c.b16 %v3643, %v3636
        %v3868 = vpack.c.b16 %v3644, %v3637
        %v3869 = vpack.c.b16 %v3645, %v3638
        %v3870 = vpack.c.b16 %v3646, %v3639
        %v3871 = vpack.c.b16 %v3654, %v3647
        %v3872 = vpack.c.b16 %v3655, %v3648
        %v3873 = vpack.c.b16 %v3656, %v3649
        %v3874 = vpack.c.b16 %v3657, %v3650
        %v3875 = vpack.c.b16 %v3658, %v3651
        %v3876 = vpack.c.b16 %v3659, %v3652
        %v3877 = vpack.c.b16 %v3660, %v3653
        %v3878 = vpack.c.b16 %v3668, %v3661
        %v3879 = vpack.c.b16 %v3669, %v3662
        %v3880 = vpack.c.b16 %v3670, %v3663
        %v3881 = vpack.c.b16 %v3671, %v3664
        %v3882 = vpack.c.b16 %v3672, %v3665
        %v3883 = vpack.c.b16 %v3673, %v3666
        %v3884 = vpack.c.b16 %v3674, %v3667
        %v3885 = vpack.c.b16 %v3682, %v3675
        %v3886 = vpack.c.b16 %v3683, %v3676
        %v3887 = vpack.c.b16 %v3684, %v3677
        %v3888 = vpack.c.b16 %v3685, %v3678
        %v3889 = vpack.c.b16 %v3686, %v3679
        %v3890 = vpack.c.b16 %v3687, %v3680
        %v3891 = vpack.c.b16 %v3688, %v3681
        %v3892 = vpack.c.b16 %v3696, %v3689
        %v3893 = vpack.c.b16 %v3697, %v3690
        %v3894 = vpack.c.b16 %v3698, %v3691
        %v3895 = vpack.c.b16 %v3699, %v3692
        %v3896 = vpack.c.b16 %v3700, %v3693
        %v3897 = vpack.c.b16 %v3701, %v3694
        %v3898 = vpack.c.b16 %v3702, %v3695
        %v3899 = vpack.c.b16 %v3710, %v3703
        %v3900 = vpack.c.b16 %v3711, %v3704
        %v3901 = vpack.c.b16 %v3712, %v3705
        %v3902 = vpack.c.b16 %v3713, %v3706
        %v3903 = vpack.c.b16 %v3714, %v3707
        %v3904 = vpack.c.b16 %v3715, %v3708
        %v3905 = vpack.c.b16 %v3716, %v3709
        %v3906 = vpack.c.b16 %v3724, %v3717
        %v3907 = vpack.c.b16 %v3725, %v3718
        %v3908 = vpack.c.b16 %v3726, %v3719
        %v3909 = vpack.c.b16 %v3727, %v3720
        %v3910 = vpack.c.b16 %v3728, %v3721
        %v3911 = vpack.c.b16 %v3729, %v3722
        %v3912 = vpack.c.b16 %v3730, %v3723
        %v3913 = vpack.c.b16 %v3738, %v3731
        %v3914 = vpack.c.b16 %v3739, %v3732
        %v3915 = vpack.c.b16 %v3740, %v3733
        %v3916 = vpack.c.b16 %v3741, %v3734
        %v3917 = vpack.c.b16 %v3742, %v3735
        %v3918 = vpack.c.b16 %v3743, %v3736
        %v3919 = vpack.c.b16 %v3744, %v3737
        %v4096 = vsel %vm1728, %v2957, 0
        %4098 = vmatprep.subr.bf16.mxu0 %v3746
        %4099 = vmatpush1.bf16.msra.mxu0 %v3745
        %4100 = vmatprep.subr.bf16.mxu0 %v3753
        %4101 = vmatpush1.bf16.msra.mxu0 %v3752
        %4102 = vmatprep.subr.bf16.mxu0 %v3760
        %4103 = vmatpush1.bf16.msra.mxu0 %v3759
        %4104 = vmatprep.subr.bf16.mxu0 %v3767
        %4105 = vmatpush1.bf16.msra.mxu0 %v3766
        %4106 = vmatprep.subr.bf16.mxu0 %v3774
        %4107 = vmatpush1.bf16.msra.mxu0 %v3773
        %4108 = vmatprep.subr.bf16.mxu0 %v3781
        %4109 = vmatpush1.bf16.msra.mxu0 %v3780
        %4110 = vmatprep.subr.bf16.mxu0 %v3788
        %4111 = vmatpush1.bf16.msra.mxu0 %v3787
        %4112 = vmatprep.subr.bf16.mxu0 %v3795
        %4113 = vmatpush1.bf16.msra.mxu0 %v3794
        %4114 = vmatprep.subr.bf16.mxu0 %v3802
        %4115 = vmatpush1.bf16.msra.mxu0 %v3801
        %4116 = vmatprep.subr.bf16.mxu0 %v3809
        %4117 = vmatpush1.bf16.msra.mxu0 %v3808
        %4118 = vmatprep.subr.bf16.mxu0 %v3816
        %4119 = vmatpush1.bf16.msra.mxu0 %v3815
        %4120 = vmatprep.subr.bf16.mxu0 %v3823
        %4121 = vmatpush1.bf16.msra.mxu0 %v3822
        %4122 = vmatprep.subr.bf16.mxu0 %v3830
        %4123 = vmatpush1.bf16.msra.mxu0 %v3829
        %4124 = vmatprep.subr.bf16.mxu0 %v3837
        %4125 = vmatpush1.bf16.msra.mxu0 %v3836
        %4126 = vmatprep.subr.bf16.mxu0 %v3844
        %4127 = vmatpush1.bf16.msra.mxu0 %v3843
        %4128 = vmatprep.subr.bf16.mxu0 %v3851
        %4129 = vmatpush1.bf16.msra.mxu0 %v3850
        %4130 = vmatprep.mubr.bf16.mxu0 %v2955
        %4131 = vmatmul.mubr.bf16.gmra.mrb[0].mxu0 %v2954
        %v4132 = vpop.f32.mrb[0].mxu0
        %v4133 = vadd.f32 %v3163, %v4132
        %v4134 = vpop.f32.mrb[0].mxu0
        %v4135 = vadd.f32 %v3167, %v4134
        %v4136 = vpop.f32.mrb[0].mxu0
        %v4137 = vpop.f32.mrb[0].mxu0
        %4138 = vdwg.mxu0
        %4139 = vmatprep.subr.bf16.mxu0 %v3858
        %4140 = vmatpush1.bf16.msra.mxu0 %v3857
        %4141 = vmatprep.subr.bf16.mxu0 %v3865
        %4142 = vmatpush1.bf16.msra.mxu0 %v3864
        %4143 = vmatprep.subr.bf16.mxu0 %v3872
        %4144 = vmatpush1.bf16.msra.mxu0 %v3871
        %4145 = vmatprep.subr.bf16.mxu0 %v3879
        %4146 = vmatpush1.bf16.msra.mxu0 %v3878
        %4147 = vmatprep.subr.bf16.mxu0 %v3886
        %4148 = vmatpush1.bf16.msra.mxu0 %v3885
        %4149 = vmatprep.subr.bf16.mxu0 %v3893
        %4150 = vmatpush1.bf16.msra.mxu0 %v3892
        %4151 = vmatprep.subr.bf16.mxu0 %v3900
        %4152 = vmatpush1.bf16.msra.mxu0 %v3899
        %4153 = vmatprep.subr.bf16.mxu0 %v3907
        %4154 = vmatpush1.bf16.msra.mxu0 %v3906
        %4155 = vmatprep.subr.bf16.mxu0 %v3914
        %4156 = vmatpush1.bf16.msra.mxu0 %v3913
        %4157 = vmatprep.subr.bf16.mxu0 0
        %4158 = vmatpush1.bf16.msra.mxu0 0
        %4159 = vmatprep.subr.bf16.mxu0 0
        %4160 = vmatpush1.bf16.msra.mxu0 0
        %4161 = vmatprep.subr.bf16.mxu0 0
        %4162 = vmatpush1.bf16.msra.mxu0 0
        %4163 = vmatprep.subr.bf16.mxu0 0
        %4164 = vmatpush1.bf16.msra.mxu0 0
        %4165 = vmatprep.subr.bf16.mxu0 0
        %4166 = vmatpush1.bf16.msra.mxu0 0
        %4167 = vmatprep.subr.bf16.mxu0 0
        %4168 = vmatpush1.bf16.msra.mxu0 0
        %4169 = vmatprep.subr.bf16.mxu0 0
        %4170 = vmatpush1.bf16.msra.mxu0 0
        %4171 = vmatprep.mubr.bf16.mxu0 %v4096
        %4172 = vmatmul.mubr.bf16.gmra.mrb[0].mxu0 %v2956
        %v4173 = vpop.f32.mrb[0].mxu0
        %v4174 = vadd.f32 %v4133, %v4173
        %v4175 = vpop.f32.mrb[0].mxu0
        %v4176 = vadd.f32 %v4135, %v4175
        %v4177 = vpop.f32.mrb[0].mxu0
        %v4178 = vpop.f32.mrb[0].mxu0
        %4179 = vdwg.mxu0
        %4180 = vmatprep.subr.bf16.mxu0 %v3748
        %4181 = vmatpush1.bf16.msra.mxu0 %v3747
        %4182 = vmatprep.subr.bf16.mxu0 %v3755
        %4183 = vmatpush1.bf16.msra.mxu0 %v3754
        %4184 = vmatprep.subr.bf16.mxu0 %v3762
        %4185 = vmatpush1.bf16.msra.mxu0 %v3761
        %4186 = vmatprep.subr.bf16.mxu0 %v3769
        %4187 = vmatpush1.bf16.msra.mxu0 %v3768
        %4188 = vmatprep.subr.bf16.mxu0 %v3776
        %4189 = vmatpush1.bf16.msra.mxu0 %v3775
        %4190 = vmatprep.subr.bf16.mxu0 %v3783
        %4191 = vmatpush1.bf16.msra.mxu0 %v3782
        %4192 = vmatprep.subr.bf16.mxu0 %v3790
        %4193 = vmatpush1.bf16.msra.mxu0 %v3789
        %4194 = vmatprep.subr.bf16.mxu0 %v3797
        %4195 = vmatpush1.bf16.msra.mxu0 %v3796
        %4196 = vmatprep.subr.bf16.mxu0 %v3804
        %4197 = vmatpush1.bf16.msra.mxu0 %v3803
        %4198 = vmatprep.subr.bf16.mxu0 %v3811
        %4199 = vmatpush1.bf16.msra.mxu0 %v3810
        %4200 = vmatprep.subr.bf16.mxu0 %v3818
        %4201 = vmatpush1.bf16.msra.mxu0 %v3817
        %4202 = vmatprep.subr.bf16.mxu0 %v3825
        %4203 = vmatpush1.bf16.msra.mxu0 %v3824
        %4204 = vmatprep.subr.bf16.mxu0 %v3832
        %4205 = vmatpush1.bf16.msra.mxu0 %v3831
        %4206 = vmatprep.subr.bf16.mxu0 %v3839
        %4207 = vmatpush1.bf16.msra.mxu0 %v3838
        %4208 = vmatprep.subr.bf16.mxu0 %v3846
        %4209 = vmatpush1.bf16.msra.mxu0 %v3845
        %4210 = vmatprep.subr.bf16.mxu0 %v3853
        %4211 = vmatpush1.bf16.msra.mxu0 %v3852
        %4212 = vmatprep.mubr.bf16.mxu0 %v2955
        %4213 = vmatmul.mubr.bf16.gmra.mrb[0].mxu0 %v2954
        %v4214 = vpop.f32.mrb[0].mxu0
        %v4215 = vadd.f32 %v3171, %v4214
        %v4216 = vpop.f32.mrb[0].mxu0
        %v4217 = vadd.f32 %v3175, %v4216
        %v4218 = vpop.f32.mrb[0].mxu0
        %v4219 = vpop.f32.mrb[0].mxu0
        %4220 = vdwg.mxu0
        %4221 = vmatprep.subr.bf16.mxu0 %v3860
        %4222 = vmatpush1.bf16.msra.mxu0 %v3859
        %4223 = vmatprep.subr.bf16.mxu0 %v3867
        %4224 = vmatpush1.bf16.msra.mxu0 %v3866
        %4225 = vmatprep.subr.bf16.mxu0 %v3874
        %4226 = vmatpush1.bf16.msra.mxu0 %v3873
        %4227 = vmatprep.subr.bf16.mxu0 %v3881
        %4228 = vmatpush1.bf16.msra.mxu0 %v3880
        %4229 = vmatprep.subr.bf16.mxu0 %v3888
        %4230 = vmatpush1.bf16.msra.mxu0 %v3887
        %4231 = vmatprep.subr.bf16.mxu0 %v3895
        %4232 = vmatpush1.bf16.msra.mxu0 %v3894
        %4233 = vmatprep.subr.bf16.mxu0 %v3902
        %4234 = vmatpush1.bf16.msra.mxu0 %v3901
        %4235 = vmatprep.subr.bf16.mxu0 %v3909
        %4236 = vmatpush1.bf16.msra.mxu0 %v3908
        %4237 = vmatprep.subr.bf16.mxu0 %v3916
        %4238 = vmatpush1.bf16.msra.mxu0 %v3915
        %4239 = vmatprep.subr.bf16.mxu0 0
        %4240 = vmatpush1.bf16.msra.mxu0 0
        %4241 = vmatprep.subr.bf16.mxu0 0
        %4242 = vmatpush1.bf16.msra.mxu0 0
        %4243 = vmatprep.subr.bf16.mxu0 0
        %4244 = vmatpush1.bf16.msra.mxu0 0
        %4245 = vmatprep.subr.bf16.mxu0 0
        %4246 = vmatpush1.bf16.msra.mxu0 0
        %4247 = vmatprep.subr.bf16.mxu0 0
        %4248 = vmatpush1.bf16.msra.mxu0 0
        %4249 = vmatprep.subr.bf16.mxu0 0
        %4250 = vmatpush1.bf16.msra.mxu0 0
        %4251 = vmatprep.subr.bf16.mxu0 0
        %4252 = vmatpush1.bf16.msra.mxu0 0
        %4253 = vmatprep.mubr.bf16.mxu0 %v4096
        %4254 = vmatmul.mubr.bf16.gmra.mrb[0].mxu0 %v2956
        %v4255 = vpop.f32.mrb[0].mxu0
        %v4256 = vadd.f32 %v4215, %v4255
        %v4257 = vpop.f32.mrb[0].mxu0
        %v4258 = vadd.f32 %v4217, %v4257
        %v4259 = vpop.f32.mrb[0].mxu0
        %v4260 = vpop.f32.mrb[0].mxu0
        %4261 = vdwg.mxu0
        %4262 = vmatprep.subr.bf16.mxu0 %v3750
        %4263 = vmatpush1.bf16.msra.mxu0 %v3749
        %4264 = vmatprep.subr.bf16.mxu0 %v3757
        %4265 = vmatpush1.bf16.msra.mxu0 %v3756
        %4266 = vmatprep.subr.bf16.mxu0 %v3764
        %4267 = vmatpush1.bf16.msra.mxu0 %v3763
        %4268 = vmatprep.subr.bf16.mxu0 %v3771
        %4269 = vmatpush1.bf16.msra.mxu0 %v3770
        %4270 = vmatprep.subr.bf16.mxu0 %v3778
        %4271 = vmatpush1.bf16.msra.mxu0 %v3777
        %4272 = vmatprep.subr.bf16.mxu0 %v3785
        %4273 = vmatpush1.bf16.msra.mxu0 %v3784
        %4274 = vmatprep.subr.bf16.mxu0 %v3792
        %4275 = vmatpush1.bf16.msra.mxu0 %v3791
        %4276 = vmatprep.subr.bf16.mxu0 %v3799
        %4277 = vmatpush1.bf16.msra.mxu0 %v3798
        %4278 = vmatprep.subr.bf16.mxu0 %v3806
        %4279 = vmatpush1.bf16.msra.mxu0 %v3805
        %4280 = vmatprep.subr.bf16.mxu0 %v3813
        %4281 = vmatpush1.bf16.msra.mxu0 %v3812
        %4282 = vmatprep.subr.bf16.mxu0 %v3820
        %4283 = vmatpush1.bf16.msra.mxu0 %v3819
        %4284 = vmatprep.subr.bf16.mxu0 %v3827
        %4285 = vmatpush1.bf16.msra.mxu0 %v3826
        %4286 = vmatprep.subr.bf16.mxu0 %v3834
        %4287 = vmatpush1.bf16.msra.mxu0 %v3833
        %4288 = vmatprep.subr.bf16.mxu0 %v3841
        %4289 = vmatpush1.bf16.msra.mxu0 %v3840
        %4290 = vmatprep.subr.bf16.mxu0 %v3848
        %4291 = vmatpush1.bf16.msra.mxu0 %v3847
        %4292 = vmatprep.subr.bf16.mxu0 %v3855
        %4293 = vmatpush1.bf16.msra.mxu0 %v3854
        %4294 = vmatprep.mubr.bf16.mxu0 %v2955
        %4295 = vmatmul.mubr.bf16.gmra.mrb[0].mxu0 %v2954
        %v4296 = vpop.f32.mrb[0].mxu0
        %v4297 = vadd.f32 %v3179, %v4296
        %v4298 = vpop.f32.mrb[0].mxu0
        %v4299 = vadd.f32 %v3183, %v4298
        %v4300 = vpop.f32.mrb[0].mxu0
        %v4301 = vpop.f32.mrb[0].mxu0
        %4302 = vdwg.mxu0
        %4303 = vmatprep.subr.bf16.mxu0 %v3862
        %4304 = vmatpush1.bf16.msra.mxu0 %v3861
        %4305 = vmatprep.subr.bf16.mxu0 %v3869
        %4306 = vmatpush1.bf16.msra.mxu0 %v3868
        %4307 = vmatprep.subr.bf16.mxu0 %v3876
        %4308 = vmatpush1.bf16.msra.mxu0 %v3875
        %4309 = vmatprep.subr.bf16.mxu0 %v3883
        %4310 = vmatpush1.bf16.msra.mxu0 %v3882
        %4311 = vmatprep.subr.bf16.mxu0 %v3890
        %4312 = vmatpush1.bf16.msra.mxu0 %v3889
        %4313 = vmatprep.subr.bf16.mxu0 %v3897
        %4314 = vmatpush1.bf16.msra.mxu0 %v3896
        %4315 = vmatprep.subr.bf16.mxu0 %v3904
        %4316 = vmatpush1.bf16.msra.mxu0 %v3903
        %4317 = vmatprep.subr.bf16.mxu0 %v3911
        %4318 = vmatpush1.bf16.msra.mxu0 %v3910
        %4319 = vmatprep.subr.bf16.mxu0 %v3918
        %4320 = vmatpush1.bf16.msra.mxu0 %v3917
        %4321 = vmatprep.subr.bf16.mxu0 0
        %4322 = vmatpush1.bf16.msra.mxu0 0
        %4323 = vmatprep.subr.bf16.mxu0 0
        %4324 = vmatpush1.bf16.msra.mxu0 0
        %4325 = vmatprep.subr.bf16.mxu0 0
        %4326 = vmatpush1.bf16.msra.mxu0 0
        %4327 = vmatprep.subr.bf16.mxu0 0
        %4328 = vmatpush1.bf16.msra.mxu0 0
        %4329 = vmatprep.subr.bf16.mxu0 0
        %4330 = vmatpush1.bf16.msra.mxu0 0
        %4331 = vmatprep.subr.bf16.mxu0 0
        %4332 = vmatpush1.bf16.msra.mxu0 0
        %4333 = vmatprep.subr.bf16.mxu0 0
        %4334 = vmatpush1.bf16.msra.mxu0 0
        %4335 = vmatprep.mubr.bf16.mxu0 %v4096
        %4336 = vmatmul.mubr.bf16.gmra.mrb[0].mxu0 %v2956
        %v4337 = vpop.f32.mrb[0].mxu0
        %v4338 = vadd.f32 %v4297, %v4337
        %v4339 = vpop.f32.mrb[0].mxu0
        %v4340 = vadd.f32 %v4299, %v4339
        %v4341 = vpop.f32.mrb[0].mxu0
        %v4342 = vpop.f32.mrb[0].mxu0
        %4343 = vdwg.mxu0
        %4344 = vmatprep.subr.bf16.mxu0 0
        %4345 = vmatpush1.bf16.msra.mxu0 %v3751
        %4346 = vmatprep.subr.bf16.mxu0 0
        %4347 = vmatpush1.bf16.msra.mxu0 %v3758
        %4348 = vmatprep.subr.bf16.mxu0 0
        %4349 = vmatpush1.bf16.msra.mxu0 %v3765
        %4350 = vmatprep.subr.bf16.mxu0 0
        %4351 = vmatpush1.bf16.msra.mxu0 %v3772
        %4352 = vmatprep.subr.bf16.mxu0 0
        %4353 = vmatpush1.bf16.msra.mxu0 %v3779
        %4354 = vmatprep.subr.bf16.mxu0 0
        %4355 = vmatpush1.bf16.msra.mxu0 %v3786
        %4356 = vmatprep.subr.bf16.mxu0 0
        %4357 = vmatpush1.bf16.msra.mxu0 %v3793
        %4358 = vmatprep.subr.bf16.mxu0 0
        %4359 = vmatpush1.bf16.msra.mxu0 %v3800
        %4360 = vmatprep.subr.bf16.mxu0 0
        %4361 = vmatpush1.bf16.msra.mxu0 %v3807
        %4362 = vmatprep.subr.bf16.mxu0 0
        %4363 = vmatpush1.bf16.msra.mxu0 %v3814
        %4364 = vmatprep.subr.bf16.mxu0 0
        %4365 = vmatpush1.bf16.msra.mxu0 %v3821
        %4366 = vmatprep.subr.bf16.mxu0 0
        %4367 = vmatpush1.bf16.msra.mxu0 %v3828
        %4368 = vmatprep.subr.bf16.mxu0 0
        %4369 = vmatpush1.bf16.msra.mxu0 %v3835
        %4370 = vmatprep.subr.bf16.mxu0 0
        %4371 = vmatpush1.bf16.msra.mxu0 %v3842
        %4372 = vmatprep.subr.bf16.mxu0 0
        %4373 = vmatpush1.bf16.msra.mxu0 %v3849
        %4374 = vmatprep.subr.bf16.mxu0 0
        %4375 = vmatpush1.bf16.msra.mxu0 %v3856
        %4376 = vmatprep.mubr.bf16.mxu0 %v2955
        %4377 = vmatmul.mubr.bf16.gmra.mrb[0].mxu0 %v2954
        %v4378 = vpop.f32.mrb[0].mxu0
        %v4379 = vadd.f32 %v3187, %v4378
        %v4380 = vpop.f32.mrb[0].mxu0
        %v4381 = vpop.f32.mrb[0].mxu0
        %v4382 = vpop.f32.mrb[0].mxu0
        %4383 = vdwg.mxu0
        %4384 = vmatprep.subr.bf16.mxu0 0
        %4385 = vmatpush1.bf16.msra.mxu0 %v3863
        %4386 = vmatprep.subr.bf16.mxu0 0
        %4387 = vmatpush1.bf16.msra.mxu0 %v3870
        %4388 = vmatprep.subr.bf16.mxu0 0
        %4389 = vmatpush1.bf16.msra.mxu0 %v3877
        %4390 = vmatprep.subr.bf16.mxu0 0
        %4391 = vmatpush1.bf16.msra.mxu0 %v3884
        %4392 = vmatprep.subr.bf16.mxu0 0
        %4393 = vmatpush1.bf16.msra.mxu0 %v3891
        %4394 = vmatprep.subr.bf16.mxu0 0
        %4395 = vmatpush1.bf16.msra.mxu0 %v3898
        %4396 = vmatprep.subr.bf16.mxu0 0
        %4397 = vmatpush1.bf16.msra.mxu0 %v3905
        %4398 = vmatprep.subr.bf16.mxu0 0
        %4399 = vmatpush1.bf16.msra.mxu0 %v3912
        %4400 = vmatprep.subr.bf16.mxu0 0
        %4401 = vmatpush1.bf16.msra.mxu0 %v3919
        %4402 = vmatprep.subr.bf16.mxu0 0
        %4403 = vmatpush1.bf16.msra.mxu0 0
        %4404 = vmatprep.subr.bf16.mxu0 0
        %4405 = vmatpush1.bf16.msra.mxu0 0
        %4406 = vmatprep.subr.bf16.mxu0 0
        %4407 = vmatpush1.bf16.msra.mxu0 0
        %4408 = vmatprep.subr.bf16.mxu0 0
        %4409 = vmatpush1.bf16.msra.mxu0 0
        %4410 = vmatprep.subr.bf16.mxu0 0
        %4411 = vmatpush1.bf16.msra.mxu0 0
        %4412 = vmatprep.subr.bf16.mxu0 0
        %4413 = vmatpush1.bf16.msra.mxu0 0
        %4414 = vmatprep.subr.bf16.mxu0 0
        %4415 = vmatpush1.bf16.msra.mxu0 0
        %4416 = vmatprep.mubr.bf16.mxu0 %v4096
        %4417 = vmatmul.mubr.bf16.gmra.mrb[0].mxu0 %v2956
        %v4418 = vpop.f32.mrb[0].mxu0
        %v4419 = vadd.f32 %v4379, %v4418
        %v4420 = vpop.f32.mrb[0].mxu0
        %v4421 = vpop.f32.mrb[0].mxu0
        %v4422 = vpop.f32.mrb[0].mxu0
        %4423 = vdwg.mxu0
        %v4424 = vxor.u32 %v4174, 2147483648
        %v4425 = vxor.u32 %v4176, 2147483648
        %v4426 = vxor.u32 %v4256, 2147483648
        %v4427 = vxor.u32 %v4258, 2147483648
        %v4428 = vxor.u32 %v4338, 2147483648
        %v4429 = vxor.u32 %v4340, 2147483648
        %v4430 = vxor.u32 %v4419, 2147483648
        %v4431 = vmul.f32 %v4424, 1.442695
        %v4432 = vpow.pop %v4431
        %v4433 = vmul.f32 %v4425, 1.442695
        %v4434 = vpow.pop %v4433
        %v4435 = vmul.f32 %v4426, 1.442695
        %v4436 = vpow.pop %v4435
        %v4437 = vmul.f32 %v4427, 1.442695
        %v4438 = vpow.pop %v4437
        %v4439 = vmul.f32 %v4428, 1.442695
        %v4440 = vpow.pop %v4439
        %v4441 = vmul.f32 %v4429, 1.442695
        %v4442 = vpow.pop %v4441
        %v4443 = vmul.f32 %v4430, 1.442695
        %v4444 = vpow.pop %v4443
        %v4445 = vadd.f32 %v4432, 1.0
        %v4446 = vadd.f32 %v4434, 1.0
        %v4447 = vadd.f32 %v4436, 1.0
        %v4448 = vadd.f32 %v4438, 1.0
        %v4449 = vadd.f32 %v4440, 1.0
        %v4450 = vadd.f32 %v4442, 1.0
        %v4451 = vadd.f32 %v4444, 1.0
        %v4452 = vrcp.pop %v4445
        %v4453 = vmul.f32 1.0, %v4452
        %v4454 = vrcp.pop %v4446
        %v4455 = vmul.f32 1.0, %v4454
        %v4456 = vrcp.pop %v4447
        %v4457 = vmul.f32 1.0, %v4456
        %v4458 = vrcp.pop %v4448
        %v4459 = vmul.f32 1.0, %v4458
        %v4460 = vrcp.pop %v4449
        %v4461 = vmul.f32 1.0, %v4460
        %v4462 = vrcp.pop %v4450
        %v4463 = vmul.f32 1.0, %v4462
        %v4464 = vrcp.pop %v4451
        %v4465 = vmul.f32 1.0, %v4464
        %4466 = vst [vmem:[%s477] sm:$0xff] %v4453
        %4467 = vst [vmem:[%s477 + $0x8] sm:$0xff] %v4455
        %4468 = vst [vmem:[%s477 + $0x10] sm:$0xff] %v4457
        %4469 = vst [vmem:[%s477 + $0x18] sm:$0xff] %v4459
        %4470 = vst [vmem:[%s477 + $0x20] sm:$0xff] %v4461
        %4471 = vst [vmem:[%s477 + $0x28] sm:$0xff] %v4463
        %4472 = vst.msk [vmem:[%s477 + $0x30] sm:$0xff] %vm1728, %v4465
        %4473 = vst [vmem:[%s484] sm:$0xff] %v2358
        %4474 = vst [vmem:[%s491] sm:$0xff] %v2646
        %s4475 = sand.u32 %s302, 1
        %s4476 = scalar_lea.sflag [#allocation3], %s4475
        %s4477 = sand.u32 %s302, 1
        %s4478 = smul.addr %s4477, 56
        %s4479 = scalar_lea.vmem [#allocation2], %s4478
        %s4480 = sand.u32 %s32, 1
        %s4481 = scalar_lea.sflag [#allocation5], %s4480
        %s4482 = sand.u32 %s328, 1
        %s4483 = smul.addr %s4482, 8
        %s4484 = scalar_lea.vmem [#allocation4], %s4483
        %s4485 = sand.u32 %s32, 1
        %s4486 = scalar_lea.sflag [#allocation5], %s4485
        %s4487 = sand.u32 %s354, 1
        %s4488 = smul.addr %s4487, 8
        %s4489 = scalar_lea.vmem [#allocation6], %s4488
        // Predicated region
        $region69: #{tpu_custom_call.1} parent=67 // pred_check
          %p4490 = pneg %p312
        $region70: #{tpu_custom_call.1} parent=67 // pred_check_branch
          %4492 = sbr.rel (%p4490) target = $region72
        $region71: #{tpu_custom_call.1} parent=67 // pred_region
          %s4494 = ssub.s32 896, 896
          %4495 = vsyncadd %s4476, %s4494
          %s4496 = smul.addr %s32, 7
          %s4497 = smul.addr %s4496, 128
          %s4498 = scalar_lea.hbm %s12, %s4497
          %s4500 = sshll.u32 %s4479, 4
          %s4501 = int_to_ptr.vmem [resolvable:$true] %s4500
          %4503 = dma.vmem_to_hbm [thread:$0]  %s4501, 896, %s4498, %s4476
        $region72: #{tpu_custom_call.1} parent=67 // pred_fallthru
          _
        // Predicated region
        $region73: #{tpu_custom_call.1} parent=67 // pred_check
          %p4504 = pneg %p338
        $region74: #{tpu_custom_call.1} parent=67 // pred_check_branch
          %4506 = sbr.rel (%p4504) target = $region76
        $region75: #{tpu_custom_call.1} parent=67 // pred_region
          %s4508 = ssub.s32 128, 128
          %4509 = vsyncadd %s4481, %s4508
          %s4510 = smul.addr %s32, 128
          %s4511 = scalar_lea.hbm %s13, %s4510
          %s4513 = sshll.u32 %s4484, 4
          %s4514 = int_to_ptr.vmem [resolvable:$true] %s4513
          %4516 = dma.vmem_to_hbm [thread:$0]  %s4514, 128, %s4511, %s4481
        $region76: #{tpu_custom_call.1} parent=67 // pred_fallthru
          _
        // Predicated region
        $region77: #{tpu_custom_call.1} parent=67 // pred_check
          %p4517 = pneg %p364
        $region78: #{tpu_custom_call.1} parent=67 // pred_check_branch
          %4519 = sbr.rel (%p4517) target = $region80
        $region79: #{tpu_custom_call.1} parent=67 // pred_region
          %s4521 = ssub.s32 128, 128
          %4522 = vsyncadd %s4486, %s4521
          %s4523 = smul.addr %s32, 128
          %s4524 = scalar_lea.hbm %s14, %s4523
          %s4526 = sshll.u32 %s4489, 4
          %s4527 = int_to_ptr.vmem [resolvable:$true] %s4526
          %4529 = dma.vmem_to_hbm [thread:$0]  %s4527, 128, %s4524, %s4486
        $region80: #{tpu_custom_call.1} parent=67 // pred_fallthru
          _
      $region68: #{tpu_custom_call.1} parent=5 // pred_fallthru
        _
      %p4530 = scmp.le.s32.totalorder 2, %s27
      // Predicated region
      $region81: #{tpu_custom_call.1} parent=5 // pred_check
        %p4531 = pneg %p4530
      $region82: #{tpu_custom_call.1} parent=5 // pred_check_branch
        %4533 = sbr.rel (%p4531) target = $region84
      $region83: #{tpu_custom_call.1} parent=5 // pred_region
        %s4534 = ssub.s32 %s27, 2
        // Predicated region
        $region85: #{tpu_custom_call.1} parent=83 // pred_check
          %p4535 = pneg %p318
        $region86: #{tpu_custom_call.1} parent=83 // pred_check_branch
          %4537 = sbr.rel (%p4535) target = $region88
        $region87: #{tpu_custom_call.1} parent=83 // pred_region
          %s4538 = sand.u32 %s303, 1
          %s4539 = scalar_lea.sflag [#allocation3], %s4538
          %s4540 = sand.u32 %s303, 1
          %s4541 = smul.addr %s4540, 56
          %s4542 = scalar_lea.vmem [#allocation2], %s4541
          %4543 = dma.done %s4539, 896
        $region88: #{tpu_custom_call.1} parent=83 // pred_fallthru
          _
        // Predicated region
        $region89: #{tpu_custom_call.1} parent=83 // pred_check
          %p4544 = pneg %p344
        $region90: #{tpu_custom_call.1} parent=83 // pred_check_branch
          %4546 = sbr.rel (%p4544) target = $region92
        $region91: #{tpu_custom_call.1} parent=83 // pred_region
          %s4547 = sand.u32 %s33, 1
          %s4548 = scalar_lea.sflag [#allocation5], %s4547
          %s4549 = sand.u32 %s329, 1
          %s4550 = smul.addr %s4549, 8
          %s4551 = scalar_lea.vmem [#allocation4], %s4550
          %4552 = dma.done %s4548, 128
        $region92: #{tpu_custom_call.1} parent=83 // pred_fallthru
          _
        // Predicated region
        $region93: #{tpu_custom_call.1} parent=83 // pred_check
          %p4553 = pneg %p370
        $region94: #{tpu_custom_call.1} parent=83 // pred_check_branch
          %4555 = sbr.rel (%p4553) target = $region96
        $region95: #{tpu_custom_call.1} parent=83 // pred_region
          %s4556 = sand.u32 %s33, 1
          %s4557 = scalar_lea.sflag [#allocation5], %s4556
          %s4558 = sand.u32 %s355, 1
          %s4559 = smul.addr %s4558, 8
          %s4560 = scalar_lea.vmem [#allocation6], %s4559
          %4561 = dma.done %s4557, 128
        $region96: #{tpu_custom_call.1} parent=83 // pred_fallthru
          _
      $region84: #{tpu_custom_call.1} parent=5 // pred_fallthru
        _
    $region6: #{tpu_custom_call.1} parent=1 // loop_footer
      %s31 = sadd.s32 1, %s27
    $region7: #{tpu_custom_call.1} parent=1 // loop_footer_branch
      %26 = sbr.rel target = $region3
    $region8: #{tpu_custom_call.1} parent=1 // loop_exit
      _
    %4562 = vsyncpa [#allocation3], 1
    %s4563 = scalar_lea.sflag [#allocation3], 1
    %4564 = vsyncpa %s4563, 1
    %4565 = vsyncpa [#allocation5], 1
    %s4566 = scalar_lea.sflag [#allocation5], 1
    %4567 = vsyncpa %s4566, 1

</llo_original>
